<compile_context>
chip_gen: v7x
topology: tpu7x:2x2x1
jax: 0.10.0
libtpu: 0.0.40
codegen_flags: <defaults>
</compile_context>

<pallas_src>
import jax
import jax.numpy as jnp
from jax.experimental import pallas as pl
from jax.experimental.pallas import tpu as pltpu


# --------------------------------------------------------------------------
# Fused kernel: conv1(1x1+BN+SiLU) -> maxpools 5/9/13 -> concat -> conv2
# (1x1+BN+SiLU), one grid step per batch image, everything kept in VMEM.
# --------------------------------------------------------------------------
def _spp_fused_kernel(x_ref, w1_ref, b1_ref, w2_ref, b2_ref, o_ref,
                      hpad_ref, wpad_ref):
    # x_ref : (1, H*W, Cin)            pixels x in-channels
    # w1_ref: (Cin, Chid)   b1_ref: (1, Chid)
    # w2_ref: (4, Chid, Cout)          one (Chid, Cout) slab per branch
    # b2_ref: (1, Cout)
    # o_ref : (1, H*W, Cout)
    # hpad_ref: (H+4, W, Chid) VMEM    -inf halo rows for the H-window max
    # wpad_ref: (H, W+4, Chid) VMEM    -inf halo cols for the W-window max
    hp, ww, chid = hpad_ref.shape
    hh = hp - 4

    # ---- conv1: 1x1 conv (BN folded) + SiLU as a pixels x channels matmul --
    y = jnp.dot(x_ref[0], w1_ref[...], preferred_element_type=jnp.float32)
    y = y + b1_ref[...]
    y = y * pl.reciprocal(1.0 + jnp.exp(-y), approx=True)          # SiLU (EUP)

    # ---- conv2 accumulation, branch 0 = identity (no pooling) --------------
    acc = jnp.dot(y, w2_ref[0], preferred_element_type=jnp.float32)

    # ---- -inf halos: MaxPool2d padding never wins the max, so this is exact
    hpad_ref[0:2, :, :] = jnp.full((2, ww, chid), -jnp.inf, jnp.float32)
    hpad_ref[hh + 2:hh + 4, :, :] = jnp.full((2, ww, chid), -jnp.inf, jnp.float32)
    wpad_ref[:, 0:2, :] = jnp.full((hh, 2, chid), -jnp.inf, jnp.float32)
    wpad_ref[:, ww + 2:ww + 4, :] = jnp.full((hh, 2, chid), -jnp.inf, jnp.float32)

    # ---- cascaded 5x5 max pools == pools of 5, 9, 13; contract each branch -
    # (tile-preserving shape cast: lane dim unchanged, W is a multiple of 8)
    cur = y.reshape(hh, ww, chid)
    for k in range(1, 4):
        # window max along H (major axis: plain offset reads, no XLU work)
        hpad_ref[2:hh + 2, :, :] = cur
        t = hpad_ref[0:hh, :, :]
        for dh in range(1, 5):
            t = jnp.maximum(t, hpad_ref[dh:dh + hh, :, :])
        # window max along W (sublane axis: offset reads from the halo scratch)
        wpad_ref[:, 2:ww + 2, :] = t
        p = wpad_ref[:, 0:ww, :]
        for dw in range(1, 5):
            p = jnp.maximum(p, wpad_ref[:, dw:dw + ww, :])
        # fold this pooled branch straight into the conv2 accumulator
        acc = acc + jnp.dot(p.reshape(hh * ww, chid), w2_ref[k],
                            preferred_element_type=jnp.float32)
        cur = p

    # ---- conv2 bias + SiLU, store -------------------------------------------
    acc = acc + b2_ref[...]
    out = acc * pl.reciprocal(1.0 + jnp.exp(-acc), approx=True)     # SiLU
    o_ref[0, :, :] = out.astype(o_ref.dtype)


# --------------------------------------------------------------------------
# Full SPPBottleneck forward (channels-last internally)
# --------------------------------------------------------------------------
def spp_bottleneck_forward(x_nchw, params):
    n, cin, h, w = x_nchw.shape
    chid = params["w1"].shape[1]
    cout = params["w2"].shape[2]

    # single entry transpose to channels-last; pixel view is a free reshape
    x_pix = jnp.transpose(x_nchw, (0, 2, 3, 1)).reshape(n, h * w, cin)

    # TODO(synk): for very large H*W*Chid that exceed VMEM, add a hidden-channel
    # tile grid axis with an accumulator scratch; typical YOLO SPP shapes fit.
    y_pix = pl.pallas_call(
        _spp_fused_kernel,
        out_shape=jax.ShapeDtypeStruct((n, h * w, cout), jnp.float32),
        grid_spec=pltpu.PrefetchScalarGridSpec(
            num_scalar_prefetch=0,
            grid=(n,),
            in_specs=[
                pl.BlockSpec((1, h * w, cin), lambda b: (b, 0, 0)),
                pl.BlockSpec((cin, chid), lambda b: (0, 0)),          # resident
                pl.BlockSpec((1, chid), lambda b: (0, 0)),            # resident
                pl.BlockSpec((4, chid, cout), lambda b: (0, 0, 0)),   # resident
                pl.BlockSpec((1, cout), lambda b: (0, 0)),            # resident
            ],
            out_specs=pl.BlockSpec((1, h * w, cout), lambda b: (b, 0, 0)),
            scratch_shapes=[
                pltpu.VMEM((h + 4, w, chid), jnp.float32),   # H-halo buffer
                pltpu.VMEM((h, w + 4, chid), jnp.float32),   # W-halo buffer
            ],
        ),
        compiler_params=pltpu.CompilerParams(
            dimension_semantics=("parallel",),
            vmem_limit_bytes=64 * 1024 * 1024),
    )(x_pix, params["w1"], params["b1"], params["w2"], params["b2"])

    # single exit transpose back to NCHW
    return jnp.transpose(y_pix.reshape(n, h, w, cout), (0, 3, 1, 2))


# --------------------------------------------------------------------------
# Deterministic parameter construction (Conv2d bias=False + BatchNorm folded)
# --------------------------------------------------------------------------
def _fold_bn(w_oc_ic, gamma, beta, mean, var, eps=1e-5):
    scale = gamma / jnp.sqrt(var + eps)
    w_fold = (w_oc_ic * scale[:, None]).T           # (Cin, Cout)
    b_fold = (beta - mean * scale).reshape(1, -1)   # (1, Cout)
    return w_fold.astype(jnp.float32), b_fold.astype(jnp.float32)


def make_params(in_channels, out_channels, key):
    hid = in_channels // 2
    cat_ch = hid * 4
    ks = jax.random.split(key, 10)
    w1_raw = jax.random.normal(ks[0], (hid, in_channels), jnp.float32) * 0.5
    g1 = jax.random.uniform(ks[1], (hid,), jnp.float32, 0.5, 1.5)
    b1 = jax.random.normal(ks[2], (hid,), jnp.float32) * 0.1
    m1 = jax.random.normal(ks[3], (hid,), jnp.float32) * 0.1
    v1 = jax.random.uniform(ks[4], (hid,), jnp.float32, 0.5, 1.5)
    w2_raw = jax.random.normal(ks[5], (out_channels, cat_ch), jnp.float32) * 0.3
    g2 = jax.random.uniform(ks[6], (out_channels,), jnp.float32, 0.5, 1.5)
    b2 = jax.random.normal(ks[7], (out_channels,), jnp.float32) * 0.1
    m2 = jax.random.normal(ks[8], (out_channels,), jnp.float32) * 0.1
    v2 = jax.random.uniform(ks[9], (out_channels,), jnp.float32, 0.5, 1.5)
    w1, bias1 = _fold_bn(w1_raw, g1, b1, m1, v1)
    w2, bias2 = _fold_bn(w2_raw, g2, b2, m2, v2)       # (4*hid, cout)
    # branch-major slabs for the fused kernel: rows [x | p5 | p9 | p13]
    w2 = w2.reshape(4, hid, out_channels)
    return {"w1": w1, "b1": bias1, "w2": w2, "b2": bias2}


# --------------------------------------------------------------------------
# Pure-JAX reference (for the correctness assertion)
# --------------------------------------------------------------------------
def _ref_forward(x, params):
    def silu(v):
        return v * jax.nn.sigmoid(v)

    def pw(v_nchw, w, b):
        y = jnp.einsum("nchw,cd->ndhw", v_nchw, w) + b.reshape(1, -1, 1, 1)
        return silu(y)

    def pool(v, ksz):
        r = ksz // 2
        return jax.lax.reduce_window(
            v, -jnp.inf, jax.lax.max,
            window_dimensions=(1, 1, ksz, ksz),
            window_strides=(1, 1, 1, 1),
            padding=((0, 0), (0, 0), (r, r), (r, r)))

    chid = params["w1"].shape[1]
    cout = params["w2"].shape[2]
    h = pw(x, params["w1"], params["b1"])
    cat = jnp.concatenate([h, pool(h, 5), pool(h, 9), pool(h, 13)], axis=1)
    return pw(cat, params["w2"].reshape(4 * chid, cout), params["b2"])


if __name__ == "__main__":
    key = jax.random.PRNGKey(0)
    kx, kp = jax.random.split(key)
    N, C_IN, H, W = 2, 4, 16, 16
    C_OUT = 8

    x = jax.random.normal(kx, (N, C_IN, H, W), jnp.float32)
    params = make_params(C_IN, C_OUT, kp)

    fwd = jax.jit(spp_bottleneck_forward)
    out = jax.block_until_ready(fwd(x, params))

    ref = _ref_forward(x, params)
    assert out.shape == (N, C_OUT, H, W)
    # tolerance accounts for the approx-reciprocal sigmoid in the fused kernel
    max_err = float(jnp.max(jnp.abs(out - ref)))
    assert jnp.allclose(out, ref, rtol=1e-2, atol=1e-2), max_err

    print("KERNEL_OK")
</pallas_src>

<mosaic_0001>
module attributes {stable_mosaic.version = 11 : i64} {
  func.func @_spp_fused_kernel(%arg0: i32, %arg1: memref<1x256x4xf32, #tpu.memory_space<vmem>>, %arg2: memref<4x2xf32, #tpu.memory_space<vmem>>, %arg3: memref<1x2xf32, #tpu.memory_space<vmem>>, %arg4: memref<4x2x8xf32, #tpu.memory_space<vmem>>, %arg5: memref<1x8xf32, #tpu.memory_space<vmem>>, %arg6: memref<1x256x8xf32, #tpu.memory_space<vmem>>, %arg7: memref<20x16x2xf32, #tpu.memory_space<vmem>>, %arg8: memref<16x20x2xf32, #tpu.memory_space<vmem>>) attributes {dimension_semantics = [#tpu.dimension_semantics<parallel>], iteration_bounds = array<i64: 2>, scalar_prefetch = 0 : i64, scratch_operands = 2 : i64, tpu.core_type = #tpu.core_type<tc>, window_params = [{transform_indices = @transform_0, window_bounds = array<i64: 1, 256, 4>}, {pipeline_mode = #tpu.pipeline_mode<synchronous>, transform_indices = @transform_1, window_bounds = array<i64: 4, 2>}, {pipeline_mode = #tpu.pipeline_mode<synchronous>, transform_indices = @transform_2, window_bounds = array<i64: 1, 2>}, {pipeline_mode = #tpu.pipeline_mode<synchronous>, transform_indices = @transform_3, window_bounds = array<i64: 4, 2, 8>}, {pipeline_mode = #tpu.pipeline_mode<synchronous>, transform_indices = @transform_4, window_bounds = array<i64: 1, 8>}, {transform_indices = @transform_5, window_bounds = array<i64: 1, 256, 8>}]} {
    %c0 = arith.constant 0 : index
    %c0_0 = arith.constant 0 : index
    %c0_1 = arith.constant 0 : index
    %0 = vector.load %arg1[%c0, %c0_0, %c0_1] : memref<1x256x4xf32, #tpu.memory_space<vmem>>, vector<1x256x4xf32>
    %1 = vector.shape_cast %0 : vector<1x256x4xf32> to vector<256x4xf32>
    %c0_2 = arith.constant 0 : index
    %c0_3 = arith.constant 0 : index
    %2 = vector.load %arg2[%c0_2, %c0_3] : memref<4x2xf32, #tpu.memory_space<vmem>>, vector<4x2xf32>
    %cst = arith.constant dense<0.000000e+00> : vector<256x2xf32>
    %3 = tpu.matmul %1, %2, %cst {dimension_numbers = #tpu.dot_dimension_numbers<[1], [0], [0], [1], [0, 0, 1, 1], [], []>} : vector<256x4xf32>, vector<4x2xf32>, vector<256x2xf32> -> vector<256x2xf32>
    %c0_4 = arith.constant 0 : index
    %c0_5 = arith.constant 0 : index
    %4 = vector.load %arg3[%c0_4, %c0_5] : memref<1x2xf32, #tpu.memory_space<vmem>>, vector<1x2xf32>
    %5 = vector.broadcast %4 : vector<1x2xf32> to vector<256x2xf32>
    %6 = arith.addf %3, %5 : vector<256x2xf32>
    %cst_6 = arith.constant 0.000000e+00 : f32
    %7 = vector.broadcast %cst_6 : f32 to vector<256x2xf32>
    %8 = arith.subf %7, %6 : vector<256x2xf32>
    %9 = math.exp %8 : vector<256x2xf32>
    %cst_7 = arith.constant 1.000000e+00 : f32
    %10 = vector.broadcast %cst_7 : f32 to vector<256x2xf32>
    %11 = arith.addf %10, %9 : vector<256x2xf32>
    %12 = tpu.reciprocal %11 {approx = true} : vector<256x2xf32> -> vector<256x2xf32>
    %13 = arith.mulf %6, %12 : vector<256x2xf32>
    %c0_8 = arith.constant 0 : index
    %c0_9 = arith.constant 0 : index
    %c0_10 = arith.constant 0 : index
    %14 = vector.load %arg4[%c0_8, %c0_9, %c0_10] : memref<4x2x8xf32, #tpu.memory_space<vmem>>, vector<1x2x8xf32>
    %15 = vector.shape_cast %14 : vector<1x2x8xf32> to vector<2x8xf32>
    %cst_11 = arith.constant dense<0.000000e+00> : vector<256x8xf32>
    %16 = tpu.matmul %13, %15, %cst_11 {dimension_numbers = #tpu.dot_dimension_numbers<[1], [0], [0], [1], [0, 0, 1, 1], [], []>} : vector<256x2xf32>, vector<2x8xf32>, vector<256x8xf32> -> vector<256x8xf32>
    %cst_12 = arith.constant 0xFF800000 : f32
    %17 = vector.broadcast %cst_12 : f32 to vector<2x16x2xf32>
    %c0_13 = arith.constant 0 : index
    %c0_14 = arith.constant 0 : index
    %c0_15 = arith.constant 0 : index
    %18 = vector.load %arg7[%c0_13, %c0_14, %c0_15] : memref<20x16x2xf32, #tpu.memory_space<vmem>>, vector<2x16x2xf32>
    tpu.vector_store %arg7[%c0_13, %c0_14, %c0_15], %17 {strides = array<i32>} : memref<20x16x2xf32, #tpu.memory_space<vmem>>, vector<2x16x2xf32>,
    %cst_16 = arith.constant 0xFF800000 : f32
    %19 = vector.broadcast %cst_16 : f32 to vector<2x16x2xf32>
    %c18 = arith.constant 18 : index
    %c0_17 = arith.constant 0 : index
    %c0_18 = arith.constant 0 : index
    %20 = vector.load %arg7[%c18, %c0_17, %c0_18] : memref<20x16x2xf32, #tpu.memory_space<vmem>>, vector<2x16x2xf32>
    tpu.vector_store %arg7[%c18, %c0_17, %c0_18], %19 {strides = array<i32>} : memref<20x16x2xf32, #tpu.memory_space<vmem>>, vector<2x16x2xf32>,
    %cst_19 = arith.constant 0xFF800000 : f32
    %21 = vector.broadcast %cst_19 : f32 to vector<16x2x2xf32>
    %c0_20 = arith.constant 0 : index
    %c0_21 = arith.constant 0 : index
    %c0_22 = arith.constant 0 : index
    %22 = vector.load %arg8[%c0_20, %c0_21, %c0_22] : memref<16x20x2xf32, #tpu.memory_space<vmem>>, vector<16x2x2xf32>
    tpu.vector_store %arg8[%c0_20, %c0_21, %c0_22], %21 {strides = array<i32>} : memref<16x20x2xf32, #tpu.memory_space<vmem>>, vector<16x2x2xf32>,
    %cst_23 = arith.constant 0xFF800000 : f32
    %23 = vector.broadcast %cst_23 : f32 to vector<16x2x2xf32>
    %c0_24 = arith.constant 0 : index
    %c18_25 = arith.constant 18 : index
    %c0_26 = arith.constant 0 : index
    %24 = vector.load %arg8[%c0_24, %c18_25, %c0_26] : memref<16x20x2xf32, #tpu.memory_space<vmem>>, vector<16x2x2xf32>
    tpu.vector_store %arg8[%c0_24, %c18_25, %c0_26], %23 {strides = array<i32>} : memref<16x20x2xf32, #tpu.memory_space<vmem>>, vector<16x2x2xf32>,
    %25 = vector.shape_cast %13 : vector<256x2xf32> to vector<16x16x2xf32>
    %c2 = arith.constant 2 : index
    %c0_27 = arith.constant 0 : index
    %c0_28 = arith.constant 0 : index
    %26 = vector.load %arg7[%c2, %c0_27, %c0_28] : memref<20x16x2xf32, #tpu.memory_space<vmem>>, vector<16x16x2xf32>
    tpu.vector_store %arg7[%c2, %c0_27, %c0_28], %25 {strides = array<i32>} : memref<20x16x2xf32, #tpu.memory_space<vmem>>, vector<16x16x2xf32>,
    %c0_29 = arith.constant 0 : index
    %c0_30 = arith.constant 0 : index
    %c0_31 = arith.constant 0 : index
    %27 = vector.load %arg7[%c0_29, %c0_30, %c0_31] : memref<20x16x2xf32, #tpu.memory_space<vmem>>, vector<16x16x2xf32>
    %c1 = arith.constant 1 : index
    %c0_32 = arith.constant 0 : index
    %c0_33 = arith.constant 0 : index
    %28 = vector.load %arg7[%c1, %c0_32, %c0_33] : memref<20x16x2xf32, #tpu.memory_space<vmem>>, vector<16x16x2xf32>
    %29 = arith.maximumf %27, %28 : vector<16x16x2xf32>
    %c2_34 = arith.constant 2 : index
    %c0_35 = arith.constant 0 : index
    %c0_36 = arith.constant 0 : index
    %30 = vector.load %arg7[%c2_34, %c0_35, %c0_36] : memref<20x16x2xf32, #tpu.memory_space<vmem>>, vector<16x16x2xf32>
    %31 = arith.maximumf %29, %30 : vector<16x16x2xf32>
    %c3 = arith.constant 3 : index
    %c0_37 = arith.constant 0 : index
    %c0_38 = arith.constant 0 : index
    %32 = vector.load %arg7[%c3, %c0_37, %c0_38] : memref<20x16x2xf32, #tpu.memory_space<vmem>>, vector<16x16x2xf32>
    %33 = arith.maximumf %31, %32 : vector<16x16x2xf32>
    %c4 = arith.constant 4 : index
    %c0_39 = arith.constant 0 : index
    %c0_40 = arith.constant 0 : index
    %34 = vector.load %arg7[%c4, %c0_39, %c0_40] : memref<20x16x2xf32, #tpu.memory_space<vmem>>, vector<16x16x2xf32>
    %35 = arith.maximumf %33, %34 : vector<16x16x2xf32>
    %c0_41 = arith.constant 0 : index
    %c2_42 = arith.constant 2 : index
    %c0_43 = arith.constant 0 : index
    %36 = vector.load %arg8[%c0_41, %c2_42, %c0_43] : memref<16x20x2xf32, #tpu.memory_space<vmem>>, vector<16x16x2xf32>
    tpu.vector_store %arg8[%c0_41, %c2_42, %c0_43], %35 {strides = array<i32>} : memref<16x20x2xf32, #tpu.memory_space<vmem>>, vector<16x16x2xf32>,
    %c0_44 = arith.constant 0 : index
    %c0_45 = arith.constant 0 : index
    %c0_46 = arith.constant 0 : index
    %37 = vector.load %arg8[%c0_44, %c0_45, %c0_46] : memref<16x20x2xf32, #tpu.memory_space<vmem>>, vector<16x16x2xf32>
    %c0_47 = arith.constant 0 : index
    %c1_48 = arith.constant 1 : index
    %c0_49 = arith.constant 0 : index
    %38 = vector.load %arg8[%c0_47, %c1_48, %c0_49] : memref<16x20x2xf32, #tpu.memory_space<vmem>>, vector<16x16x2xf32>
    %39 = arith.maximumf %37, %38 : vector<16x16x2xf32>
    %c0_50 = arith.constant 0 : index
    %c2_51 = arith.constant 2 : index
    %c0_52 = arith.constant 0 : index
    %40 = vector.load %arg8[%c0_50, %c2_51, %c0_52] : memref<16x20x2xf32, #tpu.memory_space<vmem>>, vector<16x16x2xf32>
    %41 = arith.maximumf %39, %40 : vector<16x16x2xf32>
    %c0_53 = arith.constant 0 : index
    %c3_54 = arith.constant 3 : index
    %c0_55 = arith.constant 0 : index
    %42 = vector.load %arg8[%c0_53, %c3_54, %c0_55] : memref<16x20x2xf32, #tpu.memory_space<vmem>>, vector<16x16x2xf32>
    %43 = arith.maximumf %41, %42 : vector<16x16x2xf32>
    %c0_56 = arith.constant 0 : index
    %c4_57 = arith.constant 4 : index
    %c0_58 = arith.constant 0 : index
    %44 = vector.load %arg8[%c0_56, %c4_57, %c0_58] : memref<16x20x2xf32, #tpu.memory_space<vmem>>, vector<16x16x2xf32>
    %45 = arith.maximumf %43, %44 : vector<16x16x2xf32>
    %46 = vector.shape_cast %45 : vector<16x16x2xf32> to vector<256x2xf32>
    %c1_59 = arith.constant 1 : index
    %c0_60 = arith.constant 0 : index
    %c0_61 = arith.constant 0 : index
    %47 = vector.load %arg4[%c1_59, %c0_60, %c0_61] : memref<4x2x8xf32, #tpu.memory_space<vmem>>, vector<1x2x8xf32>
    %48 = vector.shape_cast %47 : vector<1x2x8xf32> to vector<2x8xf32>
    %cst_62 = arith.constant dense<0.000000e+00> : vector<256x8xf32>
    %49 = tpu.matmul %46, %48, %cst_62 {dimension_numbers = #tpu.dot_dimension_numbers<[1], [0], [0], [1], [0, 0, 1, 1], [], []>} : vector<256x2xf32>, vector<2x8xf32>, vector<256x8xf32> -> vector<256x8xf32>
    %50 = arith.addf %16, %49 : vector<256x8xf32>
    %c2_63 = arith.constant 2 : index
    %c0_64 = arith.constant 0 : index
    %c0_65 = arith.constant 0 : index
    %51 = vector.load %arg7[%c2_63, %c0_64, %c0_65] : memref<20x16x2xf32, #tpu.memory_space<vmem>>, vector<16x16x2xf32>
    tpu.vector_store %arg7[%c2_63, %c0_64, %c0_65], %45 {strides = array<i32>} : memref<20x16x2xf32, #tpu.memory_space<vmem>>, vector<16x16x2xf32>,
    %c0_66 = arith.constant 0 : index
    %c0_67 = arith.constant 0 : index
    %c0_68 = arith.constant 0 : index
    %52 = vector.load %arg7[%c0_66, %c0_67, %c0_68] : memref<20x16x2xf32, #tpu.memory_space<vmem>>, vector<16x16x2xf32>
    %c1_69 = arith.constant 1 : index
    %c0_70 = arith.constant 0 : index
    %c0_71 = arith.constant 0 : index
    %53 = vector.load %arg7[%c1_69, %c0_70, %c0_71] : memref<20x16x2xf32, #tpu.memory_space<vmem>>, vector<16x16x2xf32>
    %54 = arith.maximumf %52, %53 : vector<16x16x2xf32>
    %c2_72 = arith.constant 2 : index
    %c0_73 = arith.constant 0 : index
    %c0_74 = arith.constant 0 : index
    %55 = vector.load %arg7[%c2_72, %c0_73, %c0_74] : memref<20x16x2xf32, #tpu.memory_space<vmem>>, vector<16x16x2xf32>
    %56 = arith.maximumf %54, %55 : vector<16x16x2xf32>
    %c3_75 = arith.constant 3 : index
    %c0_76 = arith.constant 0 : index
    %c0_77 = arith.constant 0 : index
    %57 = vector.load %arg7[%c3_75, %c0_76, %c0_77] : memref<20x16x2xf32, #tpu.memory_space<vmem>>, vector<16x16x2xf32>
    %58 = arith.maximumf %56, %57 : vector<16x16x2xf32>
    %c4_78 = arith.constant 4 : index
    %c0_79 = arith.constant 0 : index
    %c0_80 = arith.constant 0 : index
    %59 = vector.load %arg7[%c4_78, %c0_79, %c0_80] : memref<20x16x2xf32, #tpu.memory_space<vmem>>, vector<16x16x2xf32>
    %60 = arith.maximumf %58, %59 : vector<16x16x2xf32>
    %c0_81 = arith.constant 0 : index
    %c2_82 = arith.constant 2 : index
    %c0_83 = arith.constant 0 : index
    %61 = vector.load %arg8[%c0_81, %c2_82, %c0_83] : memref<16x20x2xf32, #tpu.memory_space<vmem>>, vector<16x16x2xf32>
    tpu.vector_store %arg8[%c0_81, %c2_82, %c0_83], %60 {strides = array<i32>} : memref<16x20x2xf32, #tpu.memory_space<vmem>>, vector<16x16x2xf32>,
    %c0_84 = arith.constant 0 : index
    %c0_85 = arith.constant 0 : index
    %c0_86 = arith.constant 0 : index
    %62 = vector.load %arg8[%c0_84, %c0_85, %c0_86] : memref<16x20x2xf32, #tpu.memory_space<vmem>>, vector<16x16x2xf32>
    %c0_87 = arith.constant 0 : index
    %c1_88 = arith.constant 1 : index
    %c0_89 = arith.constant 0 : index
    %63 = vector.load %arg8[%c0_87, %c1_88, %c0_89] : memref<16x20x2xf32, #tpu.memory_space<vmem>>, vector<16x16x2xf32>
    %64 = arith.maximumf %62, %63 : vector<16x16x2xf32>
    %c0_90 = arith.constant 0 : index
    %c2_91 = arith.constant 2 : index
    %c0_92 = arith.constant 0 : index
    %65 = vector.load %arg8[%c0_90, %c2_91, %c0_92] : memref<16x20x2xf32, #tpu.memory_space<vmem>>, vector<16x16x2xf32>
    %66 = arith.maximumf %64, %65 : vector<16x16x2xf32>
    %c0_93 = arith.constant 0 : index
    %c3_94 = arith.constant 3 : index
    %c0_95 = arith.constant 0 : index
    %67 = vector.load %arg8[%c0_93, %c3_94, %c0_95] : memref<16x20x2xf32, #tpu.memory_space<vmem>>, vector<16x16x2xf32>
    %68 = arith.maximumf %66, %67 : vector<16x16x2xf32>
    %c0_96 = arith.constant 0 : index
    %c4_97 = arith.constant 4 : index
    %c0_98 = arith.constant 0 : index
    %69 = vector.load %arg8[%c0_96, %c4_97, %c0_98] : memref<16x20x2xf32, #tpu.memory_space<vmem>>, vector<16x16x2xf32>
    %70 = arith.maximumf %68, %69 : vector<16x16x2xf32>
    %71 = vector.shape_cast %70 : vector<16x16x2xf32> to vector<256x2xf32>
    %c2_99 = arith.constant 2 : index
    %c0_100 = arith.constant 0 : index
    %c0_101 = arith.constant 0 : index
    %72 = vector.load %arg4[%c2_99, %c0_100, %c0_101] : memref<4x2x8xf32, #tpu.memory_space<vmem>>, vector<1x2x8xf32>
    %73 = vector.shape_cast %72 : vector<1x2x8xf32> to vector<2x8xf32>
    %cst_102 = arith.constant dense<0.000000e+00> : vector<256x8xf32>
    %74 = tpu.matmul %71, %73, %cst_102 {dimension_numbers = #tpu.dot_dimension_numbers<[1], [0], [0], [1], [0, 0, 1, 1], [], []>} : vector<256x2xf32>, vector<2x8xf32>, vector<256x8xf32> -> vector<256x8xf32>
    %75 = arith.addf %50, %74 : vector<256x8xf32>
    %c2_103 = arith.constant 2 : index
    %c0_104 = arith.constant 0 : index
    %c0_105 = arith.constant 0 : index
    %76 = vector.load %arg7[%c2_103, %c0_104, %c0_105] : memref<20x16x2xf32, #tpu.memory_space<vmem>>, vector<16x16x2xf32>
    tpu.vector_store %arg7[%c2_103, %c0_104, %c0_105], %70 {strides = array<i32>} : memref<20x16x2xf32, #tpu.memory_space<vmem>>, vector<16x16x2xf32>,
    %c0_106 = arith.constant 0 : index
    %c0_107 = arith.constant 0 : index
    %c0_108 = arith.constant 0 : index
    %77 = vector.load %arg7[%c0_106, %c0_107, %c0_108] : memref<20x16x2xf32, #tpu.memory_space<vmem>>, vector<16x16x2xf32>
    %c1_109 = arith.constant 1 : index
    %c0_110 = arith.constant 0 : index
    %c0_111 = arith.constant 0 : index
    %78 = vector.load %arg7[%c1_109, %c0_110, %c0_111] : memref<20x16x2xf32, #tpu.memory_space<vmem>>, vector<16x16x2xf32>
    %79 = arith.maximumf %77, %78 : vector<16x16x2xf32>
    %c2_112 = arith.constant 2 : index
    %c0_113 = arith.constant 0 : index
    %c0_114 = arith.constant 0 : index
    %80 = vector.load %arg7[%c2_112, %c0_113, %c0_114] : memref<20x16x2xf32, #tpu.memory_space<vmem>>, vector<16x16x2xf32>
    %81 = arith.maximumf %79, %80 : vector<16x16x2xf32>
    %c3_115 = arith.constant 3 : index
    %c0_116 = arith.constant 0 : index
    %c0_117 = arith.constant 0 : index
    %82 = vector.load %arg7[%c3_115, %c0_116, %c0_117] : memref<20x16x2xf32, #tpu.memory_space<vmem>>, vector<16x16x2xf32>
    %83 = arith.maximumf %81, %82 : vector<16x16x2xf32>
    %c4_118 = arith.constant 4 : index
    %c0_119 = arith.constant 0 : index
    %c0_120 = arith.constant 0 : index
    %84 = vector.load %arg7[%c4_118, %c0_119, %c0_120] : memref<20x16x2xf32, #tpu.memory_space<vmem>>, vector<16x16x2xf32>
    %85 = arith.maximumf %83, %84 : vector<16x16x2xf32>
    %c0_121 = arith.constant 0 : index
    %c2_122 = arith.constant 2 : index
    %c0_123 = arith.constant 0 : index
    %86 = vector.load %arg8[%c0_121, %c2_122, %c0_123] : memref<16x20x2xf32, #tpu.memory_space<vmem>>, vector<16x16x2xf32>
    tpu.vector_store %arg8[%c0_121, %c2_122, %c0_123], %85 {strides = array<i32>} : memref<16x20x2xf32, #tpu.memory_space<vmem>>, vector<16x16x2xf32>,
    %c0_124 = arith.constant 0 : index
    %c0_125 = arith.constant 0 : index
    %c0_126 = arith.constant 0 : index
    %87 = vector.load %arg8[%c0_124, %c0_125, %c0_126] : memref<16x20x2xf32, #tpu.memory_space<vmem>>, vector<16x16x2xf32>
    %c0_127 = arith.constant 0 : index
    %c1_128 = arith.constant 1 : index
    %c0_129 = arith.constant 0 : index
    %88 = vector.load %arg8[%c0_127, %c1_128, %c0_129] : memref<16x20x2xf32, #tpu.memory_space<vmem>>, vector<16x16x2xf32>
    %89 = arith.maximumf %87, %88 : vector<16x16x2xf32>
    %c0_130 = arith.constant 0 : index
    %c2_131 = arith.constant 2 : index
    %c0_132 = arith.constant 0 : index
    %90 = vector.load %arg8[%c0_130, %c2_131, %c0_132] : memref<16x20x2xf32, #tpu.memory_space<vmem>>, vector<16x16x2xf32>
    %91 = arith.maximumf %89, %90 : vector<16x16x2xf32>
    %c0_133 = arith.constant 0 : index
    %c3_134 = arith.constant 3 : index
    %c0_135 = arith.constant 0 : index
    %92 = vector.load %arg8[%c0_133, %c3_134, %c0_135] : memref<16x20x2xf32, #tpu.memory_space<vmem>>, vector<16x16x2xf32>
    %93 = arith.maximumf %91, %92 : vector<16x16x2xf32>
    %c0_136 = arith.constant 0 : index
    %c4_137 = arith.constant 4 : index
    %c0_138 = arith.constant 0 : index
    %94 = vector.load %arg8[%c0_136, %c4_137, %c0_138] : memref<16x20x2xf32, #tpu.memory_space<vmem>>, vector<16x16x2xf32>
    %95 = arith.maximumf %93, %94 : vector<16x16x2xf32>
    %96 = vector.shape_cast %95 : vector<16x16x2xf32> to vector<256x2xf32>
    %c3_139 = arith.constant 3 : index
    %c0_140 = arith.constant 0 : index
    %c0_141 = arith.constant 0 : index
    %97 = vector.load %arg4[%c3_139, %c0_140, %c0_141] : memref<4x2x8xf32, #tpu.memory_space<vmem>>, vector<1x2x8xf32>
    %98 = vector.shape_cast %97 : vector<1x2x8xf32> to vector<2x8xf32>
    %cst_142 = arith.constant dense<0.000000e+00> : vector<256x8xf32>
    %99 = tpu.matmul %96, %98, %cst_142 {dimension_numbers = #tpu.dot_dimension_numbers<[1], [0], [0], [1], [0, 0, 1, 1], [], []>} : vector<256x2xf32>, vector<2x8xf32>, vector<256x8xf32> -> vector<256x8xf32>
    %100 = arith.addf %75, %99 : vector<256x8xf32>
    %c0_143 = arith.constant 0 : index
    %c0_144 = arith.constant 0 : index
    %101 = vector.load %arg5[%c0_143, %c0_144] : memref<1x8xf32, #tpu.memory_space<vmem>>, vector<1x8xf32>
    %102 = vector.broadcast %101 : vector<1x8xf32> to vector<256x8xf32>
    %103 = arith.addf %100, %102 : vector<256x8xf32>
    %cst_145 = arith.constant 0.000000e+00 : f32
    %104 = vector.broadcast %cst_145 : f32 to vector<256x8xf32>
    %105 = arith.subf %104, %103 : vector<256x8xf32>
    %106 = math.exp %105 : vector<256x8xf32>
    %cst_146 = arith.constant 1.000000e+00 : f32
    %107 = vector.broadcast %cst_146 : f32 to vector<256x8xf32>
    %108 = arith.addf %107, %106 : vector<256x8xf32>
    %109 = tpu.reciprocal %108 {approx = true} : vector<256x8xf32> -> vector<256x8xf32>
    %110 = arith.mulf %103, %109 : vector<256x8xf32>
    %c0_147 = arith.constant 0 : index
    %c0_148 = arith.constant 0 : index
    %c0_149 = arith.constant 0 : index
    %111 = vector.load %arg6[%c0_147, %c0_148, %c0_149] : memref<1x256x8xf32, #tpu.memory_space<vmem>>, vector<1x256x8xf32>
    %112 = vector.shape_cast %111 : vector<1x256x8xf32> to vector<256x8xf32>
    %113 = vector.shape_cast %110 : vector<256x8xf32> to vector<1x256x8xf32>
    tpu.vector_store %arg6[%c0_147, %c0_148, %c0_149], %113 {strides = array<i32>} : memref<1x256x8xf32, #tpu.memory_space<vmem>>, vector<1x256x8xf32>,
    return
  }
  func.func @transform_0(%arg0: i32) -> (i32, i32, i32) {
    %c0_i32 = arith.constant 0 : i32
    %c0_i32_0 = arith.constant 0 : i32
    %c0_i32_1 = arith.constant 0 : i32
    return %arg0, %c0_i32, %c0_i32_0 : i32, i32, i32
  }
  func.func @transform_1(%arg0: i32) -> (i32, i32) {
    %c0_i32 = arith.constant 0 : i32
    %c0_i32_0 = arith.constant 0 : i32
    %c0_i32_1 = arith.constant 0 : i32
    return %c0_i32, %c0_i32_0 : i32, i32
  }
  func.func @transform_2(%arg0: i32) -> (i32, i32) {
    %c0_i32 = arith.constant 0 : i32
    %c0_i32_0 = arith.constant 0 : i32
    %c0_i32_1 = arith.constant 0 : i32
    return %c0_i32, %c0_i32_0 : i32, i32
  }
  func.func @transform_3(%arg0: i32) -> (i32, i32, i32) {
    %c0_i32 = arith.constant 0 : i32
    %c0_i32_0 = arith.constant 0 : i32
    %c0_i32_1 = arith.constant 0 : i32
    %c0_i32_2 = arith.constant 0 : i32
    return %c0_i32, %c0_i32_0, %c0_i32_1 : i32, i32, i32
  }
  func.func @transform_4(%arg0: i32) -> (i32, i32) {
    %c0_i32 = arith.constant 0 : i32
    %c0_i32_0 = arith.constant 0 : i32
    %c0_i32_1 = arith.constant 0 : i32
    return %c0_i32, %c0_i32_0 : i32, i32
  }
  func.func @transform_5(%arg0: i32) -> (i32, i32, i32) {
    %c0_i32 = arith.constant 0 : i32
    %c0_i32_0 = arith.constant 0 : i32
    %c0_i32_1 = arith.constant 0 : i32
    return %arg0, %c0_i32, %c0_i32_0 : i32, i32, i32
  }
}

</mosaic_0001>

<llo_original>
// kernel: spp_bottleneck_forward.1
$region0: #{spp_bottleneck_forward.1}
  #allocation0 [shape = 'u32[]', space=smem, size = 0x4, offset = 0x4, fixed_abs, tag = 'smem constant byte address 0x4 - core index']
  #allocation1 [shape = 'u32[144,128]{1,0:T(1,128)}', space=vmem, size = 0x12000, scoped, tag = 'internal scratch']
  #allocation2 [shape = 'f32[20,16,2]{2,1,0:T(8,128)}', space=vmem, size = 0x28000, scoped, tag = 'scratch operand']
  #allocation3 [shape = 'f32[16,20,2]{2,1,0:T(8,128)}', space=vmem, size = 0x30000, scoped, tag = 'scratch operand']
  %s0 = inlined_call_operand.hbm [shape: f32[2,256,4], index: 0, kind: input, shape index: {}]
  %s1 = inlined_call_operand.hbm [shape: f32[4,2], index: 1, kind: input, shape index: {}]
  %s2 = inlined_call_operand.hbm [shape: f32[1,2], index: 2, kind: input, shape index: {}]
  %s3 = inlined_call_operand.hbm [shape: f32[4,2,8], index: 3, kind: input, shape index: {}]
  %s4 = inlined_call_operand.hbm [shape: f32[1,8], index: 4, kind: input, shape index: {}]
  %s5 = inlined_call_operand.hbm [shape: f32[2,256,8], index: 5, kind: output, shape index: {}]
  %s6 = sld [smem:[#allocation0]]
  $region73: #{spp_bottleneck_forward.1} parent=0
    _
  %s8 = ssub.s32 1, %s6
  %s9 = scalar_select 0, %s8, %s6
  $region1: #{spp_bottleneck_forward.1} parent=0
    #allocation4 [shape = 'u8[262144]{0}', space=vmem, size = 0x40000, scoped, tag = 'input window, operand 0']
    #allocation5 [shape = 's32[2]{0}', space=sflag, size = 0x8, scoped, tag = 'scoped memory for spp_bottleneck_forward.1']
    #allocation6 [shape = 's32[2]{0}', space=sflag, size = 0x8, scoped, tag = 'scoped memory for spp_bottleneck_forward.1']
    #allocation7 [shape = 'u8[2048]{0}', space=vmem, size = 0x800, scoped, tag = 'input window, operand 1, single buffered']
    #allocation8 [shape = 's32[1]{0}', space=sflag, size = 0x4, scoped, tag = 'scoped memory for spp_bottleneck_forward.1']
    #allocation9 [shape = 'u8[512]{0}', space=vmem, size = 0x400, scoped, tag = 'input window, operand 2, single buffered']
    #allocation10 [shape = 'u8[4096]{0}', space=vmem, size = 0x1000, scoped, tag = 'input window, operand 3, single buffered']
    #allocation11 [shape = 's32[1]{0}', space=sflag, size = 0x4, scoped, tag = 'scoped memory for spp_bottleneck_forward.1']
    #allocation12 [shape = 'u8[512]{0}', space=vmem, size = 0x400, scoped, tag = 'input window, operand 4, single buffered']
    #allocation13 [shape = 'u8[262144]{0}', space=vmem, size = 0x40000, scoped, tag = 'output window, operand 0']
    %10 = vsyncpa [#allocation5], 0
    %s11 = scalar_lea.sflag [#allocation5], 1
    %12 = vsyncpa %s11, 0
    %13 = vsyncpa [#allocation8], 0
    %14 = vsyncpa [#allocation11], 0
    %15 = vsyncpa [#allocation6], 0
    %s16 = scalar_lea.sflag [#allocation6], 1
    %17 = vsyncpa %s16, 0
    loop: start=0, step=1, limit=4
    $region2: #{spp_bottleneck_forward.1} parent=1 // loop_pre_header
      _
    $region3: #{spp_bottleneck_forward.1} parent=1 // loop_header
      %s19 = sphi 0, %s23
      %p20 = scmp.ge.s32.totalorder %s19, 4
      %s29 = sphi 0, %s31
      %s32 = sphi 0, %s29
      %s33 = sphi 0, %s32
      %s49 = sphi 0, %s33
      %s53 = sphi 0, %s53
      %s55 = sphi 0, %s53
      %s56 = sphi 0, %s55
      %s70 = sphi 0, %s56
      %s74 = sphi 0, %s74
      %s76 = sphi 0, %s74
      %s77 = sphi 0, %s76
      %s91 = sphi 0, %s77
      %s95 = sphi 0, %s95
      %s97 = sphi 0, %s95
      %s98 = sphi 0, %s97
      %s112 = sphi 0, %s98
      %s116 = sphi 0, %s116
      %s118 = sphi 0, %s116
      %s119 = sphi 0, %s118
      %s133 = sphi 0, %s119
      %s139 = sphi 0, %s141
      %s142 = sphi 0, %s139
      %s143 = sphi 0, %s142
      %s159 = sphi 0, %s143
    $region4: #{spp_bottleneck_forward.1} parent=1 // loop_header_branch
      %22 = sbr.rel (%p20) target = $region8
    $region5: #{spp_bottleneck_forward.1} parent=1 // loop_body
      %s24 = ssub.s32 %s19, 1
      %s25 = ssub.s32 %s19, 2
      %s26 = sadd.s32 %s19, 1
      %s27 = ssub.s32 %s19, %s26
      %p28 = scmp.eq.s32.totalorder %s27, 0
      %s30 = sadd.s32 %s29, 1
      %s31 = scalar_select %p28, %s29, %s30
      %p34 = pneg %p28
      %p35 = scmp.eq.s32.totalorder %s19, 1
      %p36 = por %p34, %p35
      %p37 = scmp.ne.s32.totalorder %s29, %s32
      %p38 = scmp.eq.s32.totalorder %s19, 0
      %p39 = por %p37, %p38
      %p40 = scmp.ne.s32.totalorder %s29, %s32
      %p41 = scmp.eq.s32.totalorder %s24, 1
      %p42 = por %p40, %p41
      %p43 = scmp.ne.s32.totalorder %s32, %s33
      %p44 = scmp.eq.s32.totalorder %s24, 0
      %p45 = por %p43, %p44
      %p46 = scmp.ne.s32.totalorder %s32, %s33
      %p47 = scmp.eq.s32.totalorder %s25, 1
      %p48 = por %p46, %p47
      %p50 = scmp.ne.s32.totalorder %s33, %s49
      %p51 = scmp.eq.s32.totalorder %s25, 0
      %p52 = por %p50, %p51
      %s54 = sadd.s32 %s53, 1
      %p57 = scmp.eq.s32.totalorder %s19, 1
      %p58 = scmp.ne.s32.totalorder %s53, %s55
      %p59 = scmp.eq.s32.totalorder %s19, 0
      %p60 = por %p58, %p59
      %p61 = scmp.ne.s32.totalorder %s53, %s55
      %p62 = scmp.eq.s32.totalorder %s24, 1
      %p63 = por %p61, %p62
      %p64 = scmp.ne.s32.totalorder %s55, %s56
      %p65 = scmp.eq.s32.totalorder %s24, 0
      %p66 = por %p64, %p65
      %p67 = scmp.ne.s32.totalorder %s55, %s56
      %p68 = scmp.eq.s32.totalorder %s25, 1
      %p69 = por %p67, %p68
      %p71 = scmp.ne.s32.totalorder %s56, %s70
      %p72 = scmp.eq.s32.totalorder %s25, 0
      %p73 = por %p71, %p72
      %s75 = sadd.s32 %s74, 1
      %p78 = scmp.eq.s32.totalorder %s19, 1
      %p79 = scmp.ne.s32.totalorder %s74, %s76
      %p80 = scmp.eq.s32.totalorder %s19, 0
      %p81 = por %p79, %p80
      %p82 = scmp.ne.s32.totalorder %s74, %s76
      %p83 = scmp.eq.s32.totalorder %s24, 1
      %p84 = por %p82, %p83
      %p85 = scmp.ne.s32.totalorder %s76, %s77
      %p86 = scmp.eq.s32.totalorder %s24, 0
      %p87 = por %p85, %p86
      %p88 = scmp.ne.s32.totalorder %s76, %s77
      %p89 = scmp.eq.s32.totalorder %s25, 1
      %p90 = por %p88, %p89
      %p92 = scmp.ne.s32.totalorder %s77, %s91
      %p93 = scmp.eq.s32.totalorder %s25, 0
      %p94 = por %p92, %p93
      %s96 = sadd.s32 %s95, 1
      %p99 = scmp.eq.s32.totalorder %s19, 1
      %p100 = scmp.ne.s32.totalorder %s95, %s97
      %p101 = scmp.eq.s32.totalorder %s19, 0
      %p102 = por %p100, %p101
      %p103 = scmp.ne.s32.totalorder %s95, %s97
      %p104 = scmp.eq.s32.totalorder %s24, 1
      %p105 = por %p103, %p104
      %p106 = scmp.ne.s32.totalorder %s97, %s98
      %p107 = scmp.eq.s32.totalorder %s24, 0
      %p108 = por %p106, %p107
      %p109 = scmp.ne.s32.totalorder %s97, %s98
      %p110 = scmp.eq.s32.totalorder %s25, 1
      %p111 = por %p109, %p110
      %p113 = scmp.ne.s32.totalorder %s98, %s112
      %p114 = scmp.eq.s32.totalorder %s25, 0
      %p115 = por %p113, %p114
      %s117 = sadd.s32 %s116, 1
      %p120 = scmp.eq.s32.totalorder %s19, 1
      %p121 = scmp.ne.s32.totalorder %s116, %s118
      %p122 = scmp.eq.s32.totalorder %s19, 0
      %p123 = por %p121, %p122
      %p124 = scmp.ne.s32.totalorder %s116, %s118
      %p125 = scmp.eq.s32.totalorder %s24, 1
      %p126 = por %p124, %p125
      %p127 = scmp.ne.s32.totalorder %s118, %s119
      %p128 = scmp.eq.s32.totalorder %s24, 0
      %p129 = por %p127, %p128
      %p130 = scmp.ne.s32.totalorder %s118, %s119
      %p131 = scmp.eq.s32.totalorder %s25, 1
      %p132 = por %p130, %p131
      %p134 = scmp.ne.s32.totalorder %s119, %s133
      %p135 = scmp.eq.s32.totalorder %s25, 0
      %p136 = por %p134, %p135
      %s137 = ssub.s32 %s19, %s26
      %p138 = scmp.eq.s32.totalorder %s137, 0
      %s140 = sadd.s32 %s139, 1
      %s141 = scalar_select %p138, %s139, %s140
      %p144 = pneg %p138
      %p145 = scmp.eq.s32.totalorder %s19, 1
      %p146 = por %p144, %p145
      %p147 = scmp.ne.s32.totalorder %s139, %s142
      %p148 = scmp.eq.s32.totalorder %s19, 0
      %p149 = por %p147, %p148
      %p150 = scmp.ne.s32.totalorder %s139, %s142
      %p151 = scmp.eq.s32.totalorder %s24, 1
      %p152 = por %p150, %p151
      %p153 = scmp.ne.s32.totalorder %s142, %s143
      %p154 = scmp.eq.s32.totalorder %s24, 0
      %p155 = por %p153, %p154
      %p156 = scmp.ne.s32.totalorder %s142, %s143
      %p157 = scmp.eq.s32.totalorder %s25, 1
      %p158 = por %p156, %p157
      %p160 = scmp.ne.s32.totalorder %s143, %s159
      %p161 = scmp.eq.s32.totalorder %s25, 0
      %p162 = por %p160, %p161
      %p163 = scmp.le.s32.totalorder 1, %s19
      %p164 = scmp.lt.s32.totalorder %s19, 3
      %p165 = pnand %p163, %p164
      %p166 = pneg %p165
      // Predicated region
      $region9: #{spp_bottleneck_forward.1} parent=5 // pred_check
        _
      $region10: #{spp_bottleneck_forward.1} parent=5 // pred_check_branch
        %168 = sbr.rel (%p165) target = $region12
      $region11: #{spp_bottleneck_forward.1} parent=5 // pred_region
        %s169 = ssub.s32 %s19, 1
        // Predicated region
        $region13: #{spp_bottleneck_forward.1} parent=11 // pred_check
          %p170 = pneg %p66
        $region14: #{spp_bottleneck_forward.1} parent=11 // pred_check_branch
          %172 = sbr.rel (%p170) target = $region16
        $region15: #{spp_bottleneck_forward.1} parent=11 // pred_region
          %s174 = ssub.s32 64, 64
          %175 = vsyncadd [#allocation8], %s174
          %s177 = sshll.u32 [#allocation7], 4
          %s178 = int_to_ptr.vmem [resolvable:$true] %s177
          %180 = dma.hbm_to_vmem [thread:$0]  %s1, 64, %s178, [#allocation8]
        $region16: #{spp_bottleneck_forward.1} parent=11 // pred_fallthru
          _
        // Predicated region
        $region17: #{spp_bottleneck_forward.1} parent=11 // pred_check
          %p181 = pneg %p87
        $region18: #{spp_bottleneck_forward.1} parent=11 // pred_check_branch
          %183 = sbr.rel (%p181) target = $region20
        $region19: #{spp_bottleneck_forward.1} parent=11 // pred_region
          %s185 = ssub.s32 16, 16
          %186 = vsyncadd [#allocation8], %s185
          %s188 = sshll.u32 [#allocation9], 4
          %s189 = int_to_ptr.vmem [resolvable:$true] %s188
          %191 = dma.hbm_to_vmem [thread:$0]  %s2, 16, %s189, [#allocation8]
        $region20: #{spp_bottleneck_forward.1} parent=11 // pred_fallthru
          _
        // Predicated region
        $region21: #{spp_bottleneck_forward.1} parent=11 // pred_check
          %p192 = pneg %p108
        $region22: #{spp_bottleneck_forward.1} parent=11 // pred_check_branch
          %194 = sbr.rel (%p192) target = $region24
        $region23: #{spp_bottleneck_forward.1} parent=11 // pred_region
          %s196 = ssub.s32 128, 128
          %197 = vsyncadd [#allocation11], %s196
          %s198 = sshll.u32 [#allocation10], 4
          %s199 = int_to_ptr.vmem [resolvable:$true] %s198
          %204 = dma.hbm_to_vmem [thread:$0]  %s3, 128, %s199, [#allocation11], 32, 32, 2
        $region24: #{spp_bottleneck_forward.1} parent=11 // pred_fallthru
          _
        // Predicated region
        $region25: #{spp_bottleneck_forward.1} parent=11 // pred_check
          %p205 = pneg %p129
        $region26: #{spp_bottleneck_forward.1} parent=11 // pred_check_branch
          %207 = sbr.rel (%p205) target = $region28
        $region27: #{spp_bottleneck_forward.1} parent=11 // pred_region
          %s209 = ssub.s32 16, 16
          %210 = vsyncadd [#allocation11], %s209
          %s212 = sshll.u32 [#allocation12], 4
          %s213 = int_to_ptr.vmem [resolvable:$true] %s212
          %215 = dma.hbm_to_vmem [thread:$0]  %s4, 16, %s213, [#allocation11]
        $region28: #{spp_bottleneck_forward.1} parent=11 // pred_fallthru
          _
      $region12: #{spp_bottleneck_forward.1} parent=5 // pred_fallthru
        _
      %p216 = scmp.lt.s32.totalorder %s19, 2
      // Predicated region
      $region29: #{spp_bottleneck_forward.1} parent=5 // pred_check
        %p217 = pneg %p216
      $region30: #{spp_bottleneck_forward.1} parent=5 // pred_check_branch
        %219 = sbr.rel (%p217) target = $region32
      $region31: #{spp_bottleneck_forward.1} parent=5 // pred_region
        // Predicated region
        $region33: #{spp_bottleneck_forward.1} parent=31 // pred_check
          %p220 = pneg %p39
        $region34: #{spp_bottleneck_forward.1} parent=31 // pred_check_branch
          %222 = sbr.rel (%p220) target = $region36
        $region35: #{spp_bottleneck_forward.1} parent=31 // pred_region
          %s223 = sand.u32 %s29, 1
          %s224 = scalar_lea.sflag [#allocation5], %s223
          %s225 = sand.u32 %s29, 1
          %s226 = smul.addr %s225, 256
          %s227 = scalar_lea.vmem [#allocation4], %s226
          %s229 = ssub.s32 4096, 4096
          %230 = vsyncadd %s224, %s229
          %s231 = smul.addr %s19, 32
          %s232 = smul.addr %s231, 128
          %s233 = scalar_lea.hbm %s0, %s232
          %s234 = sshll.u32 %s227, 4
          %s235 = int_to_ptr.vmem [resolvable:$true] %s234
          %240 = dma.hbm_to_vmem [thread:$0]  %s233, 4096, %s235, %s224, 128, 128, 8
        $region36: #{spp_bottleneck_forward.1} parent=31 // pred_fallthru
          _
      $region32: #{spp_bottleneck_forward.1} parent=5 // pred_fallthru
        _
      %p241 = scmp.le.s32.totalorder 1, %s19
      %p242 = scmp.lt.s32.totalorder %s19, 3
      %p243 = pnand %p241, %p242
      %p244 = pneg %p243
      // Predicated region
      $region37: #{spp_bottleneck_forward.1} parent=5 // pred_check
        _
      $region38: #{spp_bottleneck_forward.1} parent=5 // pred_check_branch
        %246 = sbr.rel (%p243) target = $region40
      $region39: #{spp_bottleneck_forward.1} parent=5 // pred_region
        %s247 = ssub.s32 %s19, 1
        %s248 = sand.u32 %s32, 1
        %s249 = scalar_lea.sflag [#allocation5], %s248
        %s250 = sand.u32 %s32, 1
        %s251 = smul.addr %s250, 256
        %s252 = scalar_lea.vmem [#allocation4], %s251
        // Predicated region
        $region41: #{spp_bottleneck_forward.1} parent=39 // pred_check
          %p253 = pneg %p45
        $region42: #{spp_bottleneck_forward.1} parent=39 // pred_check_branch
          %255 = sbr.rel (%p253) target = $region44
        $region43: #{spp_bottleneck_forward.1} parent=39 // pred_region
          %256 = dma.done %s249, 4096
        $region44: #{spp_bottleneck_forward.1} parent=39 // pred_fallthru
          _
        // Predicated region
        $region45: #{spp_bottleneck_forward.1} parent=39 // pred_check
          %p257 = pneg %p66
        $region46: #{spp_bottleneck_forward.1} parent=39 // pred_check_branch
          %259 = sbr.rel (%p257) target = $region48
        $region47: #{spp_bottleneck_forward.1} parent=39 // pred_region
          %260 = dma.done [#allocation8], 64
        $region48: #{spp_bottleneck_forward.1} parent=39 // pred_fallthru
          _
        // Predicated region
        $region49: #{spp_bottleneck_forward.1} parent=39 // pred_check
          %p261 = pneg %p87
        $region50: #{spp_bottleneck_forward.1} parent=39 // pred_check_branch
          %263 = sbr.rel (%p261) target = $region52
        $region51: #{spp_bottleneck_forward.1} parent=39 // pred_region
          %264 = dma.done [#allocation8], 16
        $region52: #{spp_bottleneck_forward.1} parent=39 // pred_fallthru
          _
        // Predicated region
        $region53: #{spp_bottleneck_forward.1} parent=39 // pred_check
          %p265 = pneg %p108
        $region54: #{spp_bottleneck_forward.1} parent=39 // pred_check_branch
          %267 = sbr.rel (%p265) target = $region56
        $region55: #{spp_bottleneck_forward.1} parent=39 // pred_region
          %268 = dma.done [#allocation11], 128
        $region56: #{spp_bottleneck_forward.1} parent=39 // pred_fallthru
          _
        // Predicated region
        $region57: #{spp_bottleneck_forward.1} parent=39 // pred_check
          %p269 = pneg %p129
        $region58: #{spp_bottleneck_forward.1} parent=39 // pred_check_branch
          %271 = sbr.rel (%p269) target = $region60
        $region59: #{spp_bottleneck_forward.1} parent=39 // pred_region
          %272 = dma.done [#allocation11], 16
        $region60: #{spp_bottleneck_forward.1} parent=39 // pred_fallthru
          _
        %s273 = sand.u32 %s32, 1
        %s274 = scalar_lea.sflag [#allocation5], %s273
        %s275 = sand.u32 %s32, 1
        %s276 = smul.addr %s275, 256
        %s277 = scalar_lea.vmem [#allocation4], %s276
        %p278 = pneg %p45
        %p279 = pneg %p42
        %p280 = pneg %p66
        %p281 = pneg %p63
        %p282 = pneg %p87
        %p283 = pneg %p84
        %p284 = pneg %p108
        %p285 = pneg %p105
        %p286 = pneg %p129
        %p287 = pneg %p126
        %p288 = pneg %p155
        %p289 = pneg %p152
        %s290 = sand.u32 %s142, 1
        %s291 = scalar_lea.sflag [#allocation6], %s290
        %s292 = sand.u32 %s142, 1
        %s293 = smul.addr %s292, 256
        %s294 = scalar_lea.vmem [#allocation13], %s293
        %v295 = vld [vmem:[%s252] sm:$0xff]
        %v296 = vld [vmem:[%s252 + $0x8] sm:$0xff]
        %v297 = vld [vmem:[%s252 + $0x10] sm:$0xff]
        %v298 = vld [vmem:[%s252 + $0x18] sm:$0xff]
        %v299 = vld [vmem:[%s252 + $0x20] sm:$0xff]
        %v300 = vld [vmem:[%s252 + $0x28] sm:$0xff]
        %v301 = vld [vmem:[%s252 + $0x30] sm:$0xff]
        %v302 = vld [vmem:[%s252 + $0x38] sm:$0xff]
        %v303 = vld [vmem:[%s252 + $0x40] sm:$0xff]
        %v304 = vld [vmem:[%s252 + $0x48] sm:$0xff]
        %v305 = vld [vmem:[%s252 + $0x50] sm:$0xff]
        %v306 = vld [vmem:[%s252 + $0x58] sm:$0xff]
        %v307 = vld [vmem:[%s252 + $0x60] sm:$0xff]
        %v308 = vld [vmem:[%s252 + $0x68] sm:$0xff]
        %v309 = vld [vmem:[%s252 + $0x70] sm:$0xff]
        %v310 = vld [vmem:[%s252 + $0x78] sm:$0xff]
        %v311 = vld [vmem:[%s252 + $0x80] sm:$0xff]
        %v312 = vld [vmem:[%s252 + $0x88] sm:$0xff]
        %v313 = vld [vmem:[%s252 + $0x90] sm:$0xff]
        %v314 = vld [vmem:[%s252 + $0x98] sm:$0xff]
        %v315 = vld [vmem:[%s252 + $0xa0] sm:$0xff]
        %v316 = vld [vmem:[%s252 + $0xa8] sm:$0xff]
        %v317 = vld [vmem:[%s252 + $0xb0] sm:$0xff]
        %v318 = vld [vmem:[%s252 + $0xb8] sm:$0xff]
        %v319 = vld [vmem:[%s252 + $0xc0] sm:$0xff]
        %v320 = vld [vmem:[%s252 + $0xc8] sm:$0xff]
        %v321 = vld [vmem:[%s252 + $0xd0] sm:$0xff]
        %v322 = vld [vmem:[%s252 + $0xd8] sm:$0xff]
        %v323 = vld [vmem:[%s252 + $0xe0] sm:$0xff]
        %v324 = vld [vmem:[%s252 + $0xe8] sm:$0xff]
        %v325 = vld [vmem:[%s252 + $0xf0] sm:$0xff]
        %v326 = vld [vmem:[%s252 + $0xf8] sm:$0xff]
        %v327 = vld [vmem:[#allocation7] sm:$0xf]
        %v328 = vld [vmem:[#allocation9] sm:$0x1]
        %v330 = vlaneseq
        %v331 = vshrl.u32 %v330, 7
        %v332 = vsub.s32 0, %v331
        %v333 = vrot.slane %v328, %v332
        %vm335 = vcmask 31744
        %v337 = vsel %vm335, %v295, 0
        %v340 = vsel %vm335, %v296, 0
        %v343 = vsel %vm335, %v297, 0
        %v346 = vsel %vm335, %v298, 0
        %v349 = vsel %vm335, %v299, 0
        %v352 = vsel %vm335, %v300, 0
        %v355 = vsel %vm335, %v301, 0
        %v358 = vsel %vm335, %v302, 0
        %v361 = vsel %vm335, %v303, 0
        %v364 = vsel %vm335, %v304, 0
        %v367 = vsel %vm335, %v305, 0
        %v370 = vsel %vm335, %v306, 0
        %v373 = vsel %vm335, %v307, 0
        %v376 = vsel %vm335, %v308, 0
        %v379 = vsel %vm335, %v309, 0
        %v382 = vsel %vm335, %v310, 0
        %v385 = vsel %vm335, %v311, 0
        %v388 = vsel %vm335, %v312, 0
        %v391 = vsel %vm335, %v313, 0
        %v394 = vsel %vm335, %v314, 0
        %v397 = vsel %vm335, %v315, 0
        %v400 = vsel %vm335, %v316, 0
        %v403 = vsel %vm335, %v317, 0
        %v406 = vsel %vm335, %v318, 0
        %v409 = vsel %vm335, %v319, 0
        %v412 = vsel %vm335, %v320, 0
        %v415 = vsel %vm335, %v321, 0
        %v418 = vsel %vm335, %v322, 0
        %v421 = vsel %vm335, %v323, 0
        %v424 = vsel %vm335, %v324, 0
        %v427 = vsel %vm335, %v325, 0
        %v430 = vsel %vm335, %v326, 0
        %vm432 = vcmask 1043456
        %v434 = vsel %vm432, %v327, 0
        %436 = vmatprep.subr.mxu0 0.0
        %437 = vmatpush1.msra.mxu0 %v434
        %438 = vmatprep.subr.mxu0 0.0
        %439 = vmatpush1.msra.mxu0 0.0
        %440 = vmatprep.subr.mxu0 0.0
        %441 = vmatpush1.msra.mxu0 0.0
        %442 = vmatprep.subr.mxu0 0.0
        %443 = vmatpush1.msra.mxu0 0.0
        %444 = vmatprep.subr.mxu0 0.0
        %445 = vmatpush1.msra.mxu0 0.0
        %446 = vmatprep.subr.mxu0 0.0
        %447 = vmatpush1.msra.mxu0 0.0
        %448 = vmatprep.subr.mxu0 0.0
        %449 = vmatpush1.msra.mxu0 0.0
        %450 = vmatprep.subr.mxu0 0.0
        %451 = vmatpush1.msra.mxu0 0.0
        %452 = vmatprep.subr.mxu0 0.0
        %453 = vmatpush1.msra.mxu0 0.0
        %454 = vmatprep.subr.mxu0 0.0
        %455 = vmatpush1.msra.mxu0 0.0
        %456 = vmatprep.subr.mxu0 0.0
        %457 = vmatpush1.msra.mxu0 0.0
        %458 = vmatprep.subr.mxu0 0.0
        %459 = vmatpush1.msra.mxu0 0.0
        %460 = vmatprep.subr.mxu0 0.0
        %461 = vmatpush1.msra.mxu0 0.0
        %462 = vmatprep.subr.mxu0 0.0
        %463 = vmatpush1.msra.mxu0 0.0
        %464 = vmatprep.subr.mxu0 0.0
        %465 = vmatpush1.msra.mxu0 0.0
        %466 = vmatprep.subr.mxu0 0.0
        %467 = vmatpush1.msra.mxu0 0.0
        %468 = vmatprep.subr.mxu0 0.0
        %469 = vmatpush1.msra.mxu0 0.0
        %470 = vmatprep.subr.mxu0 0.0
        %471 = vmatpush1.msra.mxu0 0.0
        %472 = vmatprep.subr.mxu0 0.0
        %473 = vmatpush1.msra.mxu0 0.0
        %474 = vmatprep.subr.mxu0 0.0
        %475 = vmatpush1.msra.mxu0 0.0
        %476 = vmatprep.subr.mxu0 0.0
        %477 = vmatpush1.msra.mxu0 0.0
        %478 = vmatprep.subr.mxu0 0.0
        %479 = vmatpush1.msra.mxu0 0.0
        %480 = vmatprep.subr.mxu0 0.0
        %481 = vmatpush1.msra.mxu0 0.0
        %482 = vmatprep.subr.mxu0 0.0
        %483 = vmatpush1.msra.mxu0 0.0
        %484 = vmatprep.subr.mxu0 0.0
        %485 = vmatpush1.msra.mxu0 0.0
        %486 = vmatprep.subr.mxu0 0.0
        %487 = vmatpush1.msra.mxu0 0.0
        %488 = vmatprep.subr.mxu0 0.0
        %489 = vmatpush1.msra.mxu0 0.0
        %490 = vmatprep.subr.mxu0 0.0
        %491 = vmatpush1.msra.mxu0 0.0
        %492 = vmatprep.subr.mxu0 0.0
        %493 = vmatpush1.msra.mxu0 0.0
        %494 = vmatprep.subr.mxu0 0.0
        %495 = vmatpush1.msra.mxu0 0.0
        %496 = vmatprep.subr.mxu0 0.0
        %497 = vmatpush1.msra.mxu0 0.0
        %498 = vmatprep.subr.mxu0 0.0
        %499 = vmatpush1.msra.mxu0 0.0
        %500 = vmatprep.mubr.f32.mxu0 0.0
        %501 = vmatmul.mubr.f32.gmra.mrb[0].mxu0 %v337
        %v502 = vpop.f32.mrb[0].mxu0
        %v503 = vadd.f32 %v333, %v502
        %v504 = vpop.f32.mrb[0].mxu0
        %505 = vmatprep.mubr.f32.mxu0 0.0
        %506 = vmatmul.mubr.f32.gmra.mrb[0].mxu0 %v340
        %v507 = vpop.f32.mrb[0].mxu0
        %v508 = vadd.f32 %v333, %v507
        %v509 = vpop.f32.mrb[0].mxu0
        %510 = vmatprep.mubr.f32.mxu0 0.0
        %511 = vmatmul.mubr.f32.gmra.mrb[0].mxu0 %v343
        %v512 = vpop.f32.mrb[0].mxu0
        %v513 = vadd.f32 %v333, %v512
        %v514 = vpop.f32.mrb[0].mxu0
        %515 = vmatprep.mubr.f32.mxu0 0.0
        %516 = vmatmul.mubr.f32.gmra.mrb[0].mxu0 %v346
        %v517 = vpop.f32.mrb[0].mxu0
        %v518 = vadd.f32 %v333, %v517
        %v519 = vpop.f32.mrb[0].mxu0
        %520 = vmatprep.mubr.f32.mxu0 0.0
        %521 = vmatmul.mubr.f32.gmra.mrb[0].mxu0 %v349
        %v522 = vpop.f32.mrb[0].mxu0
        %v523 = vadd.f32 %v333, %v522
        %v524 = vpop.f32.mrb[0].mxu0
        %525 = vmatprep.mubr.f32.mxu0 0.0
        %526 = vmatmul.mubr.f32.gmra.mrb[0].mxu0 %v352
        %v527 = vpop.f32.mrb[0].mxu0
        %v528 = vadd.f32 %v333, %v527
        %v529 = vpop.f32.mrb[0].mxu0
        %530 = vmatprep.mubr.f32.mxu0 0.0
        %531 = vmatmul.mubr.f32.gmra.mrb[0].mxu0 %v355
        %v532 = vpop.f32.mrb[0].mxu0
        %v533 = vadd.f32 %v333, %v532
        %v534 = vpop.f32.mrb[0].mxu0
        %535 = vmatprep.mubr.f32.mxu0 0.0
        %536 = vmatmul.mubr.f32.gmra.mrb[0].mxu0 %v358
        %v537 = vpop.f32.mrb[0].mxu0
        %v538 = vadd.f32 %v333, %v537
        %v539 = vpop.f32.mrb[0].mxu0
        %540 = vmatprep.mubr.f32.mxu0 0.0
        %541 = vmatmul.mubr.f32.gmra.mrb[0].mxu0 %v361
        %v542 = vpop.f32.mrb[0].mxu0
        %v543 = vadd.f32 %v333, %v542
        %v544 = vpop.f32.mrb[0].mxu0
        %545 = vmatprep.mubr.f32.mxu0 0.0
        %546 = vmatmul.mubr.f32.gmra.mrb[0].mxu0 %v364
        %v547 = vpop.f32.mrb[0].mxu0
        %v548 = vadd.f32 %v333, %v547
        %v549 = vpop.f32.mrb[0].mxu0
        %550 = vmatprep.mubr.f32.mxu0 0.0
        %551 = vmatmul.mubr.f32.gmra.mrb[0].mxu0 %v367
        %v552 = vpop.f32.mrb[0].mxu0
        %v553 = vadd.f32 %v333, %v552
        %v554 = vpop.f32.mrb[0].mxu0
        %555 = vmatprep.mubr.f32.mxu0 0.0
        %556 = vmatmul.mubr.f32.gmra.mrb[0].mxu0 %v370
        %v557 = vpop.f32.mrb[0].mxu0
        %v558 = vadd.f32 %v333, %v557
        %v559 = vpop.f32.mrb[0].mxu0
        %560 = vmatprep.mubr.f32.mxu0 0.0
        %561 = vmatmul.mubr.f32.gmra.mrb[0].mxu0 %v373
        %v562 = vpop.f32.mrb[0].mxu0
        %v563 = vadd.f32 %v333, %v562
        %v564 = vpop.f32.mrb[0].mxu0
        %565 = vmatprep.mubr.f32.mxu0 0.0
        %566 = vmatmul.mubr.f32.gmra.mrb[0].mxu0 %v376
        %v567 = vpop.f32.mrb[0].mxu0
        %v568 = vadd.f32 %v333, %v567
        %v569 = vpop.f32.mrb[0].mxu0
        %570 = vmatprep.mubr.f32.mxu0 0.0
        %571 = vmatmul.mubr.f32.gmra.mrb[0].mxu0 %v379
        %v572 = vpop.f32.mrb[0].mxu0
        %v573 = vadd.f32 %v333, %v572
        %v574 = vpop.f32.mrb[0].mxu0
        %575 = vmatprep.mubr.f32.mxu0 0.0
        %576 = vmatmul.mubr.f32.gmra.mrb[0].mxu0 %v382
        %v577 = vpop.f32.mrb[0].mxu0
        %v578 = vadd.f32 %v333, %v577
        %v579 = vpop.f32.mrb[0].mxu0
        %580 = vmatprep.mubr.f32.mxu0 0.0
        %581 = vmatmul.mubr.f32.gmra.mrb[0].mxu0 %v385
        %v582 = vpop.f32.mrb[0].mxu0
        %v583 = vadd.f32 %v333, %v582
        %v584 = vpop.f32.mrb[0].mxu0
        %585 = vmatprep.mubr.f32.mxu0 0.0
        %586 = vmatmul.mubr.f32.gmra.mrb[0].mxu0 %v388
        %v587 = vpop.f32.mrb[0].mxu0
        %v588 = vadd.f32 %v333, %v587
        %v589 = vpop.f32.mrb[0].mxu0
        %590 = vmatprep.mubr.f32.mxu0 0.0
        %591 = vmatmul.mubr.f32.gmra.mrb[0].mxu0 %v391
        %v592 = vpop.f32.mrb[0].mxu0
        %v593 = vadd.f32 %v333, %v592
        %v594 = vpop.f32.mrb[0].mxu0
        %595 = vmatprep.mubr.f32.mxu0 0.0
        %596 = vmatmul.mubr.f32.gmra.mrb[0].mxu0 %v394
        %v597 = vpop.f32.mrb[0].mxu0
        %v598 = vadd.f32 %v333, %v597
        %v599 = vpop.f32.mrb[0].mxu0
        %600 = vmatprep.mubr.f32.mxu0 0.0
        %601 = vmatmul.mubr.f32.gmra.mrb[0].mxu0 %v397
        %v602 = vpop.f32.mrb[0].mxu0
        %v603 = vadd.f32 %v333, %v602
        %v604 = vpop.f32.mrb[0].mxu0
        %605 = vmatprep.mubr.f32.mxu0 0.0
        %606 = vmatmul.mubr.f32.gmra.mrb[0].mxu0 %v400
        %v607 = vpop.f32.mrb[0].mxu0
        %v608 = vadd.f32 %v333, %v607
        %v609 = vpop.f32.mrb[0].mxu0
        %610 = vmatprep.mubr.f32.mxu0 0.0
        %611 = vmatmul.mubr.f32.gmra.mrb[0].mxu0 %v403
        %v612 = vpop.f32.mrb[0].mxu0
        %v613 = vadd.f32 %v333, %v612
        %v614 = vpop.f32.mrb[0].mxu0
        %615 = vmatprep.mubr.f32.mxu0 0.0
        %616 = vmatmul.mubr.f32.gmra.mrb[0].mxu0 %v406
        %v617 = vpop.f32.mrb[0].mxu0
        %v618 = vadd.f32 %v333, %v617
        %v619 = vpop.f32.mrb[0].mxu0
        %620 = vmatprep.mubr.f32.mxu0 0.0
        %621 = vmatmul.mubr.f32.gmra.mrb[0].mxu0 %v409
        %v622 = vpop.f32.mrb[0].mxu0
        %v623 = vadd.f32 %v333, %v622
        %v624 = vpop.f32.mrb[0].mxu0
        %625 = vmatprep.mubr.f32.mxu0 0.0
        %626 = vmatmul.mubr.f32.gmra.mrb[0].mxu0 %v412
        %v627 = vpop.f32.mrb[0].mxu0
        %v628 = vadd.f32 %v333, %v627
        %v629 = vpop.f32.mrb[0].mxu0
        %630 = vmatprep.mubr.f32.mxu0 0.0
        %631 = vmatmul.mubr.f32.gmra.mrb[0].mxu0 %v415
        %v632 = vpop.f32.mrb[0].mxu0
        %v633 = vadd.f32 %v333, %v632
        %v634 = vpop.f32.mrb[0].mxu0
        %635 = vmatprep.mubr.f32.mxu0 0.0
        %636 = vmatmul.mubr.f32.gmra.mrb[0].mxu0 %v418
        %v637 = vpop.f32.mrb[0].mxu0
        %v638 = vadd.f32 %v333, %v637
        %v639 = vpop.f32.mrb[0].mxu0
        %640 = vmatprep.mubr.f32.mxu0 0.0
        %641 = vmatmul.mubr.f32.gmra.mrb[0].mxu0 %v421
        %v642 = vpop.f32.mrb[0].mxu0
        %v643 = vadd.f32 %v333, %v642
        %v644 = vpop.f32.mrb[0].mxu0
        %645 = vmatprep.mubr.f32.mxu0 0.0
        %646 = vmatmul.mubr.f32.gmra.mrb[0].mxu0 %v424
        %v647 = vpop.f32.mrb[0].mxu0
        %v648 = vadd.f32 %v333, %v647
        %v649 = vpop.f32.mrb[0].mxu0
        %650 = vmatprep.mubr.f32.mxu0 0.0
        %651 = vmatmul.mubr.f32.gmra.mrb[0].mxu0 %v427
        %v652 = vpop.f32.mrb[0].mxu0
        %v653 = vadd.f32 %v333, %v652
        %v654 = vpop.f32.mrb[0].mxu0
        %655 = vmatprep.mubr.f32.mxu0 0.0
        %656 = vmatmul.mubr.f32.gmra.mrb[0].mxu0 %v430
        %v657 = vpop.f32.mrb[0].mxu0
        %v658 = vadd.f32 %v333, %v657
        %v659 = vpop.f32.mrb[0].mxu0
        %660 = vdwg.mxu0
        %v661 = vsub.f32 0.0, %v503
        %v662 = vsub.f32 0.0, %v508
        %v663 = vsub.f32 0.0, %v513
        %v664 = vsub.f32 0.0, %v518
        %v665 = vsub.f32 0.0, %v523
        %v666 = vsub.f32 0.0, %v528
        %v667 = vsub.f32 0.0, %v533
        %v668 = vsub.f32 0.0, %v538
        %v669 = vsub.f32 0.0, %v543
        %v670 = vsub.f32 0.0, %v548
        %v671 = vsub.f32 0.0, %v553
        %v672 = vsub.f32 0.0, %v558
        %v673 = vsub.f32 0.0, %v563
        %v674 = vsub.f32 0.0, %v568
        %v675 = vsub.f32 0.0, %v573
        %v676 = vsub.f32 0.0, %v578
        %v677 = vsub.f32 0.0, %v583
        %v678 = vsub.f32 0.0, %v588
        %v679 = vsub.f32 0.0, %v593
        %v680 = vsub.f32 0.0, %v598
        %v681 = vsub.f32 0.0, %v603
        %v682 = vsub.f32 0.0, %v608
        %v683 = vsub.f32 0.0, %v613
        %v684 = vsub.f32 0.0, %v618
        %v685 = vsub.f32 0.0, %v623
        %v686 = vsub.f32 0.0, %v628
        %v687 = vsub.f32 0.0, %v633
        %v688 = vsub.f32 0.0, %v638
        %v689 = vsub.f32 0.0, %v643
        %v690 = vsub.f32 0.0, %v648
        %v691 = vsub.f32 0.0, %v653
        %v692 = vsub.f32 0.0, %v658
        %v693 = vmul.f32 %v661, 1.442695
        %v694 = vpow.pop %v693
        %v695 = vmul.f32 %v662, 1.442695
        %v696 = vpow.pop %v695
        %v697 = vmul.f32 %v663, 1.442695
        %v698 = vpow.pop %v697
        %v699 = vmul.f32 %v664, 1.442695
        %v700 = vpow.pop %v699
        %v701 = vmul.f32 %v665, 1.442695
        %v702 = vpow.pop %v701
        %v703 = vmul.f32 %v666, 1.442695
        %v704 = vpow.pop %v703
        %v705 = vmul.f32 %v667, 1.442695
        %v706 = vpow.pop %v705
        %v707 = vmul.f32 %v668, 1.442695
        %v708 = vpow.pop %v707
        %v709 = vmul.f32 %v669, 1.442695
        %v710 = vpow.pop %v709
        %v711 = vmul.f32 %v670, 1.442695
        %v712 = vpow.pop %v711
        %v713 = vmul.f32 %v671, 1.442695
        %v714 = vpow.pop %v713
        %v715 = vmul.f32 %v672, 1.442695
        %v716 = vpow.pop %v715
        %v717 = vmul.f32 %v673, 1.442695
        %v718 = vpow.pop %v717
        %v719 = vmul.f32 %v674, 1.442695
        %v720 = vpow.pop %v719
        %v721 = vmul.f32 %v675, 1.442695
        %v722 = vpow.pop %v721
        %v723 = vmul.f32 %v676, 1.442695
        %v724 = vpow.pop %v723
        %v725 = vmul.f32 %v677, 1.442695
        %v726 = vpow.pop %v725
        %v727 = vmul.f32 %v678, 1.442695
        %v728 = vpow.pop %v727
        %v729 = vmul.f32 %v679, 1.442695
        %v730 = vpow.pop %v729
        %v731 = vmul.f32 %v680, 1.442695
        %v732 = vpow.pop %v731
        %v733 = vmul.f32 %v681, 1.442695
        %v734 = vpow.pop %v733
        %v735 = vmul.f32 %v682, 1.442695
        %v736 = vpow.pop %v735
        %v737 = vmul.f32 %v683, 1.442695
        %v738 = vpow.pop %v737
        %v739 = vmul.f32 %v684, 1.442695
        %v740 = vpow.pop %v739
        %v741 = vmul.f32 %v685, 1.442695
        %v742 = vpow.pop %v741
        %v743 = vmul.f32 %v686, 1.442695
        %v744 = vpow.pop %v743
        %v745 = vmul.f32 %v687, 1.442695
        %v746 = vpow.pop %v745
        %v747 = vmul.f32 %v688, 1.442695
        %v748 = vpow.pop %v747
        %v749 = vmul.f32 %v689, 1.442695
        %v750 = vpow.pop %v749
        %v751 = vmul.f32 %v690, 1.442695
        %v752 = vpow.pop %v751
        %v753 = vmul.f32 %v691, 1.442695
        %v754 = vpow.pop %v753
        %v755 = vmul.f32 %v692, 1.442695
        %v756 = vpow.pop %v755
        %v757 = vadd.f32 %v694, 1.0
        %v758 = vadd.f32 %v696, 1.0
        %v759 = vadd.f32 %v698, 1.0
        %v760 = vadd.f32 %v700, 1.0
        %v761 = vadd.f32 %v702, 1.0
        %v762 = vadd.f32 %v704, 1.0
        %v763 = vadd.f32 %v706, 1.0
        %v764 = vadd.f32 %v708, 1.0
        %v765 = vadd.f32 %v710, 1.0
        %v766 = vadd.f32 %v712, 1.0
        %v767 = vadd.f32 %v714, 1.0
        %v768 = vadd.f32 %v716, 1.0
        %v769 = vadd.f32 %v718, 1.0
        %v770 = vadd.f32 %v720, 1.0
        %v771 = vadd.f32 %v722, 1.0
        %v772 = vadd.f32 %v724, 1.0
        %v773 = vadd.f32 %v726, 1.0
        %v774 = vadd.f32 %v728, 1.0
        %v775 = vadd.f32 %v730, 1.0
        %v776 = vadd.f32 %v732, 1.0
        %v777 = vadd.f32 %v734, 1.0
        %v778 = vadd.f32 %v736, 1.0
        %v779 = vadd.f32 %v738, 1.0
        %v780 = vadd.f32 %v740, 1.0
        %v781 = vadd.f32 %v742, 1.0
        %v782 = vadd.f32 %v744, 1.0
        %v783 = vadd.f32 %v746, 1.0
        %v784 = vadd.f32 %v748, 1.0
        %v785 = vadd.f32 %v750, 1.0
        %v786 = vadd.f32 %v752, 1.0
        %v787 = vadd.f32 %v754, 1.0
        %v788 = vadd.f32 %v756, 1.0
        %v789 = vrcp.pop %v757
        %v790 = vrcp.pop %v758
        %v791 = vrcp.pop %v759
        %v792 = vrcp.pop %v760
        %v793 = vrcp.pop %v761
        %v794 = vrcp.pop %v762
        %v795 = vrcp.pop %v763
        %v796 = vrcp.pop %v764
        %v797 = vrcp.pop %v765
        %v798 = vrcp.pop %v766
        %v799 = vrcp.pop %v767
        %v800 = vrcp.pop %v768
        %v801 = vrcp.pop %v769
        %v802 = vrcp.pop %v770
        %v803 = vrcp.pop %v771
        %v804 = vrcp.pop %v772
        %v805 = vrcp.pop %v773
        %v806 = vrcp.pop %v774
        %v807 = vrcp.pop %v775
        %v808 = vrcp.pop %v776
        %v809 = vrcp.pop %v777
        %v810 = vrcp.pop %v778
        %v811 = vrcp.pop %v779
        %v812 = vrcp.pop %v780
        %v813 = vrcp.pop %v781
        %v814 = vrcp.pop %v782
        %v815 = vrcp.pop %v783
        %v816 = vrcp.pop %v784
        %v817 = vrcp.pop %v785
        %v818 = vrcp.pop %v786
        %v819 = vrcp.pop %v787
        %v820 = vrcp.pop %v788
        %v821 = vmul.f32 %v503, %v789
        %v822 = vmul.f32 %v508, %v790
        %v823 = vmul.f32 %v513, %v791
        %v824 = vmul.f32 %v518, %v792
        %v825 = vmul.f32 %v523, %v793
        %v826 = vmul.f32 %v528, %v794
        %v827 = vmul.f32 %v533, %v795
        %v828 = vmul.f32 %v538, %v796
        %v829 = vmul.f32 %v543, %v797
        %v830 = vmul.f32 %v548, %v798
        %v831 = vmul.f32 %v553, %v799
        %v832 = vmul.f32 %v558, %v800
        %v833 = vmul.f32 %v563, %v801
        %v834 = vmul.f32 %v568, %v802
        %v835 = vmul.f32 %v573, %v803
        %v836 = vmul.f32 %v578, %v804
        %v837 = vmul.f32 %v583, %v805
        %v838 = vmul.f32 %v588, %v806
        %v839 = vmul.f32 %v593, %v807
        %v840 = vmul.f32 %v598, %v808
        %v841 = vmul.f32 %v603, %v809
        %v842 = vmul.f32 %v608, %v810
        %v843 = vmul.f32 %v613, %v811
        %v844 = vmul.f32 %v618, %v812
        %v845 = vmul.f32 %v623, %v813
        %v846 = vmul.f32 %v628, %v814
        %v847 = vmul.f32 %v633, %v815
        %v848 = vmul.f32 %v638, %v816
        %v849 = vmul.f32 %v643, %v817
        %v850 = vmul.f32 %v648, %v818
        %v851 = vmul.f32 %v653, %v819
        %v852 = vmul.f32 %v658, %v820
        %v853 = vld [vmem:[#allocation10] sm:$0x3]
        %vm854 = vcmask 15360
        %855 = vst.msk [vmem:[#allocation2] sm:$0xff] %vm854, -inf
        %856 = vst.msk [vmem:[#allocation2 + $0x8] sm:$0xff] %vm854, -inf
        %857 = vst.msk [vmem:[#allocation2 + $0x10] sm:$0xff] %vm854, -inf
        %858 = vst.msk [vmem:[#allocation2 + $0x18] sm:$0xff] %vm854, -inf
        %s859 = scalar_lea.vmem [#allocation2], 288
        %860 = vst.msk [vmem:[%s859] sm:$0xff] %vm854, -inf
        %861 = vst.msk [vmem:[%s859 + $0x8] sm:$0xff] %vm854, -inf
        %862 = vst.msk [vmem:[%s859 + $0x10] sm:$0xff] %vm854, -inf
        %863 = vst.msk [vmem:[%s859 + $0x18] sm:$0xff] %vm854, -inf
        %vm864 = vcmask 9216
        %865 = vst.msk [vmem:[#allocation3] sm:$0x3] %vm864, -inf
        %866 = vst.msk [vmem:[#allocation3 + $0x18] sm:$0x3] %vm864, -inf
        %867 = vst.msk [vmem:[#allocation3 + $0x30] sm:$0x3] %vm864, -inf
        %868 = vst.msk [vmem:[#allocation3 + $0x48] sm:$0x3] %vm864, -inf
        %869 = vst.msk [vmem:[#allocation3 + $0x60] sm:$0x3] %vm864, -inf
        %870 = vst.msk [vmem:[#allocation3 + $0x78] sm:$0x3] %vm864, -inf
        %871 = vst.msk [vmem:[#allocation3 + $0x90] sm:$0x3] %vm864, -inf
        %872 = vst.msk [vmem:[#allocation3 + $0xa8] sm:$0x3] %vm864, -inf
        %873 = vst.msk [vmem:[#allocation3 + $0xc0] sm:$0x3] %vm864, -inf
        %874 = vst.msk [vmem:[#allocation3 + $0xd8] sm:$0x3] %vm864, -inf
        %875 = vst.msk [vmem:[#allocation3 + $0xf0] sm:$0x3] %vm864, -inf
        %876 = vst.msk [vmem:[#allocation3 + $0x108] sm:$0x3] %vm864, -inf
        %877 = vst.msk [vmem:[#allocation3 + $0x120] sm:$0x3] %vm864, -inf
        %878 = vst.msk [vmem:[#allocation3 + $0x138] sm:$0x3] %vm864, -inf
        %879 = vst.msk [vmem:[#allocation3 + $0x150] sm:$0x3] %vm864, -inf
        %880 = vst.msk [vmem:[#allocation3 + $0x168] sm:$0x3] %vm864, -inf
        %881 = vst.msk [vmem:[#allocation3 + $0x12] sm:$0x3] %vm864, -inf
        %882 = vst.msk [vmem:[#allocation3 + $0x2a] sm:$0x3] %vm864, -inf
        %883 = vst.msk [vmem:[#allocation3 + $0x42] sm:$0x3] %vm864, -inf
        %884 = vst.msk [vmem:[#allocation3 + $0x5a] sm:$0x3] %vm864, -inf
        %885 = vst.msk [vmem:[#allocation3 + $0x72] sm:$0x3] %vm864, -inf
        %886 = vst.msk [vmem:[#allocation3 + $0x8a] sm:$0x3] %vm864, -inf
        %887 = vst.msk [vmem:[#allocation3 + $0xa2] sm:$0x3] %vm864, -inf
        %888 = vst.msk [vmem:[#allocation3 + $0xba] sm:$0x3] %vm864, -inf
        %889 = vst.msk [vmem:[#allocation3 + $0xd2] sm:$0x3] %vm864, -inf
        %890 = vst.msk [vmem:[#allocation3 + $0xea] sm:$0x3] %vm864, -inf
        %891 = vst.msk [vmem:[#allocation3 + $0x102] sm:$0x3] %vm864, -inf
        %892 = vst.msk [vmem:[#allocation3 + $0x11a] sm:$0x3] %vm864, -inf
        %893 = vst.msk [vmem:[#allocation3 + $0x132] sm:$0x3] %vm864, -inf
        %894 = vst.msk [vmem:[#allocation3 + $0x14a] sm:$0x3] %vm864, -inf
        %895 = vst.msk [vmem:[#allocation3 + $0x162] sm:$0x3] %vm864, -inf
        %896 = vst.msk [vmem:[#allocation3 + $0x17a] sm:$0x3] %vm864, -inf
        %s897 = scalar_lea.vmem [#allocation2], 32
        %898 = vst.msk [vmem:[%s897] sm:$0xff] %vm854, %v821
        %899 = vst.msk [vmem:[%s897 + $0x8] sm:$0xff] %vm854, %v822
        %900 = vst.msk [vmem:[%s897 + $0x10] sm:$0xff] %vm854, %v823
        %901 = vst.msk [vmem:[%s897 + $0x18] sm:$0xff] %vm854, %v824
        %902 = vst.msk [vmem:[%s897 + $0x20] sm:$0xff] %vm854, %v825
        %903 = vst.msk [vmem:[%s897 + $0x28] sm:$0xff] %vm854, %v826
        %904 = vst.msk [vmem:[%s897 + $0x30] sm:$0xff] %vm854, %v827
        %905 = vst.msk [vmem:[%s897 + $0x38] sm:$0xff] %vm854, %v828
        %906 = vst.msk [vmem:[%s897 + $0x40] sm:$0xff] %vm854, %v829
        %907 = vst.msk [vmem:[%s897 + $0x48] sm:$0xff] %vm854, %v830
        %908 = vst.msk [vmem:[%s897 + $0x50] sm:$0xff] %vm854, %v831
        %909 = vst.msk [vmem:[%s897 + $0x58] sm:$0xff] %vm854, %v832
        %910 = vst.msk [vmem:[%s897 + $0x60] sm:$0xff] %vm854, %v833
        %911 = vst.msk [vmem:[%s897 + $0x68] sm:$0xff] %vm854, %v834
        %912 = vst.msk [vmem:[%s897 + $0x70] sm:$0xff] %vm854, %v835
        %913 = vst.msk [vmem:[%s897 + $0x78] sm:$0xff] %vm854, %v836
        %914 = vst.msk [vmem:[%s897 + $0x80] sm:$0xff] %vm854, %v837
        %915 = vst.msk [vmem:[%s897 + $0x88] sm:$0xff] %vm854, %v838
        %916 = vst.msk [vmem:[%s897 + $0x90] sm:$0xff] %vm854, %v839
        %917 = vst.msk [vmem:[%s897 + $0x98] sm:$0xff] %vm854, %v840
        %918 = vst.msk [vmem:[%s897 + $0xa0] sm:$0xff] %vm854, %v841
        %919 = vst.msk [vmem:[%s897 + $0xa8] sm:$0xff] %vm854, %v842
        %920 = vst.msk [vmem:[%s897 + $0xb0] sm:$0xff] %vm854, %v843
        %921 = vst.msk [vmem:[%s897 + $0xb8] sm:$0xff] %vm854, %v844
        %922 = vst.msk [vmem:[%s897 + $0xc0] sm:$0xff] %vm854, %v845
        %923 = vst.msk [vmem:[%s897 + $0xc8] sm:$0xff] %vm854, %v846
        %924 = vst.msk [vmem:[%s897 + $0xd0] sm:$0xff] %vm854, %v847
        %925 = vst.msk [vmem:[%s897 + $0xd8] sm:$0xff] %vm854, %v848
        %926 = vst.msk [vmem:[%s897 + $0xe0] sm:$0xff] %vm854, %v849
        %927 = vst.msk [vmem:[%s897 + $0xe8] sm:$0xff] %vm854, %v850
        %928 = vst.msk [vmem:[%s897 + $0xf0] sm:$0xff] %vm854, %v851
        %929 = vst.msk [vmem:[%s897 + $0xf8] sm:$0xff] %vm854, %v852
        %v930 = vld [vmem:[#allocation2] sm:$0xff]
        %v931 = vld [vmem:[#allocation2 + $0x8] sm:$0xff]
        %v932 = vld [vmem:[#allocation2 + $0x10] sm:$0xff]
        %v933 = vld [vmem:[#allocation2 + $0x18] sm:$0xff]
        %v934 = vld [vmem:[#allocation2 + $0x20] sm:$0xff]
        %v935 = vld [vmem:[#allocation2 + $0x28] sm:$0xff]
        %v936 = vld [vmem:[#allocation2 + $0x30] sm:$0xff]
        %v937 = vld [vmem:[#allocation2 + $0x38] sm:$0xff]
        %v938 = vld [vmem:[#allocation2 + $0x40] sm:$0xff]
        %v939 = vld [vmem:[#allocation2 + $0x48] sm:$0xff]
        %v940 = vld [vmem:[#allocation2 + $0x50] sm:$0xff]
        %v941 = vld [vmem:[#allocation2 + $0x58] sm:$0xff]
        %v942 = vld [vmem:[#allocation2 + $0x60] sm:$0xff]
        %v943 = vld [vmem:[#allocation2 + $0x68] sm:$0xff]
        %v944 = vld [vmem:[#allocation2 + $0x70] sm:$0xff]
        %v945 = vld [vmem:[#allocation2 + $0x78] sm:$0xff]
        %v946 = vld [vmem:[#allocation2 + $0x80] sm:$0xff]
        %v947 = vld [vmem:[#allocation2 + $0x88] sm:$0xff]
        %v948 = vld [vmem:[#allocation2 + $0x90] sm:$0xff]
        %v949 = vld [vmem:[#allocation2 + $0x98] sm:$0xff]
        %v950 = vld [vmem:[#allocation2 + $0xa0] sm:$0xff]
        %v951 = vld [vmem:[#allocation2 + $0xa8] sm:$0xff]
        %v952 = vld [vmem:[#allocation2 + $0xb0] sm:$0xff]
        %v953 = vld [vmem:[#allocation2 + $0xb8] sm:$0xff]
        %v954 = vld [vmem:[#allocation2 + $0xc0] sm:$0xff]
        %v955 = vld [vmem:[#allocation2 + $0xc8] sm:$0xff]
        %v956 = vld [vmem:[#allocation2 + $0xd0] sm:$0xff]
        %v957 = vld [vmem:[#allocation2 + $0xd8] sm:$0xff]
        %v958 = vld [vmem:[#allocation2 + $0xe0] sm:$0xff]
        %v959 = vld [vmem:[#allocation2 + $0xe8] sm:$0xff]
        %v960 = vld [vmem:[#allocation2 + $0xf0] sm:$0xff]
        %v961 = vld [vmem:[#allocation2 + $0xf8] sm:$0xff]
        %s962 = scalar_lea.vmem [#allocation2], 16
        %v963 = vld [vmem:[%s962] sm:$0xff]
        %v964 = vld [vmem:[%s962 + $0x8] sm:$0xff]
        %v965 = vld [vmem:[%s962 + $0x10] sm:$0xff]
        %v966 = vld [vmem:[%s962 + $0x18] sm:$0xff]
        %v967 = vld [vmem:[%s962 + $0x20] sm:$0xff]
        %v968 = vld [vmem:[%s962 + $0x28] sm:$0xff]
        %v969 = vld [vmem:[%s962 + $0x30] sm:$0xff]
        %v970 = vld [vmem:[%s962 + $0x38] sm:$0xff]
        %v971 = vld [vmem:[%s962 + $0x40] sm:$0xff]
        %v972 = vld [vmem:[%s962 + $0x48] sm:$0xff]
        %v973 = vld [vmem:[%s962 + $0x50] sm:$0xff]
        %v974 = vld [vmem:[%s962 + $0x58] sm:$0xff]
        %v975 = vld [vmem:[%s962 + $0x60] sm:$0xff]
        %v976 = vld [vmem:[%s962 + $0x68] sm:$0xff]
        %v977 = vld [vmem:[%s962 + $0x70] sm:$0xff]
        %v978 = vld [vmem:[%s962 + $0x78] sm:$0xff]
        %v979 = vld [vmem:[%s962 + $0x80] sm:$0xff]
        %v980 = vld [vmem:[%s962 + $0x88] sm:$0xff]
        %v981 = vld [vmem:[%s962 + $0x90] sm:$0xff]
        %v982 = vld [vmem:[%s962 + $0x98] sm:$0xff]
        %v983 = vld [vmem:[%s962 + $0xa0] sm:$0xff]
        %v984 = vld [vmem:[%s962 + $0xa8] sm:$0xff]
        %v985 = vld [vmem:[%s962 + $0xb0] sm:$0xff]
        %v986 = vld [vmem:[%s962 + $0xb8] sm:$0xff]
        %v987 = vld [vmem:[%s962 + $0xc0] sm:$0xff]
        %v988 = vld [vmem:[%s962 + $0xc8] sm:$0xff]
        %v989 = vld [vmem:[%s962 + $0xd0] sm:$0xff]
        %v990 = vld [vmem:[%s962 + $0xd8] sm:$0xff]
        %v991 = vld [vmem:[%s962 + $0xe0] sm:$0xff]
        %v992 = vld [vmem:[%s962 + $0xe8] sm:$0xff]
        %v993 = vld [vmem:[%s962 + $0xf0] sm:$0xff]
        %v994 = vld [vmem:[%s962 + $0xf8] sm:$0xff]
        %v995 = vmax.f32 %v930, %v963
        %v996 = vmax.f32 %v931, %v964
        %v997 = vmax.f32 %v932, %v965
        %v998 = vmax.f32 %v933, %v966
        %v999 = vmax.f32 %v934, %v967
        %v1000 = vmax.f32 %v935, %v968
        %v1001 = vmax.f32 %v936, %v969
        %v1002 = vmax.f32 %v937, %v970
        %v1003 = vmax.f32 %v938, %v971
        %v1004 = vmax.f32 %v939, %v972
        %v1005 = vmax.f32 %v940, %v973
        %v1006 = vmax.f32 %v941, %v974
        %v1007 = vmax.f32 %v942, %v975
        %v1008 = vmax.f32 %v943, %v976
        %v1009 = vmax.f32 %v944, %v977
        %v1010 = vmax.f32 %v945, %v978
        %v1011 = vmax.f32 %v946, %v979
        %v1012 = vmax.f32 %v947, %v980
        %v1013 = vmax.f32 %v948, %v981
        %v1014 = vmax.f32 %v949, %v982
        %v1015 = vmax.f32 %v950, %v983
        %v1016 = vmax.f32 %v951, %v984
        %v1017 = vmax.f32 %v952, %v985
        %v1018 = vmax.f32 %v953, %v986
        %v1019 = vmax.f32 %v954, %v987
        %v1020 = vmax.f32 %v955, %v988
        %v1021 = vmax.f32 %v956, %v989
        %v1022 = vmax.f32 %v957, %v990
        %v1023 = vmax.f32 %v958, %v991
        %v1024 = vmax.f32 %v959, %v992
        %v1025 = vmax.f32 %v960, %v993
        %v1026 = vmax.f32 %v961, %v994
        %v1027 = vld [vmem:[%s897] sm:$0xff]
        %v1028 = vld [vmem:[%s897 + $0x8] sm:$0xff]
        %v1029 = vld [vmem:[%s897 + $0x10] sm:$0xff]
        %v1030 = vld [vmem:[%s897 + $0x18] sm:$0xff]
        %v1031 = vld [vmem:[%s897 + $0x20] sm:$0xff]
        %v1032 = vld [vmem:[%s897 + $0x28] sm:$0xff]
        %v1033 = vld [vmem:[%s897 + $0x30] sm:$0xff]
        %v1034 = vld [vmem:[%s897 + $0x38] sm:$0xff]
        %v1035 = vld [vmem:[%s897 + $0x40] sm:$0xff]
        %v1036 = vld [vmem:[%s897 + $0x48] sm:$0xff]
        %v1037 = vld [vmem:[%s897 + $0x50] sm:$0xff]
        %v1038 = vld [vmem:[%s897 + $0x58] sm:$0xff]
        %v1039 = vld [vmem:[%s897 + $0x60] sm:$0xff]
        %v1040 = vld [vmem:[%s897 + $0x68] sm:$0xff]
        %v1041 = vld [vmem:[%s897 + $0x70] sm:$0xff]
        %v1042 = vld [vmem:[%s897 + $0x78] sm:$0xff]
        %v1043 = vld [vmem:[%s897 + $0x80] sm:$0xff]
        %v1044 = vld [vmem:[%s897 + $0x88] sm:$0xff]
        %v1045 = vld [vmem:[%s897 + $0x90] sm:$0xff]
        %v1046 = vld [vmem:[%s897 + $0x98] sm:$0xff]
        %v1047 = vld [vmem:[%s897 + $0xa0] sm:$0xff]
        %v1048 = vld [vmem:[%s897 + $0xa8] sm:$0xff]
        %v1049 = vld [vmem:[%s897 + $0xb0] sm:$0xff]
        %v1050 = vld [vmem:[%s897 + $0xb8] sm:$0xff]
        %v1051 = vld [vmem:[%s897 + $0xc0] sm:$0xff]
        %v1052 = vld [vmem:[%s897 + $0xc8] sm:$0xff]
        %v1053 = vld [vmem:[%s897 + $0xd0] sm:$0xff]
        %v1054 = vld [vmem:[%s897 + $0xd8] sm:$0xff]
        %v1055 = vld [vmem:[%s897 + $0xe0] sm:$0xff]
        %v1056 = vld [vmem:[%s897 + $0xe8] sm:$0xff]
        %v1057 = vld [vmem:[%s897 + $0xf0] sm:$0xff]
        %v1058 = vld [vmem:[%s897 + $0xf8] sm:$0xff]
        %v1059 = vmax.f32 %v995, %v1027
        %v1060 = vmax.f32 %v996, %v1028
        %v1061 = vmax.f32 %v997, %v1029
        %v1062 = vmax.f32 %v998, %v1030
        %v1063 = vmax.f32 %v999, %v1031
        %v1064 = vmax.f32 %v1000, %v1032
        %v1065 = vmax.f32 %v1001, %v1033
        %v1066 = vmax.f32 %v1002, %v1034
        %v1067 = vmax.f32 %v1003, %v1035
        %v1068 = vmax.f32 %v1004, %v1036
        %v1069 = vmax.f32 %v1005, %v1037
        %v1070 = vmax.f32 %v1006, %v1038
        %v1071 = vmax.f32 %v1007, %v1039
        %v1072 = vmax.f32 %v1008, %v1040
        %v1073 = vmax.f32 %v1009, %v1041
        %v1074 = vmax.f32 %v1010, %v1042
        %v1075 = vmax.f32 %v1011, %v1043
        %v1076 = vmax.f32 %v1012, %v1044
        %v1077 = vmax.f32 %v1013, %v1045
        %v1078 = vmax.f32 %v1014, %v1046
        %v1079 = vmax.f32 %v1015, %v1047
        %v1080 = vmax.f32 %v1016, %v1048
        %v1081 = vmax.f32 %v1017, %v1049
        %v1082 = vmax.f32 %v1018, %v1050
        %v1083 = vmax.f32 %v1019, %v1051
        %v1084 = vmax.f32 %v1020, %v1052
        %v1085 = vmax.f32 %v1021, %v1053
        %v1086 = vmax.f32 %v1022, %v1054
        %v1087 = vmax.f32 %v1023, %v1055
        %v1088 = vmax.f32 %v1024, %v1056
        %v1089 = vmax.f32 %v1025, %v1057
        %v1090 = vmax.f32 %v1026, %v1058
        %s1091 = scalar_lea.vmem [#allocation2], 48
        %v1092 = vld [vmem:[%s1091] sm:$0xff]
        %v1093 = vld [vmem:[%s1091 + $0x8] sm:$0xff]
        %v1094 = vld [vmem:[%s1091 + $0x10] sm:$0xff]
        %v1095 = vld [vmem:[%s1091 + $0x18] sm:$0xff]
        %v1096 = vld [vmem:[%s1091 + $0x20] sm:$0xff]
        %v1097 = vld [vmem:[%s1091 + $0x28] sm:$0xff]
        %v1098 = vld [vmem:[%s1091 + $0x30] sm:$0xff]
        %v1099 = vld [vmem:[%s1091 + $0x38] sm:$0xff]
        %v1100 = vld [vmem:[%s1091 + $0x40] sm:$0xff]
        %v1101 = vld [vmem:[%s1091 + $0x48] sm:$0xff]
        %v1102 = vld [vmem:[%s1091 + $0x50] sm:$0xff]
        %v1103 = vld [vmem:[%s1091 + $0x58] sm:$0xff]
        %v1104 = vld [vmem:[%s1091 + $0x60] sm:$0xff]
        %v1105 = vld [vmem:[%s1091 + $0x68] sm:$0xff]
        %v1106 = vld [vmem:[%s1091 + $0x70] sm:$0xff]
        %v1107 = vld [vmem:[%s1091 + $0x78] sm:$0xff]
        %v1108 = vld [vmem:[%s1091 + $0x80] sm:$0xff]
        %v1109 = vld [vmem:[%s1091 + $0x88] sm:$0xff]
        %v1110 = vld [vmem:[%s1091 + $0x90] sm:$0xff]
        %v1111 = vld [vmem:[%s1091 + $0x98] sm:$0xff]
        %v1112 = vld [vmem:[%s1091 + $0xa0] sm:$0xff]
        %v1113 = vld [vmem:[%s1091 + $0xa8] sm:$0xff]
        %v1114 = vld [vmem:[%s1091 + $0xb0] sm:$0xff]
        %v1115 = vld [vmem:[%s1091 + $0xb8] sm:$0xff]
        %v1116 = vld [vmem:[%s1091 + $0xc0] sm:$0xff]
        %v1117 = vld [vmem:[%s1091 + $0xc8] sm:$0xff]
        %v1118 = vld [vmem:[%s1091 + $0xd0] sm:$0xff]
        %v1119 = vld [vmem:[%s1091 + $0xd8] sm:$0xff]
        %v1120 = vld [vmem:[%s1091 + $0xe0] sm:$0xff]
        %v1121 = vld [vmem:[%s1091 + $0xe8] sm:$0xff]
        %v1122 = vld [vmem:[%s1091 + $0xf0] sm:$0xff]
        %v1123 = vld [vmem:[%s1091 + $0xf8] sm:$0xff]
        %v1124 = vmax.f32 %v1059, %v1092
        %v1125 = vmax.f32 %v1060, %v1093
        %v1126 = vmax.f32 %v1061, %v1094
        %v1127 = vmax.f32 %v1062, %v1095
        %v1128 = vmax.f32 %v1063, %v1096
        %v1129 = vmax.f32 %v1064, %v1097
        %v1130 = vmax.f32 %v1065, %v1098
        %v1131 = vmax.f32 %v1066, %v1099
        %v1132 = vmax.f32 %v1067, %v1100
        %v1133 = vmax.f32 %v1068, %v1101
        %v1134 = vmax.f32 %v1069, %v1102
        %v1135 = vmax.f32 %v1070, %v1103
        %v1136 = vmax.f32 %v1071, %v1104
        %v1137 = vmax.f32 %v1072, %v1105
        %v1138 = vmax.f32 %v1073, %v1106
        %v1139 = vmax.f32 %v1074, %v1107
        %v1140 = vmax.f32 %v1075, %v1108
        %v1141 = vmax.f32 %v1076, %v1109
        %v1142 = vmax.f32 %v1077, %v1110
        %v1143 = vmax.f32 %v1078, %v1111
        %v1144 = vmax.f32 %v1079, %v1112
        %v1145 = vmax.f32 %v1080, %v1113
        %v1146 = vmax.f32 %v1081, %v1114
        %v1147 = vmax.f32 %v1082, %v1115
        %v1148 = vmax.f32 %v1083, %v1116
        %v1149 = vmax.f32 %v1084, %v1117
        %v1150 = vmax.f32 %v1085, %v1118
        %v1151 = vmax.f32 %v1086, %v1119
        %v1152 = vmax.f32 %v1087, %v1120
        %v1153 = vmax.f32 %v1088, %v1121
        %v1154 = vmax.f32 %v1089, %v1122
        %v1155 = vmax.f32 %v1090, %v1123
        %s1156 = scalar_lea.vmem [#allocation2], 64
        %v1157 = vld [vmem:[%s1156] sm:$0xff]
        %v1158 = vld [vmem:[%s1156 + $0x8] sm:$0xff]
        %v1159 = vld [vmem:[%s1156 + $0x10] sm:$0xff]
        %v1160 = vld [vmem:[%s1156 + $0x18] sm:$0xff]
        %v1161 = vld [vmem:[%s1156 + $0x20] sm:$0xff]
        %v1162 = vld [vmem:[%s1156 + $0x28] sm:$0xff]
        %v1163 = vld [vmem:[%s1156 + $0x30] sm:$0xff]
        %v1164 = vld [vmem:[%s1156 + $0x38] sm:$0xff]
        %v1165 = vld [vmem:[%s1156 + $0x40] sm:$0xff]
        %v1166 = vld [vmem:[%s1156 + $0x48] sm:$0xff]
        %v1167 = vld [vmem:[%s1156 + $0x50] sm:$0xff]
        %v1168 = vld [vmem:[%s1156 + $0x58] sm:$0xff]
        %v1169 = vld [vmem:[%s1156 + $0x60] sm:$0xff]
        %v1170 = vld [vmem:[%s1156 + $0x68] sm:$0xff]
        %v1171 = vld [vmem:[%s1156 + $0x70] sm:$0xff]
        %v1172 = vld [vmem:[%s1156 + $0x78] sm:$0xff]
        %v1173 = vld [vmem:[%s1156 + $0x80] sm:$0xff]
        %v1174 = vld [vmem:[%s1156 + $0x88] sm:$0xff]
        %v1175 = vld [vmem:[%s1156 + $0x90] sm:$0xff]
        %v1176 = vld [vmem:[%s1156 + $0x98] sm:$0xff]
        %v1177 = vld [vmem:[%s1156 + $0xa0] sm:$0xff]
        %v1178 = vld [vmem:[%s1156 + $0xa8] sm:$0xff]
        %v1179 = vld [vmem:[%s1156 + $0xb0] sm:$0xff]
        %v1180 = vld [vmem:[%s1156 + $0xb8] sm:$0xff]
        %v1181 = vld [vmem:[%s1156 + $0xc0] sm:$0xff]
        %v1182 = vld [vmem:[%s1156 + $0xc8] sm:$0xff]
        %v1183 = vld [vmem:[%s1156 + $0xd0] sm:$0xff]
        %v1184 = vld [vmem:[%s1156 + $0xd8] sm:$0xff]
        %v1185 = vld [vmem:[%s1156 + $0xe0] sm:$0xff]
        %v1186 = vld [vmem:[%s1156 + $0xe8] sm:$0xff]
        %v1187 = vld [vmem:[%s1156 + $0xf0] sm:$0xff]
        %v1188 = vld [vmem:[%s1156 + $0xf8] sm:$0xff]
        %v1189 = vmax.f32 %v1124, %v1157
        %v1190 = vmax.f32 %v1125, %v1158
        %v1191 = vmax.f32 %v1126, %v1159
        %v1192 = vmax.f32 %v1127, %v1160
        %v1193 = vmax.f32 %v1128, %v1161
        %v1194 = vmax.f32 %v1129, %v1162
        %v1195 = vmax.f32 %v1130, %v1163
        %v1196 = vmax.f32 %v1131, %v1164
        %v1197 = vmax.f32 %v1132, %v1165
        %v1198 = vmax.f32 %v1133, %v1166
        %v1199 = vmax.f32 %v1134, %v1167
        %v1200 = vmax.f32 %v1135, %v1168
        %v1201 = vmax.f32 %v1136, %v1169
        %v1202 = vmax.f32 %v1137, %v1170
        %v1203 = vmax.f32 %v1138, %v1171
        %v1204 = vmax.f32 %v1139, %v1172
        %v1205 = vmax.f32 %v1140, %v1173
        %v1206 = vmax.f32 %v1141, %v1174
        %v1207 = vmax.f32 %v1142, %v1175
        %v1208 = vmax.f32 %v1143, %v1176
        %v1209 = vmax.f32 %v1144, %v1177
        %v1210 = vmax.f32 %v1145, %v1178
        %v1211 = vmax.f32 %v1146, %v1179
        %v1212 = vmax.f32 %v1147, %v1180
        %v1213 = vmax.f32 %v1148, %v1181
        %v1214 = vmax.f32 %v1149, %v1182
        %v1215 = vmax.f32 %v1150, %v1183
        %v1216 = vmax.f32 %v1151, %v1184
        %v1217 = vmax.f32 %v1152, %v1185
        %v1218 = vmax.f32 %v1153, %v1186
        %v1219 = vmax.f32 %v1154, %v1187
        %v1220 = vmax.f32 %v1155, %v1188
        %1221 = vst.msk [vmem:[#allocation3 + $0x2] sm:$0xff] %vm854, %v1189
        %1222 = vst.msk [vmem:[#allocation3 + $0xa] sm:$0xff] %vm854, %v1190
        %1223 = vst.msk [vmem:[#allocation3 + $0x1a] sm:$0xff] %vm854, %v1191
        %1224 = vst.msk [vmem:[#allocation3 + $0x22] sm:$0xff] %vm854, %v1192
        %1225 = vst.msk [vmem:[#allocation3 + $0x32] sm:$0xff] %vm854, %v1193
        %1226 = vst.msk [vmem:[#allocation3 + $0x3a] sm:$0xff] %vm854, %v1194
        %1227 = vst.msk [vmem:[#allocation3 + $0x4a] sm:$0xff] %vm854, %v1195
        %1228 = vst.msk [vmem:[#allocation3 + $0x52] sm:$0xff] %vm854, %v1196
        %1229 = vst.msk [vmem:[#allocation3 + $0x62] sm:$0xff] %vm854, %v1197
        %1230 = vst.msk [vmem:[#allocation3 + $0x6a] sm:$0xff] %vm854, %v1198
        %1231 = vst.msk [vmem:[#allocation3 + $0x7a] sm:$0xff] %vm854, %v1199
        %1232 = vst.msk [vmem:[#allocation3 + $0x82] sm:$0xff] %vm854, %v1200
        %1233 = vst.msk [vmem:[#allocation3 + $0x92] sm:$0xff] %vm854, %v1201
        %1234 = vst.msk [vmem:[#allocation3 + $0x9a] sm:$0xff] %vm854, %v1202
        %1235 = vst.msk [vmem:[#allocation3 + $0xaa] sm:$0xff] %vm854, %v1203
        %1236 = vst.msk [vmem:[#allocation3 + $0xb2] sm:$0xff] %vm854, %v1204
        %1237 = vst.msk [vmem:[#allocation3 + $0xc2] sm:$0xff] %vm854, %v1205
        %1238 = vst.msk [vmem:[#allocation3 + $0xca] sm:$0xff] %vm854, %v1206
        %1239 = vst.msk [vmem:[#allocation3 + $0xda] sm:$0xff] %vm854, %v1207
        %1240 = vst.msk [vmem:[#allocation3 + $0xe2] sm:$0xff] %vm854, %v1208
        %1241 = vst.msk [vmem:[#allocation3 + $0xf2] sm:$0xff] %vm854, %v1209
        %1242 = vst.msk [vmem:[#allocation3 + $0xfa] sm:$0xff] %vm854, %v1210
        %1243 = vst.msk [vmem:[#allocation3 + $0x10a] sm:$0xff] %vm854, %v1211
        %1244 = vst.msk [vmem:[#allocation3 + $0x112] sm:$0xff] %vm854, %v1212
        %1245 = vst.msk [vmem:[#allocation3 + $0x122] sm:$0xff] %vm854, %v1213
        %1246 = vst.msk [vmem:[#allocation3 + $0x12a] sm:$0xff] %vm854, %v1214
        %1247 = vst.msk [vmem:[#allocation3 + $0x13a] sm:$0xff] %vm854, %v1215
        %1248 = vst.msk [vmem:[#allocation3 + $0x142] sm:$0xff] %vm854, %v1216
        %1249 = vst.msk [vmem:[#allocation3 + $0x152] sm:$0xff] %vm854, %v1217
        %1250 = vst.msk [vmem:[#allocation3 + $0x15a] sm:$0xff] %vm854, %v1218
        %1251 = vst.msk [vmem:[#allocation3 + $0x16a] sm:$0xff] %vm854, %v1219
        %1252 = vst.msk [vmem:[#allocation3 + $0x172] sm:$0xff] %vm854, %v1220
        %v1253 = vld [vmem:[#allocation3] sm:$0xff]
        %v1254 = vld [vmem:[#allocation3 + $0x8] sm:$0xff]
        %v1255 = vld [vmem:[#allocation3 + $0x18] sm:$0xff]
        %v1256 = vld [vmem:[#allocation3 + $0x20] sm:$0xff]
        %v1257 = vld [vmem:[#allocation3 + $0x30] sm:$0xff]
        %v1258 = vld [vmem:[#allocation3 + $0x38] sm:$0xff]
        %v1259 = vld [vmem:[#allocation3 + $0x48] sm:$0xff]
        %v1260 = vld [vmem:[#allocation3 + $0x50] sm:$0xff]
        %v1261 = vld [vmem:[#allocation3 + $0x60] sm:$0xff]
        %v1262 = vld [vmem:[#allocation3 + $0x68] sm:$0xff]
        %v1263 = vld [vmem:[#allocation3 + $0x78] sm:$0xff]
        %v1264 = vld [vmem:[#allocation3 + $0x80] sm:$0xff]
        %v1265 = vld [vmem:[#allocation3 + $0x90] sm:$0xff]
        %v1266 = vld [vmem:[#allocation3 + $0x98] sm:$0xff]
        %v1267 = vld [vmem:[#allocation3 + $0xa8] sm:$0xff]
        %v1268 = vld [vmem:[#allocation3 + $0xb0] sm:$0xff]
        %v1269 = vld [vmem:[#allocation3 + $0xc0] sm:$0xff]
        %v1270 = vld [vmem:[#allocation3 + $0xc8] sm:$0xff]
        %v1271 = vld [vmem:[#allocation3 + $0xd8] sm:$0xff]
        %v1272 = vld [vmem:[#allocation3 + $0xe0] sm:$0xff]
        %v1273 = vld [vmem:[#allocation3 + $0xf0] sm:$0xff]
        %v1274 = vld [vmem:[#allocation3 + $0xf8] sm:$0xff]
        %v1275 = vld [vmem:[#allocation3 + $0x108] sm:$0xff]
        %v1276 = vld [vmem:[#allocation3 + $0x110] sm:$0xff]
        %v1277 = vld [vmem:[#allocation3 + $0x120] sm:$0xff]
        %v1278 = vld [vmem:[#allocation3 + $0x128] sm:$0xff]
        %v1279 = vld [vmem:[#allocation3 + $0x138] sm:$0xff]
        %v1280 = vld [vmem:[#allocation3 + $0x140] sm:$0xff]
        %v1281 = vld [vmem:[#allocation3 + $0x150] sm:$0xff]
        %v1282 = vld [vmem:[#allocation3 + $0x158] sm:$0xff]
        %v1283 = vld [vmem:[#allocation3 + $0x168] sm:$0xff]
        %v1284 = vld [vmem:[#allocation3 + $0x170] sm:$0xff]
        %v1285 = vld [vmem:[#allocation3 + $0x1] sm:$0xff]
        %v1286 = vld [vmem:[#allocation3 + $0x9] sm:$0xff]
        %v1287 = vld [vmem:[#allocation3 + $0x19] sm:$0xff]
        %v1288 = vld [vmem:[#allocation3 + $0x21] sm:$0xff]
        %v1289 = vld [vmem:[#allocation3 + $0x31] sm:$0xff]
        %v1290 = vld [vmem:[#allocation3 + $0x39] sm:$0xff]
        %v1291 = vld [vmem:[#allocation3 + $0x49] sm:$0xff]
        %v1292 = vld [vmem:[#allocation3 + $0x51] sm:$0xff]
        %v1293 = vld [vmem:[#allocation3 + $0x61] sm:$0xff]
        %v1294 = vld [vmem:[#allocation3 + $0x69] sm:$0xff]
        %v1295 = vld [vmem:[#allocation3 + $0x79] sm:$0xff]
        %v1296 = vld [vmem:[#allocation3 + $0x81] sm:$0xff]
        %v1297 = vld [vmem:[#allocation3 + $0x91] sm:$0xff]
        %v1298 = vld [vmem:[#allocation3 + $0x99] sm:$0xff]
        %v1299 = vld [vmem:[#allocation3 + $0xa9] sm:$0xff]
        %v1300 = vld [vmem:[#allocation3 + $0xb1] sm:$0xff]
        %v1301 = vld [vmem:[#allocation3 + $0xc1] sm:$0xff]
        %v1302 = vld [vmem:[#allocation3 + $0xc9] sm:$0xff]
        %v1303 = vld [vmem:[#allocation3 + $0xd9] sm:$0xff]
        %v1304 = vld [vmem:[#allocation3 + $0xe1] sm:$0xff]
        %v1305 = vld [vmem:[#allocation3 + $0xf1] sm:$0xff]
        %v1306 = vld [vmem:[#allocation3 + $0xf9] sm:$0xff]
        %v1307 = vld [vmem:[#allocation3 + $0x109] sm:$0xff]
        %v1308 = vld [vmem:[#allocation3 + $0x111] sm:$0xff]
        %v1309 = vld [vmem:[#allocation3 + $0x121] sm:$0xff]
        %v1310 = vld [vmem:[#allocation3 + $0x129] sm:$0xff]
        %v1311 = vld [vmem:[#allocation3 + $0x139] sm:$0xff]
        %v1312 = vld [vmem:[#allocation3 + $0x141] sm:$0xff]
        %v1313 = vld [vmem:[#allocation3 + $0x151] sm:$0xff]
        %v1314 = vld [vmem:[#allocation3 + $0x159] sm:$0xff]
        %v1315 = vld [vmem:[#allocation3 + $0x169] sm:$0xff]
        %v1316 = vld [vmem:[#allocation3 + $0x171] sm:$0xff]
        %v1317 = vmax.f32 %v1253, %v1285
        %v1318 = vmax.f32 %v1254, %v1286
        %v1319 = vmax.f32 %v1255, %v1287
        %v1320 = vmax.f32 %v1256, %v1288
        %v1321 = vmax.f32 %v1257, %v1289
        %v1322 = vmax.f32 %v1258, %v1290
        %v1323 = vmax.f32 %v1259, %v1291
        %v1324 = vmax.f32 %v1260, %v1292
        %v1325 = vmax.f32 %v1261, %v1293
        %v1326 = vmax.f32 %v1262, %v1294
        %v1327 = vmax.f32 %v1263, %v1295
        %v1328 = vmax.f32 %v1264, %v1296
        %v1329 = vmax.f32 %v1265, %v1297
        %v1330 = vmax.f32 %v1266, %v1298
        %v1331 = vmax.f32 %v1267, %v1299
        %v1332 = vmax.f32 %v1268, %v1300
        %v1333 = vmax.f32 %v1269, %v1301
        %v1334 = vmax.f32 %v1270, %v1302
        %v1335 = vmax.f32 %v1271, %v1303
        %v1336 = vmax.f32 %v1272, %v1304
        %v1337 = vmax.f32 %v1273, %v1305
        %v1338 = vmax.f32 %v1274, %v1306
        %v1339 = vmax.f32 %v1275, %v1307
        %v1340 = vmax.f32 %v1276, %v1308
        %v1341 = vmax.f32 %v1277, %v1309
        %v1342 = vmax.f32 %v1278, %v1310
        %v1343 = vmax.f32 %v1279, %v1311
        %v1344 = vmax.f32 %v1280, %v1312
        %v1345 = vmax.f32 %v1281, %v1313
        %v1346 = vmax.f32 %v1282, %v1314
        %v1347 = vmax.f32 %v1283, %v1315
        %v1348 = vmax.f32 %v1284, %v1316
        %v1349 = vld [vmem:[#allocation3 + $0x2] sm:$0xff]
        %v1350 = vld [vmem:[#allocation3 + $0xa] sm:$0xff]
        %v1351 = vld [vmem:[#allocation3 + $0x1a] sm:$0xff]
        %v1352 = vld [vmem:[#allocation3 + $0x22] sm:$0xff]
        %v1353 = vld [vmem:[#allocation3 + $0x32] sm:$0xff]
        %v1354 = vld [vmem:[#allocation3 + $0x3a] sm:$0xff]
        %v1355 = vld [vmem:[#allocation3 + $0x4a] sm:$0xff]
        %v1356 = vld [vmem:[#allocation3 + $0x52] sm:$0xff]
        %v1357 = vld [vmem:[#allocation3 + $0x62] sm:$0xff]
        %v1358 = vld [vmem:[#allocation3 + $0x6a] sm:$0xff]
        %v1359 = vld [vmem:[#allocation3 + $0x7a] sm:$0xff]
        %v1360 = vld [vmem:[#allocation3 + $0x82] sm:$0xff]
        %v1361 = vld [vmem:[#allocation3 + $0x92] sm:$0xff]
        %v1362 = vld [vmem:[#allocation3 + $0x9a] sm:$0xff]
        %v1363 = vld [vmem:[#allocation3 + $0xaa] sm:$0xff]
        %v1364 = vld [vmem:[#allocation3 + $0xb2] sm:$0xff]
        %v1365 = vld [vmem:[#allocation3 + $0xc2] sm:$0xff]
        %v1366 = vld [vmem:[#allocation3 + $0xca] sm:$0xff]
        %v1367 = vld [vmem:[#allocation3 + $0xda] sm:$0xff]
        %v1368 = vld [vmem:[#allocation3 + $0xe2] sm:$0xff]
        %v1369 = vld [vmem:[#allocation3 + $0xf2] sm:$0xff]
        %v1370 = vld [vmem:[#allocation3 + $0xfa] sm:$0xff]
        %v1371 = vld [vmem:[#allocation3 + $0x10a] sm:$0xff]
        %v1372 = vld [vmem:[#allocation3 + $0x112] sm:$0xff]
        %v1373 = vld [vmem:[#allocation3 + $0x122] sm:$0xff]
        %v1374 = vld [vmem:[#allocation3 + $0x12a] sm:$0xff]
        %v1375 = vld [vmem:[#allocation3 + $0x13a] sm:$0xff]
        %v1376 = vld [vmem:[#allocation3 + $0x142] sm:$0xff]
        %v1377 = vld [vmem:[#allocation3 + $0x152] sm:$0xff]
        %v1378 = vld [vmem:[#allocation3 + $0x15a] sm:$0xff]
        %v1379 = vld [vmem:[#allocation3 + $0x16a] sm:$0xff]
        %v1380 = vld [vmem:[#allocation3 + $0x172] sm:$0xff]
        %v1381 = vmax.f32 %v1317, %v1349
        %v1382 = vmax.f32 %v1318, %v1350
        %v1383 = vmax.f32 %v1319, %v1351
        %v1384 = vmax.f32 %v1320, %v1352
        %v1385 = vmax.f32 %v1321, %v1353
        %v1386 = vmax.f32 %v1322, %v1354
        %v1387 = vmax.f32 %v1323, %v1355
        %v1388 = vmax.f32 %v1324, %v1356
        %v1389 = vmax.f32 %v1325, %v1357
        %v1390 = vmax.f32 %v1326, %v1358
        %v1391 = vmax.f32 %v1327, %v1359
        %v1392 = vmax.f32 %v1328, %v1360
        %v1393 = vmax.f32 %v1329, %v1361
        %v1394 = vmax.f32 %v1330, %v1362
        %v1395 = vmax.f32 %v1331, %v1363
        %v1396 = vmax.f32 %v1332, %v1364
        %v1397 = vmax.f32 %v1333, %v1365
        %v1398 = vmax.f32 %v1334, %v1366
        %v1399 = vmax.f32 %v1335, %v1367
        %v1400 = vmax.f32 %v1336, %v1368
        %v1401 = vmax.f32 %v1337, %v1369
        %v1402 = vmax.f32 %v1338, %v1370
        %v1403 = vmax.f32 %v1339, %v1371
        %v1404 = vmax.f32 %v1340, %v1372
        %v1405 = vmax.f32 %v1341, %v1373
        %v1406 = vmax.f32 %v1342, %v1374
        %v1407 = vmax.f32 %v1343, %v1375
        %v1408 = vmax.f32 %v1344, %v1376
        %v1409 = vmax.f32 %v1345, %v1377
        %v1410 = vmax.f32 %v1346, %v1378
        %v1411 = vmax.f32 %v1347, %v1379
        %v1412 = vmax.f32 %v1348, %v1380
        %v1413 = vld [vmem:[#allocation3 + $0x3] sm:$0xff]
        %v1414 = vld [vmem:[#allocation3 + $0xb] sm:$0xff]
        %v1415 = vld [vmem:[#allocation3 + $0x1b] sm:$0xff]
        %v1416 = vld [vmem:[#allocation3 + $0x23] sm:$0xff]
        %v1417 = vld [vmem:[#allocation3 + $0x33] sm:$0xff]
        %v1418 = vld [vmem:[#allocation3 + $0x3b] sm:$0xff]
        %v1419 = vld [vmem:[#allocation3 + $0x4b] sm:$0xff]
        %v1420 = vld [vmem:[#allocation3 + $0x53] sm:$0xff]
        %v1421 = vld [vmem:[#allocation3 + $0x63] sm:$0xff]
        %v1422 = vld [vmem:[#allocation3 + $0x6b] sm:$0xff]
        %v1423 = vld [vmem:[#allocation3 + $0x7b] sm:$0xff]
        %v1424 = vld [vmem:[#allocation3 + $0x83] sm:$0xff]
        %v1425 = vld [vmem:[#allocation3 + $0x93] sm:$0xff]
        %v1426 = vld [vmem:[#allocation3 + $0x9b] sm:$0xff]
        %v1427 = vld [vmem:[#allocation3 + $0xab] sm:$0xff]
        %v1428 = vld [vmem:[#allocation3 + $0xb3] sm:$0xff]
        %v1429 = vld [vmem:[#allocation3 + $0xc3] sm:$0xff]
        %v1430 = vld [vmem:[#allocation3 + $0xcb] sm:$0xff]
        %v1431 = vld [vmem:[#allocation3 + $0xdb] sm:$0xff]
        %v1432 = vld [vmem:[#allocation3 + $0xe3] sm:$0xff]
        %v1433 = vld [vmem:[#allocation3 + $0xf3] sm:$0xff]
        %v1434 = vld [vmem:[#allocation3 + $0xfb] sm:$0xff]
        %v1435 = vld [vmem:[#allocation3 + $0x10b] sm:$0xff]
        %v1436 = vld [vmem:[#allocation3 + $0x113] sm:$0xff]
        %v1437 = vld [vmem:[#allocation3 + $0x123] sm:$0xff]
        %v1438 = vld [vmem:[#allocation3 + $0x12b] sm:$0xff]
        %v1439 = vld [vmem:[#allocation3 + $0x13b] sm:$0xff]
        %v1440 = vld [vmem:[#allocation3 + $0x143] sm:$0xff]
        %v1441 = vld [vmem:[#allocation3 + $0x153] sm:$0xff]
        %v1442 = vld [vmem:[#allocation3 + $0x15b] sm:$0xff]
        %v1443 = vld [vmem:[#allocation3 + $0x16b] sm:$0xff]
        %v1444 = vld [vmem:[#allocation3 + $0x173] sm:$0xff]
        %v1445 = vmax.f32 %v1381, %v1413
        %v1446 = vmax.f32 %v1382, %v1414
        %v1447 = vmax.f32 %v1383, %v1415
        %v1448 = vmax.f32 %v1384, %v1416
        %v1449 = vmax.f32 %v1385, %v1417
        %v1450 = vmax.f32 %v1386, %v1418
        %v1451 = vmax.f32 %v1387, %v1419
        %v1452 = vmax.f32 %v1388, %v1420
        %v1453 = vmax.f32 %v1389, %v1421
        %v1454 = vmax.f32 %v1390, %v1422
        %v1455 = vmax.f32 %v1391, %v1423
        %v1456 = vmax.f32 %v1392, %v1424
        %v1457 = vmax.f32 %v1393, %v1425
        %v1458 = vmax.f32 %v1394, %v1426
        %v1459 = vmax.f32 %v1395, %v1427
        %v1460 = vmax.f32 %v1396, %v1428
        %v1461 = vmax.f32 %v1397, %v1429
        %v1462 = vmax.f32 %v1398, %v1430
        %v1463 = vmax.f32 %v1399, %v1431
        %v1464 = vmax.f32 %v1400, %v1432
        %v1465 = vmax.f32 %v1401, %v1433
        %v1466 = vmax.f32 %v1402, %v1434
        %v1467 = vmax.f32 %v1403, %v1435
        %v1468 = vmax.f32 %v1404, %v1436
        %v1469 = vmax.f32 %v1405, %v1437
        %v1470 = vmax.f32 %v1406, %v1438
        %v1471 = vmax.f32 %v1407, %v1439
        %v1472 = vmax.f32 %v1408, %v1440
        %v1473 = vmax.f32 %v1409, %v1441
        %v1474 = vmax.f32 %v1410, %v1442
        %v1475 = vmax.f32 %v1411, %v1443
        %v1476 = vmax.f32 %v1412, %v1444
        %v1477 = vld [vmem:[#allocation3 + $0x4] sm:$0xff]
        %v1478 = vld [vmem:[#allocation3 + $0xc] sm:$0xff]
        %v1479 = vld [vmem:[#allocation3 + $0x1c] sm:$0xff]
        %v1480 = vld [vmem:[#allocation3 + $0x24] sm:$0xff]
        %v1481 = vld [vmem:[#allocation3 + $0x34] sm:$0xff]
        %v1482 = vld [vmem:[#allocation3 + $0x3c] sm:$0xff]
        %v1483 = vld [vmem:[#allocation3 + $0x4c] sm:$0xff]
        %v1484 = vld [vmem:[#allocation3 + $0x54] sm:$0xff]
        %v1485 = vld [vmem:[#allocation3 + $0x64] sm:$0xff]
        %v1486 = vld [vmem:[#allocation3 + $0x6c] sm:$0xff]
        %v1487 = vld [vmem:[#allocation3 + $0x7c] sm:$0xff]
        %v1488 = vld [vmem:[#allocation3 + $0x84] sm:$0xff]
        %v1489 = vld [vmem:[#allocation3 + $0x94] sm:$0xff]
        %v1490 = vld [vmem:[#allocation3 + $0x9c] sm:$0xff]
        %v1491 = vld [vmem:[#allocation3 + $0xac] sm:$0xff]
        %v1492 = vld [vmem:[#allocation3 + $0xb4] sm:$0xff]
        %v1493 = vld [vmem:[#allocation3 + $0xc4] sm:$0xff]
        %v1494 = vld [vmem:[#allocation3 + $0xcc] sm:$0xff]
        %v1495 = vld [vmem:[#allocation3 + $0xdc] sm:$0xff]
        %v1496 = vld [vmem:[#allocation3 + $0xe4] sm:$0xff]
        %v1497 = vld [vmem:[#allocation3 + $0xf4] sm:$0xff]
        %v1498 = vld [vmem:[#allocation3 + $0xfc] sm:$0xff]
        %v1499 = vld [vmem:[#allocation3 + $0x10c] sm:$0xff]
        %v1500 = vld [vmem:[#allocation3 + $0x114] sm:$0xff]
        %v1501 = vld [vmem:[#allocation3 + $0x124] sm:$0xff]
        %v1502 = vld [vmem:[#allocation3 + $0x12c] sm:$0xff]
        %v1503 = vld [vmem:[#allocation3 + $0x13c] sm:$0xff]
        %v1504 = vld [vmem:[#allocation3 + $0x144] sm:$0xff]
        %v1505 = vld [vmem:[#allocation3 + $0x154] sm:$0xff]
        %v1506 = vld [vmem:[#allocation3 + $0x15c] sm:$0xff]
        %v1507 = vld [vmem:[#allocation3 + $0x16c] sm:$0xff]
        %v1508 = vld [vmem:[#allocation3 + $0x174] sm:$0xff]
        %v1509 = vmax.f32 %v1445, %v1477
        %v1510 = vmax.f32 %v1446, %v1478
        %v1511 = vmax.f32 %v1447, %v1479
        %v1512 = vmax.f32 %v1448, %v1480
        %v1513 = vmax.f32 %v1449, %v1481
        %v1514 = vmax.f32 %v1450, %v1482
        %v1515 = vmax.f32 %v1451, %v1483
        %v1516 = vmax.f32 %v1452, %v1484
        %v1517 = vmax.f32 %v1453, %v1485
        %v1518 = vmax.f32 %v1454, %v1486
        %v1519 = vmax.f32 %v1455, %v1487
        %v1520 = vmax.f32 %v1456, %v1488
        %v1521 = vmax.f32 %v1457, %v1489
        %v1522 = vmax.f32 %v1458, %v1490
        %v1523 = vmax.f32 %v1459, %v1491
        %v1524 = vmax.f32 %v1460, %v1492
        %v1525 = vmax.f32 %v1461, %v1493
        %v1526 = vmax.f32 %v1462, %v1494
        %v1527 = vmax.f32 %v1463, %v1495
        %v1528 = vmax.f32 %v1464, %v1496
        %v1529 = vmax.f32 %v1465, %v1497
        %v1530 = vmax.f32 %v1466, %v1498
        %v1531 = vmax.f32 %v1467, %v1499
        %v1532 = vmax.f32 %v1468, %v1500
        %v1533 = vmax.f32 %v1469, %v1501
        %v1534 = vmax.f32 %v1470, %v1502
        %v1535 = vmax.f32 %v1471, %v1503
        %v1536 = vmax.f32 %v1472, %v1504
        %v1537 = vmax.f32 %v1473, %v1505
        %v1538 = vmax.f32 %v1474, %v1506
        %v1539 = vmax.f32 %v1475, %v1507
        %v1540 = vmax.f32 %v1476, %v1508
        %s1541 = scalar_lea.vmem [#allocation10], 2
        %v1542 = vld [vmem:[%s1541] sm:$0x3]
        %v1544 = vsel %vm854, %v1509, 0
        %v1547 = vsel %vm854, %v1510, 0
        %v1550 = vsel %vm854, %v1511, 0
        %v1553 = vsel %vm854, %v1512, 0
        %v1556 = vsel %vm854, %v1513, 0
        %v1559 = vsel %vm854, %v1514, 0
        %v1562 = vsel %vm854, %v1515, 0
        %v1565 = vsel %vm854, %v1516, 0
        %v1568 = vsel %vm854, %v1517, 0
        %v1571 = vsel %vm854, %v1518, 0
        %v1574 = vsel %vm854, %v1519, 0
        %v1577 = vsel %vm854, %v1520, 0
        %v1580 = vsel %vm854, %v1521, 0
        %v1583 = vsel %vm854, %v1522, 0
        %v1586 = vsel %vm854, %v1523, 0
        %v1589 = vsel %vm854, %v1524, 0
        %v1592 = vsel %vm854, %v1525, 0
        %v1595 = vsel %vm854, %v1526, 0
        %v1598 = vsel %vm854, %v1527, 0
        %v1601 = vsel %vm854, %v1528, 0
        %v1604 = vsel %vm854, %v1529, 0
        %v1607 = vsel %vm854, %v1530, 0
        %v1610 = vsel %vm854, %v1531, 0
        %v1613 = vsel %vm854, %v1532, 0
        %v1616 = vsel %vm854, %v1533, 0
        %v1619 = vsel %vm854, %v1534, 0
        %v1622 = vsel %vm854, %v1535, 0
        %v1625 = vsel %vm854, %v1536, 0
        %v1628 = vsel %vm854, %v1537, 0
        %v1631 = vsel %vm854, %v1538, 0
        %v1634 = vsel %vm854, %v1539, 0
        %v1637 = vsel %vm854, %v1540, 0
        %vm1639 = vcmask 1041408
        %v1641 = vsel %vm1639, %v1542, 0
        %1643 = vmatprep.subr.mxu0 0.0
        %1644 = vmatpush1.msra.mxu0 %v1641
        %1645 = vmatprep.subr.mxu0 0.0
        %1646 = vmatpush1.msra.mxu0 0.0
        %1647 = vmatprep.subr.mxu0 0.0
        %1648 = vmatpush1.msra.mxu0 0.0
        %1649 = vmatprep.subr.mxu0 0.0
        %1650 = vmatpush1.msra.mxu0 0.0
        %1651 = vmatprep.subr.mxu0 0.0
        %1652 = vmatpush1.msra.mxu0 0.0
        %1653 = vmatprep.subr.mxu0 0.0
        %1654 = vmatpush1.msra.mxu0 0.0
        %1655 = vmatprep.subr.mxu0 0.0
        %1656 = vmatpush1.msra.mxu0 0.0
        %1657 = vmatprep.subr.mxu0 0.0
        %1658 = vmatpush1.msra.mxu0 0.0
        %1659 = vmatprep.subr.mxu0 0.0
        %1660 = vmatpush1.msra.mxu0 0.0
        %1661 = vmatprep.subr.mxu0 0.0
        %1662 = vmatpush1.msra.mxu0 0.0
        %1663 = vmatprep.subr.mxu0 0.0
        %1664 = vmatpush1.msra.mxu0 0.0
        %1665 = vmatprep.subr.mxu0 0.0
        %1666 = vmatpush1.msra.mxu0 0.0
        %1667 = vmatprep.subr.mxu0 0.0
        %1668 = vmatpush1.msra.mxu0 0.0
        %1669 = vmatprep.subr.mxu0 0.0
        %1670 = vmatpush1.msra.mxu0 0.0
        %1671 = vmatprep.subr.mxu0 0.0
        %1672 = vmatpush1.msra.mxu0 0.0
        %1673 = vmatprep.subr.mxu0 0.0
        %1674 = vmatpush1.msra.mxu0 0.0
        %1675 = vmatprep.subr.mxu0 0.0
        %1676 = vmatpush1.msra.mxu0 0.0
        %1677 = vmatprep.subr.mxu0 0.0
        %1678 = vmatpush1.msra.mxu0 0.0
        %1679 = vmatprep.subr.mxu0 0.0
        %1680 = vmatpush1.msra.mxu0 0.0
        %1681 = vmatprep.subr.mxu0 0.0
        %1682 = vmatpush1.msra.mxu0 0.0
        %1683 = vmatprep.subr.mxu0 0.0
        %1684 = vmatpush1.msra.mxu0 0.0
        %1685 = vmatprep.subr.mxu0 0.0
        %1686 = vmatpush1.msra.mxu0 0.0
        %1687 = vmatprep.subr.mxu0 0.0
        %1688 = vmatpush1.msra.mxu0 0.0
        %1689 = vmatprep.subr.mxu0 0.0
        %1690 = vmatpush1.msra.mxu0 0.0
        %1691 = vmatprep.subr.mxu0 0.0
        %1692 = vmatpush1.msra.mxu0 0.0
        %1693 = vmatprep.subr.mxu0 0.0
        %1694 = vmatpush1.msra.mxu0 0.0
        %1695 = vmatprep.subr.mxu0 0.0
        %1696 = vmatpush1.msra.mxu0 0.0
        %1697 = vmatprep.subr.mxu0 0.0
        %1698 = vmatpush1.msra.mxu0 0.0
        %1699 = vmatprep.subr.mxu0 0.0
        %1700 = vmatpush1.msra.mxu0 0.0
        %1701 = vmatprep.subr.mxu0 0.0
        %1702 = vmatpush1.msra.mxu0 0.0
        %1703 = vmatprep.subr.mxu0 0.0
        %1704 = vmatpush1.msra.mxu0 0.0
        %1705 = vmatprep.subr.mxu0 0.0
        %1706 = vmatpush1.msra.mxu0 0.0
        %1707 = vmatprep.mubr.f32.mxu0 0.0
        %1708 = vmatmul.mubr.f32.gmra.mrb[0].mxu0 %v1544
        %v1709 = vpop.f32.mrb[0].mxu0
        %v1710 = vadd.f32 0.0, %v1709
        %v1711 = vpop.f32.mrb[0].mxu0
        %1712 = vmatprep.mubr.f32.mxu0 0.0
        %1713 = vmatmul.mubr.f32.gmra.mrb[0].mxu0 %v1547
        %v1714 = vpop.f32.mrb[0].mxu0
        %v1715 = vadd.f32 0.0, %v1714
        %v1716 = vpop.f32.mrb[0].mxu0
        %1717 = vmatprep.mubr.f32.mxu0 0.0
        %1718 = vmatmul.mubr.f32.gmra.mrb[0].mxu0 %v1550
        %v1719 = vpop.f32.mrb[0].mxu0
        %v1720 = vadd.f32 0.0, %v1719
        %v1721 = vpop.f32.mrb[0].mxu0
        %1722 = vmatprep.mubr.f32.mxu0 0.0
        %1723 = vmatmul.mubr.f32.gmra.mrb[0].mxu0 %v1553
        %v1724 = vpop.f32.mrb[0].mxu0
        %v1725 = vadd.f32 0.0, %v1724
        %v1726 = vpop.f32.mrb[0].mxu0
        %1727 = vmatprep.mubr.f32.mxu0 0.0
        %1728 = vmatmul.mubr.f32.gmra.mrb[0].mxu0 %v1556
        %v1729 = vpop.f32.mrb[0].mxu0
        %v1730 = vadd.f32 0.0, %v1729
        %v1731 = vpop.f32.mrb[0].mxu0
        %1732 = vmatprep.mubr.f32.mxu0 0.0
        %1733 = vmatmul.mubr.f32.gmra.mrb[0].mxu0 %v1559
        %v1734 = vpop.f32.mrb[0].mxu0
        %v1735 = vadd.f32 0.0, %v1734
        %v1736 = vpop.f32.mrb[0].mxu0
        %1737 = vmatprep.mubr.f32.mxu0 0.0
        %1738 = vmatmul.mubr.f32.gmra.mrb[0].mxu0 %v1562
        %v1739 = vpop.f32.mrb[0].mxu0
        %v1740 = vadd.f32 0.0, %v1739
        %v1741 = vpop.f32.mrb[0].mxu0
        %1742 = vmatprep.mubr.f32.mxu0 0.0
        %1743 = vmatmul.mubr.f32.gmra.mrb[0].mxu0 %v1565
        %v1744 = vpop.f32.mrb[0].mxu0
        %v1745 = vadd.f32 0.0, %v1744
        %v1746 = vpop.f32.mrb[0].mxu0
        %1747 = vmatprep.mubr.f32.mxu0 0.0
        %1748 = vmatmul.mubr.f32.gmra.mrb[0].mxu0 %v1568
        %v1749 = vpop.f32.mrb[0].mxu0
        %v1750 = vadd.f32 0.0, %v1749
        %v1751 = vpop.f32.mrb[0].mxu0
        %1752 = vmatprep.mubr.f32.mxu0 0.0
        %1753 = vmatmul.mubr.f32.gmra.mrb[0].mxu0 %v1571
        %v1754 = vpop.f32.mrb[0].mxu0
        %v1755 = vadd.f32 0.0, %v1754
        %v1756 = vpop.f32.mrb[0].mxu0
        %1757 = vmatprep.mubr.f32.mxu0 0.0
        %1758 = vmatmul.mubr.f32.gmra.mrb[0].mxu0 %v1574
        %v1759 = vpop.f32.mrb[0].mxu0
        %v1760 = vadd.f32 0.0, %v1759
        %v1761 = vpop.f32.mrb[0].mxu0
        %1762 = vmatprep.mubr.f32.mxu0 0.0
        %1763 = vmatmul.mubr.f32.gmra.mrb[0].mxu0 %v1577
        %v1764 = vpop.f32.mrb[0].mxu0
        %v1765 = vadd.f32 0.0, %v1764
        %v1766 = vpop.f32.mrb[0].mxu0
        %1767 = vmatprep.mubr.f32.mxu0 0.0
        %1768 = vmatmul.mubr.f32.gmra.mrb[0].mxu0 %v1580
        %v1769 = vpop.f32.mrb[0].mxu0
        %v1770 = vadd.f32 0.0, %v1769
        %v1771 = vpop.f32.mrb[0].mxu0
        %1772 = vmatprep.mubr.f32.mxu0 0.0
        %1773 = vmatmul.mubr.f32.gmra.mrb[0].mxu0 %v1583
        %v1774 = vpop.f32.mrb[0].mxu0
        %v1775 = vadd.f32 0.0, %v1774
        %v1776 = vpop.f32.mrb[0].mxu0
        %1777 = vmatprep.mubr.f32.mxu0 0.0
        %1778 = vmatmul.mubr.f32.gmra.mrb[0].mxu0 %v1586
        %v1779 = vpop.f32.mrb[0].mxu0
        %v1780 = vadd.f32 0.0, %v1779
        %v1781 = vpop.f32.mrb[0].mxu0
        %1782 = vmatprep.mubr.f32.mxu0 0.0
        %1783 = vmatmul.mubr.f32.gmra.mrb[0].mxu0 %v1589
        %v1784 = vpop.f32.mrb[0].mxu0
        %v1785 = vadd.f32 0.0, %v1784
        %v1786 = vpop.f32.mrb[0].mxu0
        %1787 = vmatprep.mubr.f32.mxu0 0.0
        %1788 = vmatmul.mubr.f32.gmra.mrb[0].mxu0 %v1592
        %v1789 = vpop.f32.mrb[0].mxu0
        %v1790 = vadd.f32 0.0, %v1789
        %v1791 = vpop.f32.mrb[0].mxu0
        %1792 = vmatprep.mubr.f32.mxu0 0.0
        %1793 = vmatmul.mubr.f32.gmra.mrb[0].mxu0 %v1595
        %v1794 = vpop.f32.mrb[0].mxu0
        %v1795 = vadd.f32 0.0, %v1794
        %v1796 = vpop.f32.mrb[0].mxu0
        %1797 = vmatprep.mubr.f32.mxu0 0.0
        %1798 = vmatmul.mubr.f32.gmra.mrb[0].mxu0 %v1598
        %v1799 = vpop.f32.mrb[0].mxu0
        %v1800 = vadd.f32 0.0, %v1799
        %v1801 = vpop.f32.mrb[0].mxu0
        %1802 = vmatprep.mubr.f32.mxu0 0.0
        %1803 = vmatmul.mubr.f32.gmra.mrb[0].mxu0 %v1601
        %v1804 = vpop.f32.mrb[0].mxu0
        %v1805 = vadd.f32 0.0, %v1804
        %v1806 = vpop.f32.mrb[0].mxu0
        %1807 = vmatprep.mubr.f32.mxu0 0.0
        %1808 = vmatmul.mubr.f32.gmra.mrb[0].mxu0 %v1604
        %v1809 = vpop.f32.mrb[0].mxu0
        %v1810 = vadd.f32 0.0, %v1809
        %v1811 = vpop.f32.mrb[0].mxu0
        %1812 = vmatprep.mubr.f32.mxu0 0.0
        %1813 = vmatmul.mubr.f32.gmra.mrb[0].mxu0 %v1607
        %v1814 = vpop.f32.mrb[0].mxu0
        %v1815 = vadd.f32 0.0, %v1814
        %v1816 = vpop.f32.mrb[0].mxu0
        %1817 = vmatprep.mubr.f32.mxu0 0.0
        %1818 = vmatmul.mubr.f32.gmra.mrb[0].mxu0 %v1610
        %v1819 = vpop.f32.mrb[0].mxu0
        %v1820 = vadd.f32 0.0, %v1819
        %v1821 = vpop.f32.mrb[0].mxu0
        %1822 = vmatprep.mubr.f32.mxu0 0.0
        %1823 = vmatmul.mubr.f32.gmra.mrb[0].mxu0 %v1613
        %v1824 = vpop.f32.mrb[0].mxu0
        %v1825 = vadd.f32 0.0, %v1824
        %v1826 = vpop.f32.mrb[0].mxu0
        %1827 = vmatprep.mubr.f32.mxu0 0.0
        %1828 = vmatmul.mubr.f32.gmra.mrb[0].mxu0 %v1616
        %v1829 = vpop.f32.mrb[0].mxu0
        %v1830 = vadd.f32 0.0, %v1829
        %v1831 = vpop.f32.mrb[0].mxu0
        %1832 = vmatprep.mubr.f32.mxu0 0.0
        %1833 = vmatmul.mubr.f32.gmra.mrb[0].mxu0 %v1619
        %v1834 = vpop.f32.mrb[0].mxu0
        %v1835 = vadd.f32 0.0, %v1834
        %v1836 = vpop.f32.mrb[0].mxu0
        %1837 = vmatprep.mubr.f32.mxu0 0.0
        %1838 = vmatmul.mubr.f32.gmra.mrb[0].mxu0 %v1622
        %v1839 = vpop.f32.mrb[0].mxu0
        %v1840 = vadd.f32 0.0, %v1839
        %v1841 = vpop.f32.mrb[0].mxu0
        %1842 = vmatprep.mubr.f32.mxu0 0.0
        %1843 = vmatmul.mubr.f32.gmra.mrb[0].mxu0 %v1625
        %v1844 = vpop.f32.mrb[0].mxu0
        %v1845 = vadd.f32 0.0, %v1844
        %v1846 = vpop.f32.mrb[0].mxu0
        %1847 = vmatprep.mubr.f32.mxu0 0.0
        %1848 = vmatmul.mubr.f32.gmra.mrb[0].mxu0 %v1628
        %v1849 = vpop.f32.mrb[0].mxu0
        %v1850 = vadd.f32 0.0, %v1849
        %v1851 = vpop.f32.mrb[0].mxu0
        %1852 = vmatprep.mubr.f32.mxu0 0.0
        %1853 = vmatmul.mubr.f32.gmra.mrb[0].mxu0 %v1631
        %v1854 = vpop.f32.mrb[0].mxu0
        %v1855 = vadd.f32 0.0, %v1854
        %v1856 = vpop.f32.mrb[0].mxu0
        %1857 = vmatprep.mubr.f32.mxu0 0.0
        %1858 = vmatmul.mubr.f32.gmra.mrb[0].mxu0 %v1634
        %v1859 = vpop.f32.mrb[0].mxu0
        %v1860 = vadd.f32 0.0, %v1859
        %v1861 = vpop.f32.mrb[0].mxu0
        %1862 = vmatprep.mubr.f32.mxu0 0.0
        %1863 = vmatmul.mubr.f32.gmra.mrb[0].mxu0 %v1637
        %v1864 = vpop.f32.mrb[0].mxu0
        %v1865 = vadd.f32 0.0, %v1864
        %v1866 = vpop.f32.mrb[0].mxu0
        %1867 = vdwg.mxu0
        %v1869 = vsel %vm854, %v821, 0
        %v1872 = vsel %vm854, %v822, 0
        %v1875 = vsel %vm854, %v823, 0
        %v1878 = vsel %vm854, %v824, 0
        %v1881 = vsel %vm854, %v825, 0
        %v1884 = vsel %vm854, %v826, 0
        %v1887 = vsel %vm854, %v827, 0
        %v1890 = vsel %vm854, %v828, 0
        %v1893 = vsel %vm854, %v829, 0
        %v1896 = vsel %vm854, %v830, 0
        %v1899 = vsel %vm854, %v831, 0
        %v1902 = vsel %vm854, %v832, 0
        %v1905 = vsel %vm854, %v833, 0
        %v1908 = vsel %vm854, %v834, 0
        %v1911 = vsel %vm854, %v835, 0
        %v1914 = vsel %vm854, %v836, 0
        %v1917 = vsel %vm854, %v837, 0
        %v1920 = vsel %vm854, %v838, 0
        %v1923 = vsel %vm854, %v839, 0
        %v1926 = vsel %vm854, %v840, 0
        %v1929 = vsel %vm854, %v841, 0
        %v1932 = vsel %vm854, %v842, 0
        %v1935 = vsel %vm854, %v843, 0
        %v1938 = vsel %vm854, %v844, 0
        %v1941 = vsel %vm854, %v845, 0
        %v1944 = vsel %vm854, %v846, 0
        %v1947 = vsel %vm854, %v847, 0
        %v1950 = vsel %vm854, %v848, 0
        %v1953 = vsel %vm854, %v849, 0
        %v1956 = vsel %vm854, %v850, 0
        %v1959 = vsel %vm854, %v851, 0
        %v1962 = vsel %vm854, %v852, 0
        %v1965 = vsel %vm1639, %v853, 0
        %1967 = vmatprep.subr.mxu0 0.0
        %1968 = vmatpush1.msra.mxu0 %v1965
        %1969 = vmatprep.subr.mxu0 0.0
        %1970 = vmatpush1.msra.mxu0 0.0
        %1971 = vmatprep.subr.mxu0 0.0
        %1972 = vmatpush1.msra.mxu0 0.0
        %1973 = vmatprep.subr.mxu0 0.0
        %1974 = vmatpush1.msra.mxu0 0.0
        %1975 = vmatprep.subr.mxu0 0.0
        %1976 = vmatpush1.msra.mxu0 0.0
        %1977 = vmatprep.subr.mxu0 0.0
        %1978 = vmatpush1.msra.mxu0 0.0
        %1979 = vmatprep.subr.mxu0 0.0
        %1980 = vmatpush1.msra.mxu0 0.0
        %1981 = vmatprep.subr.mxu0 0.0
        %1982 = vmatpush1.msra.mxu0 0.0
        %1983 = vmatprep.subr.mxu0 0.0
        %1984 = vmatpush1.msra.mxu0 0.0
        %1985 = vmatprep.subr.mxu0 0.0
        %1986 = vmatpush1.msra.mxu0 0.0
        %1987 = vmatprep.subr.mxu0 0.0
        %1988 = vmatpush1.msra.mxu0 0.0
        %1989 = vmatprep.subr.mxu0 0.0
        %1990 = vmatpush1.msra.mxu0 0.0
        %1991 = vmatprep.subr.mxu0 0.0
        %1992 = vmatpush1.msra.mxu0 0.0
        %1993 = vmatprep.subr.mxu0 0.0
        %1994 = vmatpush1.msra.mxu0 0.0
        %1995 = vmatprep.subr.mxu0 0.0
        %1996 = vmatpush1.msra.mxu0 0.0
        %1997 = vmatprep.subr.mxu0 0.0
        %1998 = vmatpush1.msra.mxu0 0.0
        %1999 = vmatprep.subr.mxu0 0.0
        %2000 = vmatpush1.msra.mxu0 0.0
        %2001 = vmatprep.subr.mxu0 0.0
        %2002 = vmatpush1.msra.mxu0 0.0
        %2003 = vmatprep.subr.mxu0 0.0
        %2004 = vmatpush1.msra.mxu0 0.0
        %2005 = vmatprep.subr.mxu0 0.0
        %2006 = vmatpush1.msra.mxu0 0.0
        %2007 = vmatprep.subr.mxu0 0.0
        %2008 = vmatpush1.msra.mxu0 0.0
        %2009 = vmatprep.subr.mxu0 0.0
        %2010 = vmatpush1.msra.mxu0 0.0
        %2011 = vmatprep.subr.mxu0 0.0
        %2012 = vmatpush1.msra.mxu0 0.0
        %2013 = vmatprep.subr.mxu0 0.0
        %2014 = vmatpush1.msra.mxu0 0.0
        %2015 = vmatprep.subr.mxu0 0.0
        %2016 = vmatpush1.msra.mxu0 0.0
        %2017 = vmatprep.subr.mxu0 0.0
        %2018 = vmatpush1.msra.mxu0 0.0
        %2019 = vmatprep.subr.mxu0 0.0
        %2020 = vmatpush1.msra.mxu0 0.0
        %2021 = vmatprep.subr.mxu0 0.0
        %2022 = vmatpush1.msra.mxu0 0.0
        %2023 = vmatprep.subr.mxu0 0.0
        %2024 = vmatpush1.msra.mxu0 0.0
        %2025 = vmatprep.subr.mxu0 0.0
        %2026 = vmatpush1.msra.mxu0 0.0
        %2027 = vmatprep.subr.mxu0 0.0
        %2028 = vmatpush1.msra.mxu0 0.0
        %2029 = vmatprep.subr.mxu0 0.0
        %2030 = vmatpush1.msra.mxu0 0.0
        %2031 = vmatprep.mubr.f32.mxu0 0.0
        %2032 = vmatmul.mubr.f32.gmra.mrb[0].mxu0 %v1869
        %v2033 = vpop.f32.mrb[0].mxu0
        %v2034 = vadd.f32 %v1710, %v2033
        %v2035 = vpop.f32.mrb[0].mxu0
        %2036 = vmatprep.mubr.f32.mxu0 0.0
        %2037 = vmatmul.mubr.f32.gmra.mrb[0].mxu0 %v1872
        %v2038 = vpop.f32.mrb[0].mxu0
        %v2039 = vadd.f32 %v1715, %v2038
        %v2040 = vpop.f32.mrb[0].mxu0
        %2041 = vmatprep.mubr.f32.mxu0 0.0
        %2042 = vmatmul.mubr.f32.gmra.mrb[0].mxu0 %v1875
        %v2043 = vpop.f32.mrb[0].mxu0
        %v2044 = vadd.f32 %v1720, %v2043
        %v2045 = vpop.f32.mrb[0].mxu0
        %2046 = vmatprep.mubr.f32.mxu0 0.0
        %2047 = vmatmul.mubr.f32.gmra.mrb[0].mxu0 %v1878
        %v2048 = vpop.f32.mrb[0].mxu0
        %v2049 = vadd.f32 %v1725, %v2048
        %v2050 = vpop.f32.mrb[0].mxu0
        %2051 = vmatprep.mubr.f32.mxu0 0.0
        %2052 = vmatmul.mubr.f32.gmra.mrb[0].mxu0 %v1881
        %v2053 = vpop.f32.mrb[0].mxu0
        %v2054 = vadd.f32 %v1730, %v2053
        %v2055 = vpop.f32.mrb[0].mxu0
        %2056 = vmatprep.mubr.f32.mxu0 0.0
        %2057 = vmatmul.mubr.f32.gmra.mrb[0].mxu0 %v1884
        %v2058 = vpop.f32.mrb[0].mxu0
        %v2059 = vadd.f32 %v1735, %v2058
        %v2060 = vpop.f32.mrb[0].mxu0
        %2061 = vmatprep.mubr.f32.mxu0 0.0
        %2062 = vmatmul.mubr.f32.gmra.mrb[0].mxu0 %v1887
        %v2063 = vpop.f32.mrb[0].mxu0
        %v2064 = vadd.f32 %v1740, %v2063
        %v2065 = vpop.f32.mrb[0].mxu0
        %2066 = vmatprep.mubr.f32.mxu0 0.0
        %2067 = vmatmul.mubr.f32.gmra.mrb[0].mxu0 %v1890
        %v2068 = vpop.f32.mrb[0].mxu0
        %v2069 = vadd.f32 %v1745, %v2068
        %v2070 = vpop.f32.mrb[0].mxu0
        %2071 = vmatprep.mubr.f32.mxu0 0.0
        %2072 = vmatmul.mubr.f32.gmra.mrb[0].mxu0 %v1893
        %v2073 = vpop.f32.mrb[0].mxu0
        %v2074 = vadd.f32 %v1750, %v2073
        %v2075 = vpop.f32.mrb[0].mxu0
        %2076 = vmatprep.mubr.f32.mxu0 0.0
        %2077 = vmatmul.mubr.f32.gmra.mrb[0].mxu0 %v1896
        %v2078 = vpop.f32.mrb[0].mxu0
        %v2079 = vadd.f32 %v1755, %v2078
        %v2080 = vpop.f32.mrb[0].mxu0
        %2081 = vmatprep.mubr.f32.mxu0 0.0
        %2082 = vmatmul.mubr.f32.gmra.mrb[0].mxu0 %v1899
        %v2083 = vpop.f32.mrb[0].mxu0
        %v2084 = vadd.f32 %v1760, %v2083
        %v2085 = vpop.f32.mrb[0].mxu0
        %2086 = vmatprep.mubr.f32.mxu0 0.0
        %2087 = vmatmul.mubr.f32.gmra.mrb[0].mxu0 %v1902
        %v2088 = vpop.f32.mrb[0].mxu0
        %v2089 = vadd.f32 %v1765, %v2088
        %v2090 = vpop.f32.mrb[0].mxu0
        %2091 = vmatprep.mubr.f32.mxu0 0.0
        %2092 = vmatmul.mubr.f32.gmra.mrb[0].mxu0 %v1905
        %v2093 = vpop.f32.mrb[0].mxu0
        %v2094 = vadd.f32 %v1770, %v2093
        %v2095 = vpop.f32.mrb[0].mxu0
        %2096 = vmatprep.mubr.f32.mxu0 0.0
        %2097 = vmatmul.mubr.f32.gmra.mrb[0].mxu0 %v1908
        %v2098 = vpop.f32.mrb[0].mxu0
        %v2099 = vadd.f32 %v1775, %v2098
        %v2100 = vpop.f32.mrb[0].mxu0
        %2101 = vmatprep.mubr.f32.mxu0 0.0
        %2102 = vmatmul.mubr.f32.gmra.mrb[0].mxu0 %v1911
        %v2103 = vpop.f32.mrb[0].mxu0
        %v2104 = vadd.f32 %v1780, %v2103
        %v2105 = vpop.f32.mrb[0].mxu0
        %2106 = vmatprep.mubr.f32.mxu0 0.0
        %2107 = vmatmul.mubr.f32.gmra.mrb[0].mxu0 %v1914
        %v2108 = vpop.f32.mrb[0].mxu0
        %v2109 = vadd.f32 %v1785, %v2108
        %v2110 = vpop.f32.mrb[0].mxu0
        %2111 = vmatprep.mubr.f32.mxu0 0.0
        %2112 = vmatmul.mubr.f32.gmra.mrb[0].mxu0 %v1917
        %v2113 = vpop.f32.mrb[0].mxu0
        %v2114 = vadd.f32 %v1790, %v2113
        %v2115 = vpop.f32.mrb[0].mxu0
        %2116 = vmatprep.mubr.f32.mxu0 0.0
        %2117 = vmatmul.mubr.f32.gmra.mrb[0].mxu0 %v1920
        %v2118 = vpop.f32.mrb[0].mxu0
        %v2119 = vadd.f32 %v1795, %v2118
        %v2120 = vpop.f32.mrb[0].mxu0
        %2121 = vmatprep.mubr.f32.mxu0 0.0
        %2122 = vmatmul.mubr.f32.gmra.mrb[0].mxu0 %v1923
        %v2123 = vpop.f32.mrb[0].mxu0
        %v2124 = vadd.f32 %v1800, %v2123
        %v2125 = vpop.f32.mrb[0].mxu0
        %2126 = vmatprep.mubr.f32.mxu0 0.0
        %2127 = vmatmul.mubr.f32.gmra.mrb[0].mxu0 %v1926
        %v2128 = vpop.f32.mrb[0].mxu0
        %v2129 = vadd.f32 %v1805, %v2128
        %v2130 = vpop.f32.mrb[0].mxu0
        %2131 = vmatprep.mubr.f32.mxu0 0.0
        %2132 = vmatmul.mubr.f32.gmra.mrb[0].mxu0 %v1929
        %v2133 = vpop.f32.mrb[0].mxu0
        %v2134 = vadd.f32 %v1810, %v2133
        %v2135 = vpop.f32.mrb[0].mxu0
        %2136 = vmatprep.mubr.f32.mxu0 0.0
        %2137 = vmatmul.mubr.f32.gmra.mrb[0].mxu0 %v1932
        %v2138 = vpop.f32.mrb[0].mxu0
        %v2139 = vadd.f32 %v1815, %v2138
        %v2140 = vpop.f32.mrb[0].mxu0
        %2141 = vmatprep.mubr.f32.mxu0 0.0
        %2142 = vmatmul.mubr.f32.gmra.mrb[0].mxu0 %v1935
        %v2143 = vpop.f32.mrb[0].mxu0
        %v2144 = vadd.f32 %v1820, %v2143
        %v2145 = vpop.f32.mrb[0].mxu0
        %2146 = vmatprep.mubr.f32.mxu0 0.0
        %2147 = vmatmul.mubr.f32.gmra.mrb[0].mxu0 %v1938
        %v2148 = vpop.f32.mrb[0].mxu0
        %v2149 = vadd.f32 %v1825, %v2148
        %v2150 = vpop.f32.mrb[0].mxu0
        %2151 = vmatprep.mubr.f32.mxu0 0.0
        %2152 = vmatmul.mubr.f32.gmra.mrb[0].mxu0 %v1941
        %v2153 = vpop.f32.mrb[0].mxu0
        %v2154 = vadd.f32 %v1830, %v2153
        %v2155 = vpop.f32.mrb[0].mxu0
        %2156 = vmatprep.mubr.f32.mxu0 0.0
        %2157 = vmatmul.mubr.f32.gmra.mrb[0].mxu0 %v1944
        %v2158 = vpop.f32.mrb[0].mxu0
        %v2159 = vadd.f32 %v1835, %v2158
        %v2160 = vpop.f32.mrb[0].mxu0
        %2161 = vmatprep.mubr.f32.mxu0 0.0
        %2162 = vmatmul.mubr.f32.gmra.mrb[0].mxu0 %v1947
        %v2163 = vpop.f32.mrb[0].mxu0
        %v2164 = vadd.f32 %v1840, %v2163
        %v2165 = vpop.f32.mrb[0].mxu0
        %2166 = vmatprep.mubr.f32.mxu0 0.0
        %2167 = vmatmul.mubr.f32.gmra.mrb[0].mxu0 %v1950
        %v2168 = vpop.f32.mrb[0].mxu0
        %v2169 = vadd.f32 %v1845, %v2168
        %v2170 = vpop.f32.mrb[0].mxu0
        %2171 = vmatprep.mubr.f32.mxu0 0.0
        %2172 = vmatmul.mubr.f32.gmra.mrb[0].mxu0 %v1953
        %v2173 = vpop.f32.mrb[0].mxu0
        %v2174 = vadd.f32 %v1850, %v2173
        %v2175 = vpop.f32.mrb[0].mxu0
        %2176 = vmatprep.mubr.f32.mxu0 0.0
        %2177 = vmatmul.mubr.f32.gmra.mrb[0].mxu0 %v1956
        %v2178 = vpop.f32.mrb[0].mxu0
        %v2179 = vadd.f32 %v1855, %v2178
        %v2180 = vpop.f32.mrb[0].mxu0
        %2181 = vmatprep.mubr.f32.mxu0 0.0
        %2182 = vmatmul.mubr.f32.gmra.mrb[0].mxu0 %v1959
        %v2183 = vpop.f32.mrb[0].mxu0
        %v2184 = vadd.f32 %v1860, %v2183
        %v2185 = vpop.f32.mrb[0].mxu0
        %2186 = vmatprep.mubr.f32.mxu0 0.0
        %2187 = vmatmul.mubr.f32.gmra.mrb[0].mxu0 %v1962
        %v2188 = vpop.f32.mrb[0].mxu0
        %v2189 = vadd.f32 %v1865, %v2188
        %v2190 = vpop.f32.mrb[0].mxu0
        %2191 = vdwg.mxu0
        %2192 = vst.msk [vmem:[%s897] sm:$0xff] %vm854, %v1509
        %2193 = vst.msk [vmem:[%s897 + $0x8] sm:$0xff] %vm854, %v1510
        %2194 = vst.msk [vmem:[%s897 + $0x10] sm:$0xff] %vm854, %v1511
        %2195 = vst.msk [vmem:[%s897 + $0x18] sm:$0xff] %vm854, %v1512
        %2196 = vst.msk [vmem:[%s897 + $0x20] sm:$0xff] %vm854, %v1513
        %2197 = vst.msk [vmem:[%s897 + $0x28] sm:$0xff] %vm854, %v1514
        %2198 = vst.msk [vmem:[%s897 + $0x30] sm:$0xff] %vm854, %v1515
        %2199 = vst.msk [vmem:[%s897 + $0x38] sm:$0xff] %vm854, %v1516
        %2200 = vst.msk [vmem:[%s897 + $0x40] sm:$0xff] %vm854, %v1517
        %2201 = vst.msk [vmem:[%s897 + $0x48] sm:$0xff] %vm854, %v1518
        %2202 = vst.msk [vmem:[%s897 + $0x50] sm:$0xff] %vm854, %v1519
        %2203 = vst.msk [vmem:[%s897 + $0x58] sm:$0xff] %vm854, %v1520
        %2204 = vst.msk [vmem:[%s897 + $0x60] sm:$0xff] %vm854, %v1521
        %2205 = vst.msk [vmem:[%s897 + $0x68] sm:$0xff] %vm854, %v1522
        %2206 = vst.msk [vmem:[%s897 + $0x70] sm:$0xff] %vm854, %v1523
        %2207 = vst.msk [vmem:[%s897 + $0x78] sm:$0xff] %vm854, %v1524
        %2208 = vst.msk [vmem:[%s897 + $0x80] sm:$0xff] %vm854, %v1525
        %2209 = vst.msk [vmem:[%s897 + $0x88] sm:$0xff] %vm854, %v1526
        %2210 = vst.msk [vmem:[%s897 + $0x90] sm:$0xff] %vm854, %v1527
        %2211 = vst.msk [vmem:[%s897 + $0x98] sm:$0xff] %vm854, %v1528
        %2212 = vst.msk [vmem:[%s897 + $0xa0] sm:$0xff] %vm854, %v1529
        %2213 = vst.msk [vmem:[%s897 + $0xa8] sm:$0xff] %vm854, %v1530
        %2214 = vst.msk [vmem:[%s897 + $0xb0] sm:$0xff] %vm854, %v1531
        %2215 = vst.msk [vmem:[%s897 + $0xb8] sm:$0xff] %vm854, %v1532
        %2216 = vst.msk [vmem:[%s897 + $0xc0] sm:$0xff] %vm854, %v1533
        %2217 = vst.msk [vmem:[%s897 + $0xc8] sm:$0xff] %vm854, %v1534
        %2218 = vst.msk [vmem:[%s897 + $0xd0] sm:$0xff] %vm854, %v1535
        %2219 = vst.msk [vmem:[%s897 + $0xd8] sm:$0xff] %vm854, %v1536
        %2220 = vst.msk [vmem:[%s897 + $0xe0] sm:$0xff] %vm854, %v1537
        %2221 = vst.msk [vmem:[%s897 + $0xe8] sm:$0xff] %vm854, %v1538
        %2222 = vst.msk [vmem:[%s897 + $0xf0] sm:$0xff] %vm854, %v1539
        %2223 = vst.msk [vmem:[%s897 + $0xf8] sm:$0xff] %vm854, %v1540
        %v2224 = vld [vmem:[#allocation2] sm:$0xff]
        %v2225 = vld [vmem:[#allocation2 + $0x8] sm:$0xff]
        %v2226 = vld [vmem:[#allocation2 + $0x10] sm:$0xff]
        %v2227 = vld [vmem:[#allocation2 + $0x18] sm:$0xff]
        %v2228 = vld [vmem:[#allocation2 + $0x20] sm:$0xff]
        %v2229 = vld [vmem:[#allocation2 + $0x28] sm:$0xff]
        %v2230 = vld [vmem:[#allocation2 + $0x30] sm:$0xff]
        %v2231 = vld [vmem:[#allocation2 + $0x38] sm:$0xff]
        %v2232 = vld [vmem:[#allocation2 + $0x40] sm:$0xff]
        %v2233 = vld [vmem:[#allocation2 + $0x48] sm:$0xff]
        %v2234 = vld [vmem:[#allocation2 + $0x50] sm:$0xff]
        %v2235 = vld [vmem:[#allocation2 + $0x58] sm:$0xff]
        %v2236 = vld [vmem:[#allocation2 + $0x60] sm:$0xff]
        %v2237 = vld [vmem:[#allocation2 + $0x68] sm:$0xff]
        %v2238 = vld [vmem:[#allocation2 + $0x70] sm:$0xff]
        %v2239 = vld [vmem:[#allocation2 + $0x78] sm:$0xff]
        %v2240 = vld [vmem:[#allocation2 + $0x80] sm:$0xff]
        %v2241 = vld [vmem:[#allocation2 + $0x88] sm:$0xff]
        %v2242 = vld [vmem:[#allocation2 + $0x90] sm:$0xff]
        %v2243 = vld [vmem:[#allocation2 + $0x98] sm:$0xff]
        %v2244 = vld [vmem:[#allocation2 + $0xa0] sm:$0xff]
        %v2245 = vld [vmem:[#allocation2 + $0xa8] sm:$0xff]
        %v2246 = vld [vmem:[#allocation2 + $0xb0] sm:$0xff]
        %v2247 = vld [vmem:[#allocation2 + $0xb8] sm:$0xff]
        %v2248 = vld [vmem:[#allocation2 + $0xc0] sm:$0xff]
        %v2249 = vld [vmem:[#allocation2 + $0xc8] sm:$0xff]
        %v2250 = vld [vmem:[#allocation2 + $0xd0] sm:$0xff]
        %v2251 = vld [vmem:[#allocation2 + $0xd8] sm:$0xff]
        %v2252 = vld [vmem:[#allocation2 + $0xe0] sm:$0xff]
        %v2253 = vld [vmem:[#allocation2 + $0xe8] sm:$0xff]
        %v2254 = vld [vmem:[#allocation2 + $0xf0] sm:$0xff]
        %v2255 = vld [vmem:[#allocation2 + $0xf8] sm:$0xff]
        %v2256 = vld [vmem:[%s962] sm:$0xff]
        %v2257 = vld [vmem:[%s962 + $0x8] sm:$0xff]
        %v2258 = vld [vmem:[%s962 + $0x10] sm:$0xff]
        %v2259 = vld [vmem:[%s962 + $0x18] sm:$0xff]
        %v2260 = vld [vmem:[%s962 + $0x20] sm:$0xff]
        %v2261 = vld [vmem:[%s962 + $0x28] sm:$0xff]
        %v2262 = vld [vmem:[%s962 + $0x30] sm:$0xff]
        %v2263 = vld [vmem:[%s962 + $0x38] sm:$0xff]
        %v2264 = vld [vmem:[%s962 + $0x40] sm:$0xff]
        %v2265 = vld [vmem:[%s962 + $0x48] sm:$0xff]
        %v2266 = vld [vmem:[%s962 + $0x50] sm:$0xff]
        %v2267 = vld [vmem:[%s962 + $0x58] sm:$0xff]
        %v2268 = vld [vmem:[%s962 + $0x60] sm:$0xff]
        %v2269 = vld [vmem:[%s962 + $0x68] sm:$0xff]
        %v2270 = vld [vmem:[%s962 + $0x70] sm:$0xff]
        %v2271 = vld [vmem:[%s962 + $0x78] sm:$0xff]
        %v2272 = vld [vmem:[%s962 + $0x80] sm:$0xff]
        %v2273 = vld [vmem:[%s962 + $0x88] sm:$0xff]
        %v2274 = vld [vmem:[%s962 + $0x90] sm:$0xff]
        %v2275 = vld [vmem:[%s962 + $0x98] sm:$0xff]
        %v2276 = vld [vmem:[%s962 + $0xa0] sm:$0xff]
        %v2277 = vld [vmem:[%s962 + $0xa8] sm:$0xff]
        %v2278 = vld [vmem:[%s962 + $0xb0] sm:$0xff]
        %v2279 = vld [vmem:[%s962 + $0xb8] sm:$0xff]
        %v2280 = vld [vmem:[%s962 + $0xc0] sm:$0xff]
        %v2281 = vld [vmem:[%s962 + $0xc8] sm:$0xff]
        %v2282 = vld [vmem:[%s962 + $0xd0] sm:$0xff]
        %v2283 = vld [vmem:[%s962 + $0xd8] sm:$0xff]
        %v2284 = vld [vmem:[%s962 + $0xe0] sm:$0xff]
        %v2285 = vld [vmem:[%s962 + $0xe8] sm:$0xff]
        %v2286 = vld [vmem:[%s962 + $0xf0] sm:$0xff]
        %v2287 = vld [vmem:[%s962 + $0xf8] sm:$0xff]
        %v2288 = vmax.f32 %v2224, %v2256
        %v2289 = vmax.f32 %v2225, %v2257
        %v2290 = vmax.f32 %v2226, %v2258
        %v2291 = vmax.f32 %v2227, %v2259
        %v2292 = vmax.f32 %v2228, %v2260
        %v2293 = vmax.f32 %v2229, %v2261
        %v2294 = vmax.f32 %v2230, %v2262
        %v2295 = vmax.f32 %v2231, %v2263
        %v2296 = vmax.f32 %v2232, %v2264
        %v2297 = vmax.f32 %v2233, %v2265
        %v2298 = vmax.f32 %v2234, %v2266
        %v2299 = vmax.f32 %v2235, %v2267
        %v2300 = vmax.f32 %v2236, %v2268
        %v2301 = vmax.f32 %v2237, %v2269
        %v2302 = vmax.f32 %v2238, %v2270
        %v2303 = vmax.f32 %v2239, %v2271
        %v2304 = vmax.f32 %v2240, %v2272
        %v2305 = vmax.f32 %v2241, %v2273
        %v2306 = vmax.f32 %v2242, %v2274
        %v2307 = vmax.f32 %v2243, %v2275
        %v2308 = vmax.f32 %v2244, %v2276
        %v2309 = vmax.f32 %v2245, %v2277
        %v2310 = vmax.f32 %v2246, %v2278
        %v2311 = vmax.f32 %v2247, %v2279
        %v2312 = vmax.f32 %v2248, %v2280
        %v2313 = vmax.f32 %v2249, %v2281
        %v2314 = vmax.f32 %v2250, %v2282
        %v2315 = vmax.f32 %v2251, %v2283
        %v2316 = vmax.f32 %v2252, %v2284
        %v2317 = vmax.f32 %v2253, %v2285
        %v2318 = vmax.f32 %v2254, %v2286
        %v2319 = vmax.f32 %v2255, %v2287
        %v2320 = vld [vmem:[%s897] sm:$0xff]
        %v2321 = vld [vmem:[%s897 + $0x8] sm:$0xff]
        %v2322 = vld [vmem:[%s897 + $0x10] sm:$0xff]
        %v2323 = vld [vmem:[%s897 + $0x18] sm:$0xff]
        %v2324 = vld [vmem:[%s897 + $0x20] sm:$0xff]
        %v2325 = vld [vmem:[%s897 + $0x28] sm:$0xff]
        %v2326 = vld [vmem:[%s897 + $0x30] sm:$0xff]
        %v2327 = vld [vmem:[%s897 + $0x38] sm:$0xff]
        %v2328 = vld [vmem:[%s897 + $0x40] sm:$0xff]
        %v2329 = vld [vmem:[%s897 + $0x48] sm:$0xff]
        %v2330 = vld [vmem:[%s897 + $0x50] sm:$0xff]
        %v2331 = vld [vmem:[%s897 + $0x58] sm:$0xff]
        %v2332 = vld [vmem:[%s897 + $0x60] sm:$0xff]
        %v2333 = vld [vmem:[%s897 + $0x68] sm:$0xff]
        %v2334 = vld [vmem:[%s897 + $0x70] sm:$0xff]
        %v2335 = vld [vmem:[%s897 + $0x78] sm:$0xff]
        %v2336 = vld [vmem:[%s897 + $0x80] sm:$0xff]
        %v2337 = vld [vmem:[%s897 + $0x88] sm:$0xff]
        %v2338 = vld [vmem:[%s897 + $0x90] sm:$0xff]
        %v2339 = vld [vmem:[%s897 + $0x98] sm:$0xff]
        %v2340 = vld [vmem:[%s897 + $0xa0] sm:$0xff]
        %v2341 = vld [vmem:[%s897 + $0xa8] sm:$0xff]
        %v2342 = vld [vmem:[%s897 + $0xb0] sm:$0xff]
        %v2343 = vld [vmem:[%s897 + $0xb8] sm:$0xff]
        %v2344 = vld [vmem:[%s897 + $0xc0] sm:$0xff]
        %v2345 = vld [vmem:[%s897 + $0xc8] sm:$0xff]
        %v2346 = vld [vmem:[%s897 + $0xd0] sm:$0xff]
        %v2347 = vld [vmem:[%s897 + $0xd8] sm:$0xff]
        %v2348 = vld [vmem:[%s897 + $0xe0] sm:$0xff]
        %v2349 = vld [vmem:[%s897 + $0xe8] sm:$0xff]
        %v2350 = vld [vmem:[%s897 + $0xf0] sm:$0xff]
        %v2351 = vld [vmem:[%s897 + $0xf8] sm:$0xff]
        %v2352 = vmax.f32 %v2288, %v2320
        %v2353 = vmax.f32 %v2289, %v2321
        %v2354 = vmax.f32 %v2290, %v2322
        %v2355 = vmax.f32 %v2291, %v2323
        %v2356 = vmax.f32 %v2292, %v2324
        %v2357 = vmax.f32 %v2293, %v2325
        %v2358 = vmax.f32 %v2294, %v2326
        %v2359 = vmax.f32 %v2295, %v2327
        %v2360 = vmax.f32 %v2296, %v2328
        %v2361 = vmax.f32 %v2297, %v2329
        %v2362 = vmax.f32 %v2298, %v2330
        %v2363 = vmax.f32 %v2299, %v2331
        %v2364 = vmax.f32 %v2300, %v2332
        %v2365 = vmax.f32 %v2301, %v2333
        %v2366 = vmax.f32 %v2302, %v2334
        %v2367 = vmax.f32 %v2303, %v2335
        %v2368 = vmax.f32 %v2304, %v2336
        %v2369 = vmax.f32 %v2305, %v2337
        %v2370 = vmax.f32 %v2306, %v2338
        %v2371 = vmax.f32 %v2307, %v2339
        %v2372 = vmax.f32 %v2308, %v2340
        %v2373 = vmax.f32 %v2309, %v2341
        %v2374 = vmax.f32 %v2310, %v2342
        %v2375 = vmax.f32 %v2311, %v2343
        %v2376 = vmax.f32 %v2312, %v2344
        %v2377 = vmax.f32 %v2313, %v2345
        %v2378 = vmax.f32 %v2314, %v2346
        %v2379 = vmax.f32 %v2315, %v2347
        %v2380 = vmax.f32 %v2316, %v2348
        %v2381 = vmax.f32 %v2317, %v2349
        %v2382 = vmax.f32 %v2318, %v2350
        %v2383 = vmax.f32 %v2319, %v2351
        %v2384 = vld [vmem:[%s1091] sm:$0xff]
        %v2385 = vld [vmem:[%s1091 + $0x8] sm:$0xff]
        %v2386 = vld [vmem:[%s1091 + $0x10] sm:$0xff]
        %v2387 = vld [vmem:[%s1091 + $0x18] sm:$0xff]
        %v2388 = vld [vmem:[%s1091 + $0x20] sm:$0xff]
        %v2389 = vld [vmem:[%s1091 + $0x28] sm:$0xff]
        %v2390 = vld [vmem:[%s1091 + $0x30] sm:$0xff]
        %v2391 = vld [vmem:[%s1091 + $0x38] sm:$0xff]
        %v2392 = vld [vmem:[%s1091 + $0x40] sm:$0xff]
        %v2393 = vld [vmem:[%s1091 + $0x48] sm:$0xff]
        %v2394 = vld [vmem:[%s1091 + $0x50] sm:$0xff]
        %v2395 = vld [vmem:[%s1091 + $0x58] sm:$0xff]
        %v2396 = vld [vmem:[%s1091 + $0x60] sm:$0xff]
        %v2397 = vld [vmem:[%s1091 + $0x68] sm:$0xff]
        %v2398 = vld [vmem:[%s1091 + $0x70] sm:$0xff]
        %v2399 = vld [vmem:[%s1091 + $0x78] sm:$0xff]
        %v2400 = vld [vmem:[%s1091 + $0x80] sm:$0xff]
        %v2401 = vld [vmem:[%s1091 + $0x88] sm:$0xff]
        %v2402 = vld [vmem:[%s1091 + $0x90] sm:$0xff]
        %v2403 = vld [vmem:[%s1091 + $0x98] sm:$0xff]
        %v2404 = vld [vmem:[%s1091 + $0xa0] sm:$0xff]
        %v2405 = vld [vmem:[%s1091 + $0xa8] sm:$0xff]
        %v2406 = vld [vmem:[%s1091 + $0xb0] sm:$0xff]
        %v2407 = vld [vmem:[%s1091 + $0xb8] sm:$0xff]
        %v2408 = vld [vmem:[%s1091 + $0xc0] sm:$0xff]
        %v2409 = vld [vmem:[%s1091 + $0xc8] sm:$0xff]
        %v2410 = vld [vmem:[%s1091 + $0xd0] sm:$0xff]
        %v2411 = vld [vmem:[%s1091 + $0xd8] sm:$0xff]
        %v2412 = vld [vmem:[%s1091 + $0xe0] sm:$0xff]
        %v2413 = vld [vmem:[%s1091 + $0xe8] sm:$0xff]
        %v2414 = vld [vmem:[%s1091 + $0xf0] sm:$0xff]
        %v2415 = vld [vmem:[%s1091 + $0xf8] sm:$0xff]
        %v2416 = vmax.f32 %v2352, %v2384
        %v2417 = vmax.f32 %v2353, %v2385
        %v2418 = vmax.f32 %v2354, %v2386
        %v2419 = vmax.f32 %v2355, %v2387
        %v2420 = vmax.f32 %v2356, %v2388
        %v2421 = vmax.f32 %v2357, %v2389
        %v2422 = vmax.f32 %v2358, %v2390
        %v2423 = vmax.f32 %v2359, %v2391
        %v2424 = vmax.f32 %v2360, %v2392
        %v2425 = vmax.f32 %v2361, %v2393
        %v2426 = vmax.f32 %v2362, %v2394
        %v2427 = vmax.f32 %v2363, %v2395
        %v2428 = vmax.f32 %v2364, %v2396
        %v2429 = vmax.f32 %v2365, %v2397
        %v2430 = vmax.f32 %v2366, %v2398
        %v2431 = vmax.f32 %v2367, %v2399
        %v2432 = vmax.f32 %v2368, %v2400
        %v2433 = vmax.f32 %v2369, %v2401
        %v2434 = vmax.f32 %v2370, %v2402
        %v2435 = vmax.f32 %v2371, %v2403
        %v2436 = vmax.f32 %v2372, %v2404
        %v2437 = vmax.f32 %v2373, %v2405
        %v2438 = vmax.f32 %v2374, %v2406
        %v2439 = vmax.f32 %v2375, %v2407
        %v2440 = vmax.f32 %v2376, %v2408
        %v2441 = vmax.f32 %v2377, %v2409
        %v2442 = vmax.f32 %v2378, %v2410
        %v2443 = vmax.f32 %v2379, %v2411
        %v2444 = vmax.f32 %v2380, %v2412
        %v2445 = vmax.f32 %v2381, %v2413
        %v2446 = vmax.f32 %v2382, %v2414
        %v2447 = vmax.f32 %v2383, %v2415
        %v2448 = vld [vmem:[%s1156] sm:$0xff]
        %v2449 = vld [vmem:[%s1156 + $0x8] sm:$0xff]
        %v2450 = vld [vmem:[%s1156 + $0x10] sm:$0xff]
        %v2451 = vld [vmem:[%s1156 + $0x18] sm:$0xff]
        %v2452 = vld [vmem:[%s1156 + $0x20] sm:$0xff]
        %v2453 = vld [vmem:[%s1156 + $0x28] sm:$0xff]
        %v2454 = vld [vmem:[%s1156 + $0x30] sm:$0xff]
        %v2455 = vld [vmem:[%s1156 + $0x38] sm:$0xff]
        %v2456 = vld [vmem:[%s1156 + $0x40] sm:$0xff]
        %v2457 = vld [vmem:[%s1156 + $0x48] sm:$0xff]
        %v2458 = vld [vmem:[%s1156 + $0x50] sm:$0xff]
        %v2459 = vld [vmem:[%s1156 + $0x58] sm:$0xff]
        %v2460 = vld [vmem:[%s1156 + $0x60] sm:$0xff]
        %v2461 = vld [vmem:[%s1156 + $0x68] sm:$0xff]
        %v2462 = vld [vmem:[%s1156 + $0x70] sm:$0xff]
        %v2463 = vld [vmem:[%s1156 + $0x78] sm:$0xff]
        %v2464 = vld [vmem:[%s1156 + $0x80] sm:$0xff]
        %v2465 = vld [vmem:[%s1156 + $0x88] sm:$0xff]
        %v2466 = vld [vmem:[%s1156 + $0x90] sm:$0xff]
        %v2467 = vld [vmem:[%s1156 + $0x98] sm:$0xff]
        %v2468 = vld [vmem:[%s1156 + $0xa0] sm:$0xff]
        %v2469 = vld [vmem:[%s1156 + $0xa8] sm:$0xff]
        %v2470 = vld [vmem:[%s1156 + $0xb0] sm:$0xff]
        %v2471 = vld [vmem:[%s1156 + $0xb8] sm:$0xff]
        %v2472 = vld [vmem:[%s1156 + $0xc0] sm:$0xff]
        %v2473 = vld [vmem:[%s1156 + $0xc8] sm:$0xff]
        %v2474 = vld [vmem:[%s1156 + $0xd0] sm:$0xff]
        %v2475 = vld [vmem:[%s1156 + $0xd8] sm:$0xff]
        %v2476 = vld [vmem:[%s1156 + $0xe0] sm:$0xff]
        %v2477 = vld [vmem:[%s1156 + $0xe8] sm:$0xff]
        %v2478 = vld [vmem:[%s1156 + $0xf0] sm:$0xff]
        %v2479 = vld [vmem:[%s1156 + $0xf8] sm:$0xff]
        %v2480 = vmax.f32 %v2416, %v2448
        %v2481 = vmax.f32 %v2417, %v2449
        %v2482 = vmax.f32 %v2418, %v2450
        %v2483 = vmax.f32 %v2419, %v2451
        %v2484 = vmax.f32 %v2420, %v2452
        %v2485 = vmax.f32 %v2421, %v2453
        %v2486 = vmax.f32 %v2422, %v2454
        %v2487 = vmax.f32 %v2423, %v2455
        %v2488 = vmax.f32 %v2424, %v2456
        %v2489 = vmax.f32 %v2425, %v2457
        %v2490 = vmax.f32 %v2426, %v2458
        %v2491 = vmax.f32 %v2427, %v2459
        %v2492 = vmax.f32 %v2428, %v2460
        %v2493 = vmax.f32 %v2429, %v2461
        %v2494 = vmax.f32 %v2430, %v2462
        %v2495 = vmax.f32 %v2431, %v2463
        %v2496 = vmax.f32 %v2432, %v2464
        %v2497 = vmax.f32 %v2433, %v2465
        %v2498 = vmax.f32 %v2434, %v2466
        %v2499 = vmax.f32 %v2435, %v2467
        %v2500 = vmax.f32 %v2436, %v2468
        %v2501 = vmax.f32 %v2437, %v2469
        %v2502 = vmax.f32 %v2438, %v2470
        %v2503 = vmax.f32 %v2439, %v2471
        %v2504 = vmax.f32 %v2440, %v2472
        %v2505 = vmax.f32 %v2441, %v2473
        %v2506 = vmax.f32 %v2442, %v2474
        %v2507 = vmax.f32 %v2443, %v2475
        %v2508 = vmax.f32 %v2444, %v2476
        %v2509 = vmax.f32 %v2445, %v2477
        %v2510 = vmax.f32 %v2446, %v2478
        %v2511 = vmax.f32 %v2447, %v2479
        %2512 = vst.msk [vmem:[#allocation3 + $0x2] sm:$0xff] %vm854, %v2480
        %2513 = vst.msk [vmem:[#allocation3 + $0xa] sm:$0xff] %vm854, %v2481
        %2514 = vst.msk [vmem:[#allocation3 + $0x1a] sm:$0xff] %vm854, %v2482
        %2515 = vst.msk [vmem:[#allocation3 + $0x22] sm:$0xff] %vm854, %v2483
        %2516 = vst.msk [vmem:[#allocation3 + $0x32] sm:$0xff] %vm854, %v2484
        %2517 = vst.msk [vmem:[#allocation3 + $0x3a] sm:$0xff] %vm854, %v2485
        %2518 = vst.msk [vmem:[#allocation3 + $0x4a] sm:$0xff] %vm854, %v2486
        %2519 = vst.msk [vmem:[#allocation3 + $0x52] sm:$0xff] %vm854, %v2487
        %2520 = vst.msk [vmem:[#allocation3 + $0x62] sm:$0xff] %vm854, %v2488
        %2521 = vst.msk [vmem:[#allocation3 + $0x6a] sm:$0xff] %vm854, %v2489
        %2522 = vst.msk [vmem:[#allocation3 + $0x7a] sm:$0xff] %vm854, %v2490
        %2523 = vst.msk [vmem:[#allocation3 + $0x82] sm:$0xff] %vm854, %v2491
        %2524 = vst.msk [vmem:[#allocation3 + $0x92] sm:$0xff] %vm854, %v2492
        %2525 = vst.msk [vmem:[#allocation3 + $0x9a] sm:$0xff] %vm854, %v2493
        %2526 = vst.msk [vmem:[#allocation3 + $0xaa] sm:$0xff] %vm854, %v2494
        %2527 = vst.msk [vmem:[#allocation3 + $0xb2] sm:$0xff] %vm854, %v2495
        %2528 = vst.msk [vmem:[#allocation3 + $0xc2] sm:$0xff] %vm854, %v2496
        %2529 = vst.msk [vmem:[#allocation3 + $0xca] sm:$0xff] %vm854, %v2497
        %2530 = vst.msk [vmem:[#allocation3 + $0xda] sm:$0xff] %vm854, %v2498
        %2531 = vst.msk [vmem:[#allocation3 + $0xe2] sm:$0xff] %vm854, %v2499
        %2532 = vst.msk [vmem:[#allocation3 + $0xf2] sm:$0xff] %vm854, %v2500
        %2533 = vst.msk [vmem:[#allocation3 + $0xfa] sm:$0xff] %vm854, %v2501
        %2534 = vst.msk [vmem:[#allocation3 + $0x10a] sm:$0xff] %vm854, %v2502
        %2535 = vst.msk [vmem:[#allocation3 + $0x112] sm:$0xff] %vm854, %v2503
        %2536 = vst.msk [vmem:[#allocation3 + $0x122] sm:$0xff] %vm854, %v2504
        %2537 = vst.msk [vmem:[#allocation3 + $0x12a] sm:$0xff] %vm854, %v2505
        %2538 = vst.msk [vmem:[#allocation3 + $0x13a] sm:$0xff] %vm854, %v2506
        %2539 = vst.msk [vmem:[#allocation3 + $0x142] sm:$0xff] %vm854, %v2507
        %2540 = vst.msk [vmem:[#allocation3 + $0x152] sm:$0xff] %vm854, %v2508
        %2541 = vst.msk [vmem:[#allocation3 + $0x15a] sm:$0xff] %vm854, %v2509
        %2542 = vst.msk [vmem:[#allocation3 + $0x16a] sm:$0xff] %vm854, %v2510
        %2543 = vst.msk [vmem:[#allocation3 + $0x172] sm:$0xff] %vm854, %v2511
        %v2544 = vld [vmem:[#allocation3] sm:$0xff]
        %v2545 = vld [vmem:[#allocation3 + $0x8] sm:$0xff]
        %v2546 = vld [vmem:[#allocation3 + $0x18] sm:$0xff]
        %v2547 = vld [vmem:[#allocation3 + $0x20] sm:$0xff]
        %v2548 = vld [vmem:[#allocation3 + $0x30] sm:$0xff]
        %v2549 = vld [vmem:[#allocation3 + $0x38] sm:$0xff]
        %v2550 = vld [vmem:[#allocation3 + $0x48] sm:$0xff]
        %v2551 = vld [vmem:[#allocation3 + $0x50] sm:$0xff]
        %v2552 = vld [vmem:[#allocation3 + $0x60] sm:$0xff]
        %v2553 = vld [vmem:[#allocation3 + $0x68] sm:$0xff]
        %v2554 = vld [vmem:[#allocation3 + $0x78] sm:$0xff]
        %v2555 = vld [vmem:[#allocation3 + $0x80] sm:$0xff]
        %v2556 = vld [vmem:[#allocation3 + $0x90] sm:$0xff]
        %v2557 = vld [vmem:[#allocation3 + $0x98] sm:$0xff]
        %v2558 = vld [vmem:[#allocation3 + $0xa8] sm:$0xff]
        %v2559 = vld [vmem:[#allocation3 + $0xb0] sm:$0xff]
        %v2560 = vld [vmem:[#allocation3 + $0xc0] sm:$0xff]
        %v2561 = vld [vmem:[#allocation3 + $0xc8] sm:$0xff]
        %v2562 = vld [vmem:[#allocation3 + $0xd8] sm:$0xff]
        %v2563 = vld [vmem:[#allocation3 + $0xe0] sm:$0xff]
        %v2564 = vld [vmem:[#allocation3 + $0xf0] sm:$0xff]
        %v2565 = vld [vmem:[#allocation3 + $0xf8] sm:$0xff]
        %v2566 = vld [vmem:[#allocation3 + $0x108] sm:$0xff]
        %v2567 = vld [vmem:[#allocation3 + $0x110] sm:$0xff]
        %v2568 = vld [vmem:[#allocation3 + $0x120] sm:$0xff]
        %v2569 = vld [vmem:[#allocation3 + $0x128] sm:$0xff]
        %v2570 = vld [vmem:[#allocation3 + $0x138] sm:$0xff]
        %v2571 = vld [vmem:[#allocation3 + $0x140] sm:$0xff]
        %v2572 = vld [vmem:[#allocation3 + $0x150] sm:$0xff]
        %v2573 = vld [vmem:[#allocation3 + $0x158] sm:$0xff]
        %v2574 = vld [vmem:[#allocation3 + $0x168] sm:$0xff]
        %v2575 = vld [vmem:[#allocation3 + $0x170] sm:$0xff]
        %v2576 = vld [vmem:[#allocation3 + $0x1] sm:$0xff]
        %v2577 = vld [vmem:[#allocation3 + $0x9] sm:$0xff]
        %v2578 = vld [vmem:[#allocation3 + $0x19] sm:$0xff]
        %v2579 = vld [vmem:[#allocation3 + $0x21] sm:$0xff]
        %v2580 = vld [vmem:[#allocation3 + $0x31] sm:$0xff]
        %v2581 = vld [vmem:[#allocation3 + $0x39] sm:$0xff]
        %v2582 = vld [vmem:[#allocation3 + $0x49] sm:$0xff]
        %v2583 = vld [vmem:[#allocation3 + $0x51] sm:$0xff]
        %v2584 = vld [vmem:[#allocation3 + $0x61] sm:$0xff]
        %v2585 = vld [vmem:[#allocation3 + $0x69] sm:$0xff]
        %v2586 = vld [vmem:[#allocation3 + $0x79] sm:$0xff]
        %v2587 = vld [vmem:[#allocation3 + $0x81] sm:$0xff]
        %v2588 = vld [vmem:[#allocation3 + $0x91] sm:$0xff]
        %v2589 = vld [vmem:[#allocation3 + $0x99] sm:$0xff]
        %v2590 = vld [vmem:[#allocation3 + $0xa9] sm:$0xff]
        %v2591 = vld [vmem:[#allocation3 + $0xb1] sm:$0xff]
        %v2592 = vld [vmem:[#allocation3 + $0xc1] sm:$0xff]
        %v2593 = vld [vmem:[#allocation3 + $0xc9] sm:$0xff]
        %v2594 = vld [vmem:[#allocation3 + $0xd9] sm:$0xff]
        %v2595 = vld [vmem:[#allocation3 + $0xe1] sm:$0xff]
        %v2596 = vld [vmem:[#allocation3 + $0xf1] sm:$0xff]
        %v2597 = vld [vmem:[#allocation3 + $0xf9] sm:$0xff]
        %v2598 = vld [vmem:[#allocation3 + $0x109] sm:$0xff]
        %v2599 = vld [vmem:[#allocation3 + $0x111] sm:$0xff]
        %v2600 = vld [vmem:[#allocation3 + $0x121] sm:$0xff]
        %v2601 = vld [vmem:[#allocation3 + $0x129] sm:$0xff]
        %v2602 = vld [vmem:[#allocation3 + $0x139] sm:$0xff]
        %v2603 = vld [vmem:[#allocation3 + $0x141] sm:$0xff]
        %v2604 = vld [vmem:[#allocation3 + $0x151] sm:$0xff]
        %v2605 = vld [vmem:[#allocation3 + $0x159] sm:$0xff]
        %v2606 = vld [vmem:[#allocation3 + $0x169] sm:$0xff]
        %v2607 = vld [vmem:[#allocation3 + $0x171] sm:$0xff]
        %v2608 = vmax.f32 %v2544, %v2576
        %v2609 = vmax.f32 %v2545, %v2577
        %v2610 = vmax.f32 %v2546, %v2578
        %v2611 = vmax.f32 %v2547, %v2579
        %v2612 = vmax.f32 %v2548, %v2580
        %v2613 = vmax.f32 %v2549, %v2581
        %v2614 = vmax.f32 %v2550, %v2582
        %v2615 = vmax.f32 %v2551, %v2583
        %v2616 = vmax.f32 %v2552, %v2584
        %v2617 = vmax.f32 %v2553, %v2585
        %v2618 = vmax.f32 %v2554, %v2586
        %v2619 = vmax.f32 %v2555, %v2587
        %v2620 = vmax.f32 %v2556, %v2588
        %v2621 = vmax.f32 %v2557, %v2589
        %v2622 = vmax.f32 %v2558, %v2590
        %v2623 = vmax.f32 %v2559, %v2591
        %v2624 = vmax.f32 %v2560, %v2592
        %v2625 = vmax.f32 %v2561, %v2593
        %v2626 = vmax.f32 %v2562, %v2594
        %v2627 = vmax.f32 %v2563, %v2595
        %v2628 = vmax.f32 %v2564, %v2596
        %v2629 = vmax.f32 %v2565, %v2597
        %v2630 = vmax.f32 %v2566, %v2598
        %v2631 = vmax.f32 %v2567, %v2599
        %v2632 = vmax.f32 %v2568, %v2600
        %v2633 = vmax.f32 %v2569, %v2601
        %v2634 = vmax.f32 %v2570, %v2602
        %v2635 = vmax.f32 %v2571, %v2603
        %v2636 = vmax.f32 %v2572, %v2604
        %v2637 = vmax.f32 %v2573, %v2605
        %v2638 = vmax.f32 %v2574, %v2606
        %v2639 = vmax.f32 %v2575, %v2607
        %v2640 = vld [vmem:[#allocation3 + $0x2] sm:$0xff]
        %v2641 = vld [vmem:[#allocation3 + $0xa] sm:$0xff]
        %v2642 = vld [vmem:[#allocation3 + $0x1a] sm:$0xff]
        %v2643 = vld [vmem:[#allocation3 + $0x22] sm:$0xff]
        %v2644 = vld [vmem:[#allocation3 + $0x32] sm:$0xff]
        %v2645 = vld [vmem:[#allocation3 + $0x3a] sm:$0xff]
        %v2646 = vld [vmem:[#allocation3 + $0x4a] sm:$0xff]
        %v2647 = vld [vmem:[#allocation3 + $0x52] sm:$0xff]
        %v2648 = vld [vmem:[#allocation3 + $0x62] sm:$0xff]
        %v2649 = vld [vmem:[#allocation3 + $0x6a] sm:$0xff]
        %v2650 = vld [vmem:[#allocation3 + $0x7a] sm:$0xff]
        %v2651 = vld [vmem:[#allocation3 + $0x82] sm:$0xff]
        %v2652 = vld [vmem:[#allocation3 + $0x92] sm:$0xff]
        %v2653 = vld [vmem:[#allocation3 + $0x9a] sm:$0xff]
        %v2654 = vld [vmem:[#allocation3 + $0xaa] sm:$0xff]
        %v2655 = vld [vmem:[#allocation3 + $0xb2] sm:$0xff]
        %v2656 = vld [vmem:[#allocation3 + $0xc2] sm:$0xff]
        %v2657 = vld [vmem:[#allocation3 + $0xca] sm:$0xff]
        %v2658 = vld [vmem:[#allocation3 + $0xda] sm:$0xff]
        %v2659 = vld [vmem:[#allocation3 + $0xe2] sm:$0xff]
        %v2660 = vld [vmem:[#allocation3 + $0xf2] sm:$0xff]
        %v2661 = vld [vmem:[#allocation3 + $0xfa] sm:$0xff]
        %v2662 = vld [vmem:[#allocation3 + $0x10a] sm:$0xff]
        %v2663 = vld [vmem:[#allocation3 + $0x112] sm:$0xff]
        %v2664 = vld [vmem:[#allocation3 + $0x122] sm:$0xff]
        %v2665 = vld [vmem:[#allocation3 + $0x12a] sm:$0xff]
        %v2666 = vld [vmem:[#allocation3 + $0x13a] sm:$0xff]
        %v2667 = vld [vmem:[#allocation3 + $0x142] sm:$0xff]
        %v2668 = vld [vmem:[#allocation3 + $0x152] sm:$0xff]
        %v2669 = vld [vmem:[#allocation3 + $0x15a] sm:$0xff]
        %v2670 = vld [vmem:[#allocation3 + $0x16a] sm:$0xff]
        %v2671 = vld [vmem:[#allocation3 + $0x172] sm:$0xff]
        %v2672 = vmax.f32 %v2608, %v2640
        %v2673 = vmax.f32 %v2609, %v2641
        %v2674 = vmax.f32 %v2610, %v2642
        %v2675 = vmax.f32 %v2611, %v2643
        %v2676 = vmax.f32 %v2612, %v2644
        %v2677 = vmax.f32 %v2613, %v2645
        %v2678 = vmax.f32 %v2614, %v2646
        %v2679 = vmax.f32 %v2615, %v2647
        %v2680 = vmax.f32 %v2616, %v2648
        %v2681 = vmax.f32 %v2617, %v2649
        %v2682 = vmax.f32 %v2618, %v2650
        %v2683 = vmax.f32 %v2619, %v2651
        %v2684 = vmax.f32 %v2620, %v2652
        %v2685 = vmax.f32 %v2621, %v2653
        %v2686 = vmax.f32 %v2622, %v2654
        %v2687 = vmax.f32 %v2623, %v2655
        %v2688 = vmax.f32 %v2624, %v2656
        %v2689 = vmax.f32 %v2625, %v2657
        %v2690 = vmax.f32 %v2626, %v2658
        %v2691 = vmax.f32 %v2627, %v2659
        %v2692 = vmax.f32 %v2628, %v2660
        %v2693 = vmax.f32 %v2629, %v2661
        %v2694 = vmax.f32 %v2630, %v2662
        %v2695 = vmax.f32 %v2631, %v2663
        %v2696 = vmax.f32 %v2632, %v2664
        %v2697 = vmax.f32 %v2633, %v2665
        %v2698 = vmax.f32 %v2634, %v2666
        %v2699 = vmax.f32 %v2635, %v2667
        %v2700 = vmax.f32 %v2636, %v2668
        %v2701 = vmax.f32 %v2637, %v2669
        %v2702 = vmax.f32 %v2638, %v2670
        %v2703 = vmax.f32 %v2639, %v2671
        %v2704 = vld [vmem:[#allocation3 + $0x3] sm:$0xff]
        %v2705 = vld [vmem:[#allocation3 + $0xb] sm:$0xff]
        %v2706 = vld [vmem:[#allocation3 + $0x1b] sm:$0xff]
        %v2707 = vld [vmem:[#allocation3 + $0x23] sm:$0xff]
        %v2708 = vld [vmem:[#allocation3 + $0x33] sm:$0xff]
        %v2709 = vld [vmem:[#allocation3 + $0x3b] sm:$0xff]
        %v2710 = vld [vmem:[#allocation3 + $0x4b] sm:$0xff]
        %v2711 = vld [vmem:[#allocation3 + $0x53] sm:$0xff]
        %v2712 = vld [vmem:[#allocation3 + $0x63] sm:$0xff]
        %v2713 = vld [vmem:[#allocation3 + $0x6b] sm:$0xff]
        %v2714 = vld [vmem:[#allocation3 + $0x7b] sm:$0xff]
        %v2715 = vld [vmem:[#allocation3 + $0x83] sm:$0xff]
        %v2716 = vld [vmem:[#allocation3 + $0x93] sm:$0xff]
        %v2717 = vld [vmem:[#allocation3 + $0x9b] sm:$0xff]
        %v2718 = vld [vmem:[#allocation3 + $0xab] sm:$0xff]
        %v2719 = vld [vmem:[#allocation3 + $0xb3] sm:$0xff]
        %v2720 = vld [vmem:[#allocation3 + $0xc3] sm:$0xff]
        %v2721 = vld [vmem:[#allocation3 + $0xcb] sm:$0xff]
        %v2722 = vld [vmem:[#allocation3 + $0xdb] sm:$0xff]
        %v2723 = vld [vmem:[#allocation3 + $0xe3] sm:$0xff]
        %v2724 = vld [vmem:[#allocation3 + $0xf3] sm:$0xff]
        %v2725 = vld [vmem:[#allocation3 + $0xfb] sm:$0xff]
        %v2726 = vld [vmem:[#allocation3 + $0x10b] sm:$0xff]
        %v2727 = vld [vmem:[#allocation3 + $0x113] sm:$0xff]
        %v2728 = vld [vmem:[#allocation3 + $0x123] sm:$0xff]
        %v2729 = vld [vmem:[#allocation3 + $0x12b] sm:$0xff]
        %v2730 = vld [vmem:[#allocation3 + $0x13b] sm:$0xff]
        %v2731 = vld [vmem:[#allocation3 + $0x143] sm:$0xff]
        %v2732 = vld [vmem:[#allocation3 + $0x153] sm:$0xff]
        %v2733 = vld [vmem:[#allocation3 + $0x15b] sm:$0xff]
        %v2734 = vld [vmem:[#allocation3 + $0x16b] sm:$0xff]
        %v2735 = vld [vmem:[#allocation3 + $0x173] sm:$0xff]
        %v2736 = vmax.f32 %v2672, %v2704
        %v2737 = vmax.f32 %v2673, %v2705
        %v2738 = vmax.f32 %v2674, %v2706
        %v2739 = vmax.f32 %v2675, %v2707
        %v2740 = vmax.f32 %v2676, %v2708
        %v2741 = vmax.f32 %v2677, %v2709
        %v2742 = vmax.f32 %v2678, %v2710
        %v2743 = vmax.f32 %v2679, %v2711
        %v2744 = vmax.f32 %v2680, %v2712
        %v2745 = vmax.f32 %v2681, %v2713
        %v2746 = vmax.f32 %v2682, %v2714
        %v2747 = vmax.f32 %v2683, %v2715
        %v2748 = vmax.f32 %v2684, %v2716
        %v2749 = vmax.f32 %v2685, %v2717
        %v2750 = vmax.f32 %v2686, %v2718
        %v2751 = vmax.f32 %v2687, %v2719
        %v2752 = vmax.f32 %v2688, %v2720
        %v2753 = vmax.f32 %v2689, %v2721
        %v2754 = vmax.f32 %v2690, %v2722
        %v2755 = vmax.f32 %v2691, %v2723
        %v2756 = vmax.f32 %v2692, %v2724
        %v2757 = vmax.f32 %v2693, %v2725
        %v2758 = vmax.f32 %v2694, %v2726
        %v2759 = vmax.f32 %v2695, %v2727
        %v2760 = vmax.f32 %v2696, %v2728
        %v2761 = vmax.f32 %v2697, %v2729
        %v2762 = vmax.f32 %v2698, %v2730
        %v2763 = vmax.f32 %v2699, %v2731
        %v2764 = vmax.f32 %v2700, %v2732
        %v2765 = vmax.f32 %v2701, %v2733
        %v2766 = vmax.f32 %v2702, %v2734
        %v2767 = vmax.f32 %v2703, %v2735
        %v2768 = vld [vmem:[#allocation3 + $0x4] sm:$0xff]
        %v2769 = vld [vmem:[#allocation3 + $0xc] sm:$0xff]
        %v2770 = vld [vmem:[#allocation3 + $0x1c] sm:$0xff]
        %v2771 = vld [vmem:[#allocation3 + $0x24] sm:$0xff]
        %v2772 = vld [vmem:[#allocation3 + $0x34] sm:$0xff]
        %v2773 = vld [vmem:[#allocation3 + $0x3c] sm:$0xff]
        %v2774 = vld [vmem:[#allocation3 + $0x4c] sm:$0xff]
        %v2775 = vld [vmem:[#allocation3 + $0x54] sm:$0xff]
        %v2776 = vld [vmem:[#allocation3 + $0x64] sm:$0xff]
        %v2777 = vld [vmem:[#allocation3 + $0x6c] sm:$0xff]
        %v2778 = vld [vmem:[#allocation3 + $0x7c] sm:$0xff]
        %v2779 = vld [vmem:[#allocation3 + $0x84] sm:$0xff]
        %v2780 = vld [vmem:[#allocation3 + $0x94] sm:$0xff]
        %v2781 = vld [vmem:[#allocation3 + $0x9c] sm:$0xff]
        %v2782 = vld [vmem:[#allocation3 + $0xac] sm:$0xff]
        %v2783 = vld [vmem:[#allocation3 + $0xb4] sm:$0xff]
        %v2784 = vld [vmem:[#allocation3 + $0xc4] sm:$0xff]
        %v2785 = vld [vmem:[#allocation3 + $0xcc] sm:$0xff]
        %v2786 = vld [vmem:[#allocation3 + $0xdc] sm:$0xff]
        %v2787 = vld [vmem:[#allocation3 + $0xe4] sm:$0xff]
        %v2788 = vld [vmem:[#allocation3 + $0xf4] sm:$0xff]
        %v2789 = vld [vmem:[#allocation3 + $0xfc] sm:$0xff]
        %v2790 = vld [vmem:[#allocation3 + $0x10c] sm:$0xff]
        %v2791 = vld [vmem:[#allocation3 + $0x114] sm:$0xff]
        %v2792 = vld [vmem:[#allocation3 + $0x124] sm:$0xff]
        %v2793 = vld [vmem:[#allocation3 + $0x12c] sm:$0xff]
        %v2794 = vld [vmem:[#allocation3 + $0x13c] sm:$0xff]
        %v2795 = vld [vmem:[#allocation3 + $0x144] sm:$0xff]
        %v2796 = vld [vmem:[#allocation3 + $0x154] sm:$0xff]
        %v2797 = vld [vmem:[#allocation3 + $0x15c] sm:$0xff]
        %v2798 = vld [vmem:[#allocation3 + $0x16c] sm:$0xff]
        %v2799 = vld [vmem:[#allocation3 + $0x174] sm:$0xff]
        %v2800 = vmax.f32 %v2736, %v2768
        %v2801 = vmax.f32 %v2737, %v2769
        %v2802 = vmax.f32 %v2738, %v2770
        %v2803 = vmax.f32 %v2739, %v2771
        %v2804 = vmax.f32 %v2740, %v2772
        %v2805 = vmax.f32 %v2741, %v2773
        %v2806 = vmax.f32 %v2742, %v2774
        %v2807 = vmax.f32 %v2743, %v2775
        %v2808 = vmax.f32 %v2744, %v2776
        %v2809 = vmax.f32 %v2745, %v2777
        %v2810 = vmax.f32 %v2746, %v2778
        %v2811 = vmax.f32 %v2747, %v2779
        %v2812 = vmax.f32 %v2748, %v2780
        %v2813 = vmax.f32 %v2749, %v2781
        %v2814 = vmax.f32 %v2750, %v2782
        %v2815 = vmax.f32 %v2751, %v2783
        %v2816 = vmax.f32 %v2752, %v2784
        %v2817 = vmax.f32 %v2753, %v2785
        %v2818 = vmax.f32 %v2754, %v2786
        %v2819 = vmax.f32 %v2755, %v2787
        %v2820 = vmax.f32 %v2756, %v2788
        %v2821 = vmax.f32 %v2757, %v2789
        %v2822 = vmax.f32 %v2758, %v2790
        %v2823 = vmax.f32 %v2759, %v2791
        %v2824 = vmax.f32 %v2760, %v2792
        %v2825 = vmax.f32 %v2761, %v2793
        %v2826 = vmax.f32 %v2762, %v2794
        %v2827 = vmax.f32 %v2763, %v2795
        %v2828 = vmax.f32 %v2764, %v2796
        %v2829 = vmax.f32 %v2765, %v2797
        %v2830 = vmax.f32 %v2766, %v2798
        %v2831 = vmax.f32 %v2767, %v2799
        %s2832 = scalar_lea.vmem [#allocation10], 4
        %v2833 = vld [vmem:[%s2832] sm:$0x3]
        %v2835 = vsel %vm854, %v2800, 0
        %v2838 = vsel %vm854, %v2801, 0
        %v2841 = vsel %vm854, %v2802, 0
        %v2844 = vsel %vm854, %v2803, 0
        %v2847 = vsel %vm854, %v2804, 0
        %v2850 = vsel %vm854, %v2805, 0
        %v2853 = vsel %vm854, %v2806, 0
        %v2856 = vsel %vm854, %v2807, 0
        %v2859 = vsel %vm854, %v2808, 0
        %v2862 = vsel %vm854, %v2809, 0
        %v2865 = vsel %vm854, %v2810, 0
        %v2868 = vsel %vm854, %v2811, 0
        %v2871 = vsel %vm854, %v2812, 0
        %v2874 = vsel %vm854, %v2813, 0
        %v2877 = vsel %vm854, %v2814, 0
        %v2880 = vsel %vm854, %v2815, 0
        %v2883 = vsel %vm854, %v2816, 0
        %v2886 = vsel %vm854, %v2817, 0
        %v2889 = vsel %vm854, %v2818, 0
        %v2892 = vsel %vm854, %v2819, 0
        %v2895 = vsel %vm854, %v2820, 0
        %v2898 = vsel %vm854, %v2821, 0
        %v2901 = vsel %vm854, %v2822, 0
        %v2904 = vsel %vm854, %v2823, 0
        %v2907 = vsel %vm854, %v2824, 0
        %v2910 = vsel %vm854, %v2825, 0
        %v2913 = vsel %vm854, %v2826, 0
        %v2916 = vsel %vm854, %v2827, 0
        %v2919 = vsel %vm854, %v2828, 0
        %v2922 = vsel %vm854, %v2829, 0
        %v2925 = vsel %vm854, %v2830, 0
        %v2928 = vsel %vm854, %v2831, 0
        %v2931 = vsel %vm1639, %v2833, 0
        %2933 = vmatprep.subr.mxu0 0.0
        %2934 = vmatpush1.msra.mxu0 %v2931
        %2935 = vmatprep.subr.mxu0 0.0
        %2936 = vmatpush1.msra.mxu0 0.0
        %2937 = vmatprep.subr.mxu0 0.0
        %2938 = vmatpush1.msra.mxu0 0.0
        %2939 = vmatprep.subr.mxu0 0.0
        %2940 = vmatpush1.msra.mxu0 0.0
        %2941 = vmatprep.subr.mxu0 0.0
        %2942 = vmatpush1.msra.mxu0 0.0
        %2943 = vmatprep.subr.mxu0 0.0
        %2944 = vmatpush1.msra.mxu0 0.0
        %2945 = vmatprep.subr.mxu0 0.0
        %2946 = vmatpush1.msra.mxu0 0.0
        %2947 = vmatprep.subr.mxu0 0.0
        %2948 = vmatpush1.msra.mxu0 0.0
        %2949 = vmatprep.subr.mxu0 0.0
        %2950 = vmatpush1.msra.mxu0 0.0
        %2951 = vmatprep.subr.mxu0 0.0
        %2952 = vmatpush1.msra.mxu0 0.0
        %2953 = vmatprep.subr.mxu0 0.0
        %2954 = vmatpush1.msra.mxu0 0.0
        %2955 = vmatprep.subr.mxu0 0.0
        %2956 = vmatpush1.msra.mxu0 0.0
        %2957 = vmatprep.subr.mxu0 0.0
        %2958 = vmatpush1.msra.mxu0 0.0
        %2959 = vmatprep.subr.mxu0 0.0
        %2960 = vmatpush1.msra.mxu0 0.0
        %2961 = vmatprep.subr.mxu0 0.0
        %2962 = vmatpush1.msra.mxu0 0.0
        %2963 = vmatprep.subr.mxu0 0.0
        %2964 = vmatpush1.msra.mxu0 0.0
        %2965 = vmatprep.subr.mxu0 0.0
        %2966 = vmatpush1.msra.mxu0 0.0
        %2967 = vmatprep.subr.mxu0 0.0
        %2968 = vmatpush1.msra.mxu0 0.0
        %2969 = vmatprep.subr.mxu0 0.0
        %2970 = vmatpush1.msra.mxu0 0.0
        %2971 = vmatprep.subr.mxu0 0.0
        %2972 = vmatpush1.msra.mxu0 0.0
        %2973 = vmatprep.subr.mxu0 0.0
        %2974 = vmatpush1.msra.mxu0 0.0
        %2975 = vmatprep.subr.mxu0 0.0
        %2976 = vmatpush1.msra.mxu0 0.0
        %2977 = vmatprep.subr.mxu0 0.0
        %2978 = vmatpush1.msra.mxu0 0.0
        %2979 = vmatprep.subr.mxu0 0.0
        %2980 = vmatpush1.msra.mxu0 0.0
        %2981 = vmatprep.subr.mxu0 0.0
        %2982 = vmatpush1.msra.mxu0 0.0
        %2983 = vmatprep.subr.mxu0 0.0
        %2984 = vmatpush1.msra.mxu0 0.0
        %2985 = vmatprep.subr.mxu0 0.0
        %2986 = vmatpush1.msra.mxu0 0.0
        %2987 = vmatprep.subr.mxu0 0.0
        %2988 = vmatpush1.msra.mxu0 0.0
        %2989 = vmatprep.subr.mxu0 0.0
        %2990 = vmatpush1.msra.mxu0 0.0
        %2991 = vmatprep.subr.mxu0 0.0
        %2992 = vmatpush1.msra.mxu0 0.0
        %2993 = vmatprep.subr.mxu0 0.0
        %2994 = vmatpush1.msra.mxu0 0.0
        %2995 = vmatprep.subr.mxu0 0.0
        %2996 = vmatpush1.msra.mxu0 0.0
        %2997 = vmatprep.mubr.f32.mxu0 0.0
        %2998 = vmatmul.mubr.f32.gmra.mrb[0].mxu0 %v2835
        %v2999 = vpop.f32.mrb[0].mxu0
        %v3000 = vadd.f32 0.0, %v2999
        %v3001 = vpop.f32.mrb[0].mxu0
        %3002 = vmatprep.mubr.f32.mxu0 0.0
        %3003 = vmatmul.mubr.f32.gmra.mrb[0].mxu0 %v2838
        %v3004 = vpop.f32.mrb[0].mxu0
        %v3005 = vadd.f32 0.0, %v3004
        %v3006 = vpop.f32.mrb[0].mxu0
        %3007 = vmatprep.mubr.f32.mxu0 0.0
        %3008 = vmatmul.mubr.f32.gmra.mrb[0].mxu0 %v2841
        %v3009 = vpop.f32.mrb[0].mxu0
        %v3010 = vadd.f32 0.0, %v3009
        %v3011 = vpop.f32.mrb[0].mxu0
        %3012 = vmatprep.mubr.f32.mxu0 0.0
        %3013 = vmatmul.mubr.f32.gmra.mrb[0].mxu0 %v2844
        %v3014 = vpop.f32.mrb[0].mxu0
        %v3015 = vadd.f32 0.0, %v3014
        %v3016 = vpop.f32.mrb[0].mxu0
        %3017 = vmatprep.mubr.f32.mxu0 0.0
        %3018 = vmatmul.mubr.f32.gmra.mrb[0].mxu0 %v2847
        %v3019 = vpop.f32.mrb[0].mxu0
        %v3020 = vadd.f32 0.0, %v3019
        %v3021 = vpop.f32.mrb[0].mxu0
        %3022 = vmatprep.mubr.f32.mxu0 0.0
        %3023 = vmatmul.mubr.f32.gmra.mrb[0].mxu0 %v2850
        %v3024 = vpop.f32.mrb[0].mxu0
        %v3025 = vadd.f32 0.0, %v3024
        %v3026 = vpop.f32.mrb[0].mxu0
        %3027 = vmatprep.mubr.f32.mxu0 0.0
        %3028 = vmatmul.mubr.f32.gmra.mrb[0].mxu0 %v2853
        %v3029 = vpop.f32.mrb[0].mxu0
        %v3030 = vadd.f32 0.0, %v3029
        %v3031 = vpop.f32.mrb[0].mxu0
        %3032 = vmatprep.mubr.f32.mxu0 0.0
        %3033 = vmatmul.mubr.f32.gmra.mrb[0].mxu0 %v2856
        %v3034 = vpop.f32.mrb[0].mxu0
        %v3035 = vadd.f32 0.0, %v3034
        %v3036 = vpop.f32.mrb[0].mxu0
        %3037 = vmatprep.mubr.f32.mxu0 0.0
        %3038 = vmatmul.mubr.f32.gmra.mrb[0].mxu0 %v2859
        %v3039 = vpop.f32.mrb[0].mxu0
        %v3040 = vadd.f32 0.0, %v3039
        %v3041 = vpop.f32.mrb[0].mxu0
        %3042 = vmatprep.mubr.f32.mxu0 0.0
        %3043 = vmatmul.mubr.f32.gmra.mrb[0].mxu0 %v2862
        %v3044 = vpop.f32.mrb[0].mxu0
        %v3045 = vadd.f32 0.0, %v3044
        %v3046 = vpop.f32.mrb[0].mxu0
        %3047 = vmatprep.mubr.f32.mxu0 0.0
        %3048 = vmatmul.mubr.f32.gmra.mrb[0].mxu0 %v2865
        %v3049 = vpop.f32.mrb[0].mxu0
        %v3050 = vadd.f32 0.0, %v3049
        %v3051 = vpop.f32.mrb[0].mxu0
        %3052 = vmatprep.mubr.f32.mxu0 0.0
        %3053 = vmatmul.mubr.f32.gmra.mrb[0].mxu0 %v2868
        %v3054 = vpop.f32.mrb[0].mxu0
        %v3055 = vadd.f32 0.0, %v3054
        %v3056 = vpop.f32.mrb[0].mxu0
        %3057 = vmatprep.mubr.f32.mxu0 0.0
        %3058 = vmatmul.mubr.f32.gmra.mrb[0].mxu0 %v2871
        %v3059 = vpop.f32.mrb[0].mxu0
        %v3060 = vadd.f32 0.0, %v3059
        %v3061 = vpop.f32.mrb[0].mxu0
        %3062 = vmatprep.mubr.f32.mxu0 0.0
        %3063 = vmatmul.mubr.f32.gmra.mrb[0].mxu0 %v2874
        %v3064 = vpop.f32.mrb[0].mxu0
        %v3065 = vadd.f32 0.0, %v3064
        %v3066 = vpop.f32.mrb[0].mxu0
        %3067 = vmatprep.mubr.f32.mxu0 0.0
        %3068 = vmatmul.mubr.f32.gmra.mrb[0].mxu0 %v2877
        %v3069 = vpop.f32.mrb[0].mxu0
        %v3070 = vadd.f32 0.0, %v3069
        %v3071 = vpop.f32.mrb[0].mxu0
        %3072 = vmatprep.mubr.f32.mxu0 0.0
        %3073 = vmatmul.mubr.f32.gmra.mrb[0].mxu0 %v2880
        %v3074 = vpop.f32.mrb[0].mxu0
        %v3075 = vadd.f32 0.0, %v3074
        %v3076 = vpop.f32.mrb[0].mxu0
        %3077 = vmatprep.mubr.f32.mxu0 0.0
        %3078 = vmatmul.mubr.f32.gmra.mrb[0].mxu0 %v2883
        %v3079 = vpop.f32.mrb[0].mxu0
        %v3080 = vadd.f32 0.0, %v3079
        %v3081 = vpop.f32.mrb[0].mxu0
        %3082 = vmatprep.mubr.f32.mxu0 0.0
        %3083 = vmatmul.mubr.f32.gmra.mrb[0].mxu0 %v2886
        %v3084 = vpop.f32.mrb[0].mxu0
        %v3085 = vadd.f32 0.0, %v3084
        %v3086 = vpop.f32.mrb[0].mxu0
        %3087 = vmatprep.mubr.f32.mxu0 0.0
        %3088 = vmatmul.mubr.f32.gmra.mrb[0].mxu0 %v2889
        %v3089 = vpop.f32.mrb[0].mxu0
        %v3090 = vadd.f32 0.0, %v3089
        %v3091 = vpop.f32.mrb[0].mxu0
        %3092 = vmatprep.mubr.f32.mxu0 0.0
        %3093 = vmatmul.mubr.f32.gmra.mrb[0].mxu0 %v2892
        %v3094 = vpop.f32.mrb[0].mxu0
        %v3095 = vadd.f32 0.0, %v3094
        %v3096 = vpop.f32.mrb[0].mxu0
        %3097 = vmatprep.mubr.f32.mxu0 0.0
        %3098 = vmatmul.mubr.f32.gmra.mrb[0].mxu0 %v2895
        %v3099 = vpop.f32.mrb[0].mxu0
        %v3100 = vadd.f32 0.0, %v3099
        %v3101 = vpop.f32.mrb[0].mxu0
        %3102 = vmatprep.mubr.f32.mxu0 0.0
        %3103 = vmatmul.mubr.f32.gmra.mrb[0].mxu0 %v2898
        %v3104 = vpop.f32.mrb[0].mxu0
        %v3105 = vadd.f32 0.0, %v3104
        %v3106 = vpop.f32.mrb[0].mxu0
        %3107 = vmatprep.mubr.f32.mxu0 0.0
        %3108 = vmatmul.mubr.f32.gmra.mrb[0].mxu0 %v2901
        %v3109 = vpop.f32.mrb[0].mxu0
        %v3110 = vadd.f32 0.0, %v3109
        %v3111 = vpop.f32.mrb[0].mxu0
        %3112 = vmatprep.mubr.f32.mxu0 0.0
        %3113 = vmatmul.mubr.f32.gmra.mrb[0].mxu0 %v2904
        %v3114 = vpop.f32.mrb[0].mxu0
        %v3115 = vadd.f32 0.0, %v3114
        %v3116 = vpop.f32.mrb[0].mxu0
        %3117 = vmatprep.mubr.f32.mxu0 0.0
        %3118 = vmatmul.mubr.f32.gmra.mrb[0].mxu0 %v2907
        %v3119 = vpop.f32.mrb[0].mxu0
        %v3120 = vadd.f32 0.0, %v3119
        %v3121 = vpop.f32.mrb[0].mxu0
        %3122 = vmatprep.mubr.f32.mxu0 0.0
        %3123 = vmatmul.mubr.f32.gmra.mrb[0].mxu0 %v2910
        %v3124 = vpop.f32.mrb[0].mxu0
        %v3125 = vadd.f32 0.0, %v3124
        %v3126 = vpop.f32.mrb[0].mxu0
        %3127 = vmatprep.mubr.f32.mxu0 0.0
        %3128 = vmatmul.mubr.f32.gmra.mrb[0].mxu0 %v2913
        %v3129 = vpop.f32.mrb[0].mxu0
        %v3130 = vadd.f32 0.0, %v3129
        %v3131 = vpop.f32.mrb[0].mxu0
        %3132 = vmatprep.mubr.f32.mxu0 0.0
        %3133 = vmatmul.mubr.f32.gmra.mrb[0].mxu0 %v2916
        %v3134 = vpop.f32.mrb[0].mxu0
        %v3135 = vadd.f32 0.0, %v3134
        %v3136 = vpop.f32.mrb[0].mxu0
        %3137 = vmatprep.mubr.f32.mxu0 0.0
        %3138 = vmatmul.mubr.f32.gmra.mrb[0].mxu0 %v2919
        %v3139 = vpop.f32.mrb[0].mxu0
        %v3140 = vadd.f32 0.0, %v3139
        %v3141 = vpop.f32.mrb[0].mxu0
        %3142 = vmatprep.mubr.f32.mxu0 0.0
        %3143 = vmatmul.mubr.f32.gmra.mrb[0].mxu0 %v2922
        %v3144 = vpop.f32.mrb[0].mxu0
        %v3145 = vadd.f32 0.0, %v3144
        %v3146 = vpop.f32.mrb[0].mxu0
        %3147 = vmatprep.mubr.f32.mxu0 0.0
        %3148 = vmatmul.mubr.f32.gmra.mrb[0].mxu0 %v2925
        %v3149 = vpop.f32.mrb[0].mxu0
        %v3150 = vadd.f32 0.0, %v3149
        %v3151 = vpop.f32.mrb[0].mxu0
        %3152 = vmatprep.mubr.f32.mxu0 0.0
        %3153 = vmatmul.mubr.f32.gmra.mrb[0].mxu0 %v2928
        %v3154 = vpop.f32.mrb[0].mxu0
        %v3155 = vadd.f32 0.0, %v3154
        %v3156 = vpop.f32.mrb[0].mxu0
        %3157 = vdwg.mxu0
        %v3158 = vadd.f32 %v2034, %v3000
        %v3159 = vadd.f32 %v2039, %v3005
        %v3160 = vadd.f32 %v2044, %v3010
        %v3161 = vadd.f32 %v2049, %v3015
        %v3162 = vadd.f32 %v2054, %v3020
        %v3163 = vadd.f32 %v2059, %v3025
        %v3164 = vadd.f32 %v2064, %v3030
        %v3165 = vadd.f32 %v2069, %v3035
        %v3166 = vadd.f32 %v2074, %v3040
        %v3167 = vadd.f32 %v2079, %v3045
        %v3168 = vadd.f32 %v2084, %v3050
        %v3169 = vadd.f32 %v2089, %v3055
        %v3170 = vadd.f32 %v2094, %v3060
        %v3171 = vadd.f32 %v2099, %v3065
        %v3172 = vadd.f32 %v2104, %v3070
        %v3173 = vadd.f32 %v2109, %v3075
        %v3174 = vadd.f32 %v2114, %v3080
        %v3175 = vadd.f32 %v2119, %v3085
        %v3176 = vadd.f32 %v2124, %v3090
        %v3177 = vadd.f32 %v2129, %v3095
        %v3178 = vadd.f32 %v2134, %v3100
        %v3179 = vadd.f32 %v2139, %v3105
        %v3180 = vadd.f32 %v2144, %v3110
        %v3181 = vadd.f32 %v2149, %v3115
        %v3182 = vadd.f32 %v2154, %v3120
        %v3183 = vadd.f32 %v2159, %v3125
        %v3184 = vadd.f32 %v2164, %v3130
        %v3185 = vadd.f32 %v2169, %v3135
        %v3186 = vadd.f32 %v2174, %v3140
        %v3187 = vadd.f32 %v2179, %v3145
        %v3188 = vadd.f32 %v2184, %v3150
        %v3189 = vadd.f32 %v2189, %v3155
        %3190 = vst.msk [vmem:[%s897] sm:$0xff] %vm854, %v2800
        %3191 = vst.msk [vmem:[%s897 + $0x8] sm:$0xff] %vm854, %v2801
        %3192 = vst.msk [vmem:[%s897 + $0x10] sm:$0xff] %vm854, %v2802
        %3193 = vst.msk [vmem:[%s897 + $0x18] sm:$0xff] %vm854, %v2803
        %3194 = vst.msk [vmem:[%s897 + $0x20] sm:$0xff] %vm854, %v2804
        %3195 = vst.msk [vmem:[%s897 + $0x28] sm:$0xff] %vm854, %v2805
        %3196 = vst.msk [vmem:[%s897 + $0x30] sm:$0xff] %vm854, %v2806
        %3197 = vst.msk [vmem:[%s897 + $0x38] sm:$0xff] %vm854, %v2807
        %3198 = vst.msk [vmem:[%s897 + $0x40] sm:$0xff] %vm854, %v2808
        %3199 = vst.msk [vmem:[%s897 + $0x48] sm:$0xff] %vm854, %v2809
        %3200 = vst.msk [vmem:[%s897 + $0x50] sm:$0xff] %vm854, %v2810
        %3201 = vst.msk [vmem:[%s897 + $0x58] sm:$0xff] %vm854, %v2811
        %3202 = vst.msk [vmem:[%s897 + $0x60] sm:$0xff] %vm854, %v2812
        %3203 = vst.msk [vmem:[%s897 + $0x68] sm:$0xff] %vm854, %v2813
        %3204 = vst.msk [vmem:[%s897 + $0x70] sm:$0xff] %vm854, %v2814
        %3205 = vst.msk [vmem:[%s897 + $0x78] sm:$0xff] %vm854, %v2815
        %3206 = vst.msk [vmem:[%s897 + $0x80] sm:$0xff] %vm854, %v2816
        %3207 = vst.msk [vmem:[%s897 + $0x88] sm:$0xff] %vm854, %v2817
        %3208 = vst.msk [vmem:[%s897 + $0x90] sm:$0xff] %vm854, %v2818
        %3209 = vst.msk [vmem:[%s897 + $0x98] sm:$0xff] %vm854, %v2819
        %3210 = vst.msk [vmem:[%s897 + $0xa0] sm:$0xff] %vm854, %v2820
        %3211 = vst.msk [vmem:[%s897 + $0xa8] sm:$0xff] %vm854, %v2821
        %3212 = vst.msk [vmem:[%s897 + $0xb0] sm:$0xff] %vm854, %v2822
        %3213 = vst.msk [vmem:[%s897 + $0xb8] sm:$0xff] %vm854, %v2823
        %3214 = vst.msk [vmem:[%s897 + $0xc0] sm:$0xff] %vm854, %v2824
        %3215 = vst.msk [vmem:[%s897 + $0xc8] sm:$0xff] %vm854, %v2825
        %3216 = vst.msk [vmem:[%s897 + $0xd0] sm:$0xff] %vm854, %v2826
        %3217 = vst.msk [vmem:[%s897 + $0xd8] sm:$0xff] %vm854, %v2827
        %3218 = vst.msk [vmem:[%s897 + $0xe0] sm:$0xff] %vm854, %v2828
        %3219 = vst.msk [vmem:[%s897 + $0xe8] sm:$0xff] %vm854, %v2829
        %3220 = vst.msk [vmem:[%s897 + $0xf0] sm:$0xff] %vm854, %v2830
        %3221 = vst.msk [vmem:[%s897 + $0xf8] sm:$0xff] %vm854, %v2831
        %v3222 = vld [vmem:[#allocation2] sm:$0xff]
        %v3223 = vld [vmem:[#allocation2 + $0x8] sm:$0xff]
        %v3224 = vld [vmem:[#allocation2 + $0x10] sm:$0xff]
        %v3225 = vld [vmem:[#allocation2 + $0x18] sm:$0xff]
        %v3226 = vld [vmem:[#allocation2 + $0x20] sm:$0xff]
        %v3227 = vld [vmem:[#allocation2 + $0x28] sm:$0xff]
        %v3228 = vld [vmem:[#allocation2 + $0x30] sm:$0xff]
        %v3229 = vld [vmem:[#allocation2 + $0x38] sm:$0xff]
        %v3230 = vld [vmem:[#allocation2 + $0x40] sm:$0xff]
        %v3231 = vld [vmem:[#allocation2 + $0x48] sm:$0xff]
        %v3232 = vld [vmem:[#allocation2 + $0x50] sm:$0xff]
        %v3233 = vld [vmem:[#allocation2 + $0x58] sm:$0xff]
        %v3234 = vld [vmem:[#allocation2 + $0x60] sm:$0xff]
        %v3235 = vld [vmem:[#allocation2 + $0x68] sm:$0xff]
        %v3236 = vld [vmem:[#allocation2 + $0x70] sm:$0xff]
        %v3237 = vld [vmem:[#allocation2 + $0x78] sm:$0xff]
        %v3238 = vld [vmem:[#allocation2 + $0x80] sm:$0xff]
        %v3239 = vld [vmem:[#allocation2 + $0x88] sm:$0xff]
        %v3240 = vld [vmem:[#allocation2 + $0x90] sm:$0xff]
        %v3241 = vld [vmem:[#allocation2 + $0x98] sm:$0xff]
        %v3242 = vld [vmem:[#allocation2 + $0xa0] sm:$0xff]
        %v3243 = vld [vmem:[#allocation2 + $0xa8] sm:$0xff]
        %v3244 = vld [vmem:[#allocation2 + $0xb0] sm:$0xff]
        %v3245 = vld [vmem:[#allocation2 + $0xb8] sm:$0xff]
        %v3246 = vld [vmem:[#allocation2 + $0xc0] sm:$0xff]
        %v3247 = vld [vmem:[#allocation2 + $0xc8] sm:$0xff]
        %v3248 = vld [vmem:[#allocation2 + $0xd0] sm:$0xff]
        %v3249 = vld [vmem:[#allocation2 + $0xd8] sm:$0xff]
        %v3250 = vld [vmem:[#allocation2 + $0xe0] sm:$0xff]
        %v3251 = vld [vmem:[#allocation2 + $0xe8] sm:$0xff]
        %v3252 = vld [vmem:[#allocation2 + $0xf0] sm:$0xff]
        %v3253 = vld [vmem:[#allocation2 + $0xf8] sm:$0xff]
        %v3254 = vld [vmem:[%s962] sm:$0xff]
        %v3255 = vld [vmem:[%s962 + $0x8] sm:$0xff]
        %v3256 = vld [vmem:[%s962 + $0x10] sm:$0xff]
        %v3257 = vld [vmem:[%s962 + $0x18] sm:$0xff]
        %v3258 = vld [vmem:[%s962 + $0x20] sm:$0xff]
        %v3259 = vld [vmem:[%s962 + $0x28] sm:$0xff]
        %v3260 = vld [vmem:[%s962 + $0x30] sm:$0xff]
        %v3261 = vld [vmem:[%s962 + $0x38] sm:$0xff]
        %v3262 = vld [vmem:[%s962 + $0x40] sm:$0xff]
        %v3263 = vld [vmem:[%s962 + $0x48] sm:$0xff]
        %v3264 = vld [vmem:[%s962 + $0x50] sm:$0xff]
        %v3265 = vld [vmem:[%s962 + $0x58] sm:$0xff]
        %v3266 = vld [vmem:[%s962 + $0x60] sm:$0xff]
        %v3267 = vld [vmem:[%s962 + $0x68] sm:$0xff]
        %v3268 = vld [vmem:[%s962 + $0x70] sm:$0xff]
        %v3269 = vld [vmem:[%s962 + $0x78] sm:$0xff]
        %v3270 = vld [vmem:[%s962 + $0x80] sm:$0xff]
        %v3271 = vld [vmem:[%s962 + $0x88] sm:$0xff]
        %v3272 = vld [vmem:[%s962 + $0x90] sm:$0xff]
        %v3273 = vld [vmem:[%s962 + $0x98] sm:$0xff]
        %v3274 = vld [vmem:[%s962 + $0xa0] sm:$0xff]
        %v3275 = vld [vmem:[%s962 + $0xa8] sm:$0xff]
        %v3276 = vld [vmem:[%s962 + $0xb0] sm:$0xff]
        %v3277 = vld [vmem:[%s962 + $0xb8] sm:$0xff]
        %v3278 = vld [vmem:[%s962 + $0xc0] sm:$0xff]
        %v3279 = vld [vmem:[%s962 + $0xc8] sm:$0xff]
        %v3280 = vld [vmem:[%s962 + $0xd0] sm:$0xff]
        %v3281 = vld [vmem:[%s962 + $0xd8] sm:$0xff]
        %v3282 = vld [vmem:[%s962 + $0xe0] sm:$0xff]
        %v3283 = vld [vmem:[%s962 + $0xe8] sm:$0xff]
        %v3284 = vld [vmem:[%s962 + $0xf0] sm:$0xff]
        %v3285 = vld [vmem:[%s962 + $0xf8] sm:$0xff]
        %v3286 = vmax.f32 %v3222, %v3254
        %v3287 = vmax.f32 %v3223, %v3255
        %v3288 = vmax.f32 %v3224, %v3256
        %v3289 = vmax.f32 %v3225, %v3257
        %v3290 = vmax.f32 %v3226, %v3258
        %v3291 = vmax.f32 %v3227, %v3259
        %v3292 = vmax.f32 %v3228, %v3260
        %v3293 = vmax.f32 %v3229, %v3261
        %v3294 = vmax.f32 %v3230, %v3262
        %v3295 = vmax.f32 %v3231, %v3263
        %v3296 = vmax.f32 %v3232, %v3264
        %v3297 = vmax.f32 %v3233, %v3265
        %v3298 = vmax.f32 %v3234, %v3266
        %v3299 = vmax.f32 %v3235, %v3267
        %v3300 = vmax.f32 %v3236, %v3268
        %v3301 = vmax.f32 %v3237, %v3269
        %v3302 = vmax.f32 %v3238, %v3270
        %v3303 = vmax.f32 %v3239, %v3271
        %v3304 = vmax.f32 %v3240, %v3272
        %v3305 = vmax.f32 %v3241, %v3273
        %v3306 = vmax.f32 %v3242, %v3274
        %v3307 = vmax.f32 %v3243, %v3275
        %v3308 = vmax.f32 %v3244, %v3276
        %v3309 = vmax.f32 %v3245, %v3277
        %v3310 = vmax.f32 %v3246, %v3278
        %v3311 = vmax.f32 %v3247, %v3279
        %v3312 = vmax.f32 %v3248, %v3280
        %v3313 = vmax.f32 %v3249, %v3281
        %v3314 = vmax.f32 %v3250, %v3282
        %v3315 = vmax.f32 %v3251, %v3283
        %v3316 = vmax.f32 %v3252, %v3284
        %v3317 = vmax.f32 %v3253, %v3285
        %v3318 = vld [vmem:[%s897] sm:$0xff]
        %v3319 = vld [vmem:[%s897 + $0x8] sm:$0xff]
        %v3320 = vld [vmem:[%s897 + $0x10] sm:$0xff]
        %v3321 = vld [vmem:[%s897 + $0x18] sm:$0xff]
        %v3322 = vld [vmem:[%s897 + $0x20] sm:$0xff]
        %v3323 = vld [vmem:[%s897 + $0x28] sm:$0xff]
        %v3324 = vld [vmem:[%s897 + $0x30] sm:$0xff]
        %v3325 = vld [vmem:[%s897 + $0x38] sm:$0xff]
        %v3326 = vld [vmem:[%s897 + $0x40] sm:$0xff]
        %v3327 = vld [vmem:[%s897 + $0x48] sm:$0xff]
        %v3328 = vld [vmem:[%s897 + $0x50] sm:$0xff]
        %v3329 = vld [vmem:[%s897 + $0x58] sm:$0xff]
        %v3330 = vld [vmem:[%s897 + $0x60] sm:$0xff]
        %v3331 = vld [vmem:[%s897 + $0x68] sm:$0xff]
        %v3332 = vld [vmem:[%s897 + $0x70] sm:$0xff]
        %v3333 = vld [vmem:[%s897 + $0x78] sm:$0xff]
        %v3334 = vld [vmem:[%s897 + $0x80] sm:$0xff]
        %v3335 = vld [vmem:[%s897 + $0x88] sm:$0xff]
        %v3336 = vld [vmem:[%s897 + $0x90] sm:$0xff]
        %v3337 = vld [vmem:[%s897 + $0x98] sm:$0xff]
        %v3338 = vld [vmem:[%s897 + $0xa0] sm:$0xff]
        %v3339 = vld [vmem:[%s897 + $0xa8] sm:$0xff]
        %v3340 = vld [vmem:[%s897 + $0xb0] sm:$0xff]
        %v3341 = vld [vmem:[%s897 + $0xb8] sm:$0xff]
        %v3342 = vld [vmem:[%s897 + $0xc0] sm:$0xff]
        %v3343 = vld [vmem:[%s897 + $0xc8] sm:$0xff]
        %v3344 = vld [vmem:[%s897 + $0xd0] sm:$0xff]
        %v3345 = vld [vmem:[%s897 + $0xd8] sm:$0xff]
        %v3346 = vld [vmem:[%s897 + $0xe0] sm:$0xff]
        %v3347 = vld [vmem:[%s897 + $0xe8] sm:$0xff]
        %v3348 = vld [vmem:[%s897 + $0xf0] sm:$0xff]
        %v3349 = vld [vmem:[%s897 + $0xf8] sm:$0xff]
        %v3350 = vmax.f32 %v3286, %v3318
        %v3351 = vmax.f32 %v3287, %v3319
        %v3352 = vmax.f32 %v3288, %v3320
        %v3353 = vmax.f32 %v3289, %v3321
        %v3354 = vmax.f32 %v3290, %v3322
        %v3355 = vmax.f32 %v3291, %v3323
        %v3356 = vmax.f32 %v3292, %v3324
        %v3357 = vmax.f32 %v3293, %v3325
        %v3358 = vmax.f32 %v3294, %v3326
        %v3359 = vmax.f32 %v3295, %v3327
        %v3360 = vmax.f32 %v3296, %v3328
        %v3361 = vmax.f32 %v3297, %v3329
        %v3362 = vmax.f32 %v3298, %v3330
        %v3363 = vmax.f32 %v3299, %v3331
        %v3364 = vmax.f32 %v3300, %v3332
        %v3365 = vmax.f32 %v3301, %v3333
        %v3366 = vmax.f32 %v3302, %v3334
        %v3367 = vmax.f32 %v3303, %v3335
        %v3368 = vmax.f32 %v3304, %v3336
        %v3369 = vmax.f32 %v3305, %v3337
        %v3370 = vmax.f32 %v3306, %v3338
        %v3371 = vmax.f32 %v3307, %v3339
        %v3372 = vmax.f32 %v3308, %v3340
        %v3373 = vmax.f32 %v3309, %v3341
        %v3374 = vmax.f32 %v3310, %v3342
        %v3375 = vmax.f32 %v3311, %v3343
        %v3376 = vmax.f32 %v3312, %v3344
        %v3377 = vmax.f32 %v3313, %v3345
        %v3378 = vmax.f32 %v3314, %v3346
        %v3379 = vmax.f32 %v3315, %v3347
        %v3380 = vmax.f32 %v3316, %v3348
        %v3381 = vmax.f32 %v3317, %v3349
        %v3382 = vld [vmem:[%s1091] sm:$0xff]
        %v3383 = vld [vmem:[%s1091 + $0x8] sm:$0xff]
        %v3384 = vld [vmem:[%s1091 + $0x10] sm:$0xff]
        %v3385 = vld [vmem:[%s1091 + $0x18] sm:$0xff]
        %v3386 = vld [vmem:[%s1091 + $0x20] sm:$0xff]
        %v3387 = vld [vmem:[%s1091 + $0x28] sm:$0xff]
        %v3388 = vld [vmem:[%s1091 + $0x30] sm:$0xff]
        %v3389 = vld [vmem:[%s1091 + $0x38] sm:$0xff]
        %v3390 = vld [vmem:[%s1091 + $0x40] sm:$0xff]
        %v3391 = vld [vmem:[%s1091 + $0x48] sm:$0xff]
        %v3392 = vld [vmem:[%s1091 + $0x50] sm:$0xff]
        %v3393 = vld [vmem:[%s1091 + $0x58] sm:$0xff]
        %v3394 = vld [vmem:[%s1091 + $0x60] sm:$0xff]
        %v3395 = vld [vmem:[%s1091 + $0x68] sm:$0xff]
        %v3396 = vld [vmem:[%s1091 + $0x70] sm:$0xff]
        %v3397 = vld [vmem:[%s1091 + $0x78] sm:$0xff]
        %v3398 = vld [vmem:[%s1091 + $0x80] sm:$0xff]
        %v3399 = vld [vmem:[%s1091 + $0x88] sm:$0xff]
        %v3400 = vld [vmem:[%s1091 + $0x90] sm:$0xff]
        %v3401 = vld [vmem:[%s1091 + $0x98] sm:$0xff]
        %v3402 = vld [vmem:[%s1091 + $0xa0] sm:$0xff]
        %v3403 = vld [vmem:[%s1091 + $0xa8] sm:$0xff]
        %v3404 = vld [vmem:[%s1091 + $0xb0] sm:$0xff]
        %v3405 = vld [vmem:[%s1091 + $0xb8] sm:$0xff]
        %v3406 = vld [vmem:[%s1091 + $0xc0] sm:$0xff]
        %v3407 = vld [vmem:[%s1091 + $0xc8] sm:$0xff]
        %v3408 = vld [vmem:[%s1091 + $0xd0] sm:$0xff]
        %v3409 = vld [vmem:[%s1091 + $0xd8] sm:$0xff]
        %v3410 = vld [vmem:[%s1091 + $0xe0] sm:$0xff]
        %v3411 = vld [vmem:[%s1091 + $0xe8] sm:$0xff]
        %v3412 = vld [vmem:[%s1091 + $0xf0] sm:$0xff]
        %v3413 = vld [vmem:[%s1091 + $0xf8] sm:$0xff]
        %v3414 = vmax.f32 %v3350, %v3382
        %v3415 = vmax.f32 %v3351, %v3383
        %v3416 = vmax.f32 %v3352, %v3384
        %v3417 = vmax.f32 %v3353, %v3385
        %v3418 = vmax.f32 %v3354, %v3386
        %v3419 = vmax.f32 %v3355, %v3387
        %v3420 = vmax.f32 %v3356, %v3388
        %v3421 = vmax.f32 %v3357, %v3389
        %v3422 = vmax.f32 %v3358, %v3390
        %v3423 = vmax.f32 %v3359, %v3391
        %v3424 = vmax.f32 %v3360, %v3392
        %v3425 = vmax.f32 %v3361, %v3393
        %v3426 = vmax.f32 %v3362, %v3394
        %v3427 = vmax.f32 %v3363, %v3395
        %v3428 = vmax.f32 %v3364, %v3396
        %v3429 = vmax.f32 %v3365, %v3397
        %v3430 = vmax.f32 %v3366, %v3398
        %v3431 = vmax.f32 %v3367, %v3399
        %v3432 = vmax.f32 %v3368, %v3400
        %v3433 = vmax.f32 %v3369, %v3401
        %v3434 = vmax.f32 %v3370, %v3402
        %v3435 = vmax.f32 %v3371, %v3403
        %v3436 = vmax.f32 %v3372, %v3404
        %v3437 = vmax.f32 %v3373, %v3405
        %v3438 = vmax.f32 %v3374, %v3406
        %v3439 = vmax.f32 %v3375, %v3407
        %v3440 = vmax.f32 %v3376, %v3408
        %v3441 = vmax.f32 %v3377, %v3409
        %v3442 = vmax.f32 %v3378, %v3410
        %v3443 = vmax.f32 %v3379, %v3411
        %v3444 = vmax.f32 %v3380, %v3412
        %v3445 = vmax.f32 %v3381, %v3413
        %v3446 = vld [vmem:[%s1156] sm:$0xff]
        %v3447 = vld [vmem:[%s1156 + $0x8] sm:$0xff]
        %v3448 = vld [vmem:[%s1156 + $0x10] sm:$0xff]
        %v3449 = vld [vmem:[%s1156 + $0x18] sm:$0xff]
        %v3450 = vld [vmem:[%s1156 + $0x20] sm:$0xff]
        %v3451 = vld [vmem:[%s1156 + $0x28] sm:$0xff]
        %v3452 = vld [vmem:[%s1156 + $0x30] sm:$0xff]
        %v3453 = vld [vmem:[%s1156 + $0x38] sm:$0xff]
        %v3454 = vld [vmem:[%s1156 + $0x40] sm:$0xff]
        %v3455 = vld [vmem:[%s1156 + $0x48] sm:$0xff]
        %v3456 = vld [vmem:[%s1156 + $0x50] sm:$0xff]
        %v3457 = vld [vmem:[%s1156 + $0x58] sm:$0xff]
        %v3458 = vld [vmem:[%s1156 + $0x60] sm:$0xff]
        %v3459 = vld [vmem:[%s1156 + $0x68] sm:$0xff]
        %v3460 = vld [vmem:[%s1156 + $0x70] sm:$0xff]
        %v3461 = vld [vmem:[%s1156 + $0x78] sm:$0xff]
        %v3462 = vld [vmem:[%s1156 + $0x80] sm:$0xff]
        %v3463 = vld [vmem:[%s1156 + $0x88] sm:$0xff]
        %v3464 = vld [vmem:[%s1156 + $0x90] sm:$0xff]
        %v3465 = vld [vmem:[%s1156 + $0x98] sm:$0xff]
        %v3466 = vld [vmem:[%s1156 + $0xa0] sm:$0xff]
        %v3467 = vld [vmem:[%s1156 + $0xa8] sm:$0xff]
        %v3468 = vld [vmem:[%s1156 + $0xb0] sm:$0xff]
        %v3469 = vld [vmem:[%s1156 + $0xb8] sm:$0xff]
        %v3470 = vld [vmem:[%s1156 + $0xc0] sm:$0xff]
        %v3471 = vld [vmem:[%s1156 + $0xc8] sm:$0xff]
        %v3472 = vld [vmem:[%s1156 + $0xd0] sm:$0xff]
        %v3473 = vld [vmem:[%s1156 + $0xd8] sm:$0xff]
        %v3474 = vld [vmem:[%s1156 + $0xe0] sm:$0xff]
        %v3475 = vld [vmem:[%s1156 + $0xe8] sm:$0xff]
        %v3476 = vld [vmem:[%s1156 + $0xf0] sm:$0xff]
        %v3477 = vld [vmem:[%s1156 + $0xf8] sm:$0xff]
        %v3478 = vmax.f32 %v3414, %v3446
        %v3479 = vmax.f32 %v3415, %v3447
        %v3480 = vmax.f32 %v3416, %v3448
        %v3481 = vmax.f32 %v3417, %v3449
        %v3482 = vmax.f32 %v3418, %v3450
        %v3483 = vmax.f32 %v3419, %v3451
        %v3484 = vmax.f32 %v3420, %v3452
        %v3485 = vmax.f32 %v3421, %v3453
        %v3486 = vmax.f32 %v3422, %v3454
        %v3487 = vmax.f32 %v3423, %v3455
        %v3488 = vmax.f32 %v3424, %v3456
        %v3489 = vmax.f32 %v3425, %v3457
        %v3490 = vmax.f32 %v3426, %v3458
        %v3491 = vmax.f32 %v3427, %v3459
        %v3492 = vmax.f32 %v3428, %v3460
        %v3493 = vmax.f32 %v3429, %v3461
        %v3494 = vmax.f32 %v3430, %v3462
        %v3495 = vmax.f32 %v3431, %v3463
        %v3496 = vmax.f32 %v3432, %v3464
        %v3497 = vmax.f32 %v3433, %v3465
        %v3498 = vmax.f32 %v3434, %v3466
        %v3499 = vmax.f32 %v3435, %v3467
        %v3500 = vmax.f32 %v3436, %v3468
        %v3501 = vmax.f32 %v3437, %v3469
        %v3502 = vmax.f32 %v3438, %v3470
        %v3503 = vmax.f32 %v3439, %v3471
        %v3504 = vmax.f32 %v3440, %v3472
        %v3505 = vmax.f32 %v3441, %v3473
        %v3506 = vmax.f32 %v3442, %v3474
        %v3507 = vmax.f32 %v3443, %v3475
        %v3508 = vmax.f32 %v3444, %v3476
        %v3509 = vmax.f32 %v3445, %v3477
        %3510 = vst.msk [vmem:[#allocation3 + $0x2] sm:$0xff] %vm854, %v3478
        %3511 = vst.msk [vmem:[#allocation3 + $0xa] sm:$0xff] %vm854, %v3479
        %3512 = vst.msk [vmem:[#allocation3 + $0x1a] sm:$0xff] %vm854, %v3480
        %3513 = vst.msk [vmem:[#allocation3 + $0x22] sm:$0xff] %vm854, %v3481
        %3514 = vst.msk [vmem:[#allocation3 + $0x32] sm:$0xff] %vm854, %v3482
        %3515 = vst.msk [vmem:[#allocation3 + $0x3a] sm:$0xff] %vm854, %v3483
        %3516 = vst.msk [vmem:[#allocation3 + $0x4a] sm:$0xff] %vm854, %v3484
        %3517 = vst.msk [vmem:[#allocation3 + $0x52] sm:$0xff] %vm854, %v3485
        %3518 = vst.msk [vmem:[#allocation3 + $0x62] sm:$0xff] %vm854, %v3486
        %3519 = vst.msk [vmem:[#allocation3 + $0x6a] sm:$0xff] %vm854, %v3487
        %3520 = vst.msk [vmem:[#allocation3 + $0x7a] sm:$0xff] %vm854, %v3488
        %3521 = vst.msk [vmem:[#allocation3 + $0x82] sm:$0xff] %vm854, %v3489
        %3522 = vst.msk [vmem:[#allocation3 + $0x92] sm:$0xff] %vm854, %v3490
        %3523 = vst.msk [vmem:[#allocation3 + $0x9a] sm:$0xff] %vm854, %v3491
        %3524 = vst.msk [vmem:[#allocation3 + $0xaa] sm:$0xff] %vm854, %v3492
        %3525 = vst.msk [vmem:[#allocation3 + $0xb2] sm:$0xff] %vm854, %v3493
        %3526 = vst.msk [vmem:[#allocation3 + $0xc2] sm:$0xff] %vm854, %v3494
        %3527 = vst.msk [vmem:[#allocation3 + $0xca] sm:$0xff] %vm854, %v3495
        %3528 = vst.msk [vmem:[#allocation3 + $0xda] sm:$0xff] %vm854, %v3496
        %3529 = vst.msk [vmem:[#allocation3 + $0xe2] sm:$0xff] %vm854, %v3497
        %3530 = vst.msk [vmem:[#allocation3 + $0xf2] sm:$0xff] %vm854, %v3498
        %3531 = vst.msk [vmem:[#allocation3 + $0xfa] sm:$0xff] %vm854, %v3499
        %3532 = vst.msk [vmem:[#allocation3 + $0x10a] sm:$0xff] %vm854, %v3500
        %3533 = vst.msk [vmem:[#allocation3 + $0x112] sm:$0xff] %vm854, %v3501
        %3534 = vst.msk [vmem:[#allocation3 + $0x122] sm:$0xff] %vm854, %v3502
        %3535 = vst.msk [vmem:[#allocation3 + $0x12a] sm:$0xff] %vm854, %v3503
        %3536 = vst.msk [vmem:[#allocation3 + $0x13a] sm:$0xff] %vm854, %v3504
        %3537 = vst.msk [vmem:[#allocation3 + $0x142] sm:$0xff] %vm854, %v3505
        %3538 = vst.msk [vmem:[#allocation3 + $0x152] sm:$0xff] %vm854, %v3506
        %3539 = vst.msk [vmem:[#allocation3 + $0x15a] sm:$0xff] %vm854, %v3507
        %3540 = vst.msk [vmem:[#allocation3 + $0x16a] sm:$0xff] %vm854, %v3508
        %3541 = vst.msk [vmem:[#allocation3 + $0x172] sm:$0xff] %vm854, %v3509
        %v3542 = vld [vmem:[#allocation3] sm:$0xff]
        %v3543 = vld [vmem:[#allocation3 + $0x8] sm:$0xff]
        %v3544 = vld [vmem:[#allocation3 + $0x18] sm:$0xff]
        %v3545 = vld [vmem:[#allocation3 + $0x20] sm:$0xff]
        %v3546 = vld [vmem:[#allocation3 + $0x30] sm:$0xff]
        %v3547 = vld [vmem:[#allocation3 + $0x38] sm:$0xff]
        %v3548 = vld [vmem:[#allocation3 + $0x48] sm:$0xff]
        %v3549 = vld [vmem:[#allocation3 + $0x50] sm:$0xff]
        %v3550 = vld [vmem:[#allocation3 + $0x60] sm:$0xff]
        %v3551 = vld [vmem:[#allocation3 + $0x68] sm:$0xff]
        %v3552 = vld [vmem:[#allocation3 + $0x78] sm:$0xff]
        %v3553 = vld [vmem:[#allocation3 + $0x80] sm:$0xff]
        %v3554 = vld [vmem:[#allocation3 + $0x90] sm:$0xff]
        %v3555 = vld [vmem:[#allocation3 + $0x98] sm:$0xff]
        %v3556 = vld [vmem:[#allocation3 + $0xa8] sm:$0xff]
        %v3557 = vld [vmem:[#allocation3 + $0xb0] sm:$0xff]
        %v3558 = vld [vmem:[#allocation3 + $0xc0] sm:$0xff]
        %v3559 = vld [vmem:[#allocation3 + $0xc8] sm:$0xff]
        %v3560 = vld [vmem:[#allocation3 + $0xd8] sm:$0xff]
        %v3561 = vld [vmem:[#allocation3 + $0xe0] sm:$0xff]
        %v3562 = vld [vmem:[#allocation3 + $0xf0] sm:$0xff]
        %v3563 = vld [vmem:[#allocation3 + $0xf8] sm:$0xff]
        %v3564 = vld [vmem:[#allocation3 + $0x108] sm:$0xff]
        %v3565 = vld [vmem:[#allocation3 + $0x110] sm:$0xff]
        %v3566 = vld [vmem:[#allocation3 + $0x120] sm:$0xff]
        %v3567 = vld [vmem:[#allocation3 + $0x128] sm:$0xff]
        %v3568 = vld [vmem:[#allocation3 + $0x138] sm:$0xff]
        %v3569 = vld [vmem:[#allocation3 + $0x140] sm:$0xff]
        %v3570 = vld [vmem:[#allocation3 + $0x150] sm:$0xff]
        %v3571 = vld [vmem:[#allocation3 + $0x158] sm:$0xff]
        %v3572 = vld [vmem:[#allocation3 + $0x168] sm:$0xff]
        %v3573 = vld [vmem:[#allocation3 + $0x170] sm:$0xff]
        %v3574 = vld [vmem:[#allocation3 + $0x1] sm:$0xff]
        %v3575 = vld [vmem:[#allocation3 + $0x9] sm:$0xff]
        %v3576 = vld [vmem:[#allocation3 + $0x19] sm:$0xff]
        %v3577 = vld [vmem:[#allocation3 + $0x21] sm:$0xff]
        %v3578 = vld [vmem:[#allocation3 + $0x31] sm:$0xff]
        %v3579 = vld [vmem:[#allocation3 + $0x39] sm:$0xff]
        %v3580 = vld [vmem:[#allocation3 + $0x49] sm:$0xff]
        %v3581 = vld [vmem:[#allocation3 + $0x51] sm:$0xff]
        %v3582 = vld [vmem:[#allocation3 + $0x61] sm:$0xff]
        %v3583 = vld [vmem:[#allocation3 + $0x69] sm:$0xff]
        %v3584 = vld [vmem:[#allocation3 + $0x79] sm:$0xff]
        %v3585 = vld [vmem:[#allocation3 + $0x81] sm:$0xff]
        %v3586 = vld [vmem:[#allocation3 + $0x91] sm:$0xff]
        %v3587 = vld [vmem:[#allocation3 + $0x99] sm:$0xff]
        %v3588 = vld [vmem:[#allocation3 + $0xa9] sm:$0xff]
        %v3589 = vld [vmem:[#allocation3 + $0xb1] sm:$0xff]
        %v3590 = vld [vmem:[#allocation3 + $0xc1] sm:$0xff]
        %v3591 = vld [vmem:[#allocation3 + $0xc9] sm:$0xff]
        %v3592 = vld [vmem:[#allocation3 + $0xd9] sm:$0xff]
        %v3593 = vld [vmem:[#allocation3 + $0xe1] sm:$0xff]
        %v3594 = vld [vmem:[#allocation3 + $0xf1] sm:$0xff]
        %v3595 = vld [vmem:[#allocation3 + $0xf9] sm:$0xff]
        %v3596 = vld [vmem:[#allocation3 + $0x109] sm:$0xff]
        %v3597 = vld [vmem:[#allocation3 + $0x111] sm:$0xff]
        %v3598 = vld [vmem:[#allocation3 + $0x121] sm:$0xff]
        %v3599 = vld [vmem:[#allocation3 + $0x129] sm:$0xff]
        %v3600 = vld [vmem:[#allocation3 + $0x139] sm:$0xff]
        %v3601 = vld [vmem:[#allocation3 + $0x141] sm:$0xff]
        %v3602 = vld [vmem:[#allocation3 + $0x151] sm:$0xff]
        %v3603 = vld [vmem:[#allocation3 + $0x159] sm:$0xff]
        %v3604 = vld [vmem:[#allocation3 + $0x169] sm:$0xff]
        %v3605 = vld [vmem:[#allocation3 + $0x171] sm:$0xff]
        %v3606 = vmax.f32 %v3542, %v3574
        %v3607 = vmax.f32 %v3543, %v3575
        %v3608 = vmax.f32 %v3544, %v3576
        %v3609 = vmax.f32 %v3545, %v3577
        %v3610 = vmax.f32 %v3546, %v3578
        %v3611 = vmax.f32 %v3547, %v3579
        %v3612 = vmax.f32 %v3548, %v3580
        %v3613 = vmax.f32 %v3549, %v3581
        %v3614 = vmax.f32 %v3550, %v3582
        %v3615 = vmax.f32 %v3551, %v3583
        %v3616 = vmax.f32 %v3552, %v3584
        %v3617 = vmax.f32 %v3553, %v3585
        %v3618 = vmax.f32 %v3554, %v3586
        %v3619 = vmax.f32 %v3555, %v3587
        %v3620 = vmax.f32 %v3556, %v3588
        %v3621 = vmax.f32 %v3557, %v3589
        %v3622 = vmax.f32 %v3558, %v3590
        %v3623 = vmax.f32 %v3559, %v3591
        %v3624 = vmax.f32 %v3560, %v3592
        %v3625 = vmax.f32 %v3561, %v3593
        %v3626 = vmax.f32 %v3562, %v3594
        %v3627 = vmax.f32 %v3563, %v3595
        %v3628 = vmax.f32 %v3564, %v3596
        %v3629 = vmax.f32 %v3565, %v3597
        %v3630 = vmax.f32 %v3566, %v3598
        %v3631 = vmax.f32 %v3567, %v3599
        %v3632 = vmax.f32 %v3568, %v3600
        %v3633 = vmax.f32 %v3569, %v3601
        %v3634 = vmax.f32 %v3570, %v3602
        %v3635 = vmax.f32 %v3571, %v3603
        %v3636 = vmax.f32 %v3572, %v3604
        %v3637 = vmax.f32 %v3573, %v3605
        %v3638 = vld [vmem:[#allocation3 + $0x2] sm:$0xff]
        %v3639 = vld [vmem:[#allocation3 + $0xa] sm:$0xff]
        %v3640 = vld [vmem:[#allocation3 + $0x1a] sm:$0xff]
        %v3641 = vld [vmem:[#allocation3 + $0x22] sm:$0xff]
        %v3642 = vld [vmem:[#allocation3 + $0x32] sm:$0xff]
        %v3643 = vld [vmem:[#allocation3 + $0x3a] sm:$0xff]
        %v3644 = vld [vmem:[#allocation3 + $0x4a] sm:$0xff]
        %v3645 = vld [vmem:[#allocation3 + $0x52] sm:$0xff]
        %v3646 = vld [vmem:[#allocation3 + $0x62] sm:$0xff]
        %v3647 = vld [vmem:[#allocation3 + $0x6a] sm:$0xff]
        %v3648 = vld [vmem:[#allocation3 + $0x7a] sm:$0xff]
        %v3649 = vld [vmem:[#allocation3 + $0x82] sm:$0xff]
        %v3650 = vld [vmem:[#allocation3 + $0x92] sm:$0xff]
        %v3651 = vld [vmem:[#allocation3 + $0x9a] sm:$0xff]
        %v3652 = vld [vmem:[#allocation3 + $0xaa] sm:$0xff]
        %v3653 = vld [vmem:[#allocation3 + $0xb2] sm:$0xff]
        %v3654 = vld [vmem:[#allocation3 + $0xc2] sm:$0xff]
        %v3655 = vld [vmem:[#allocation3 + $0xca] sm:$0xff]
        %v3656 = vld [vmem:[#allocation3 + $0xda] sm:$0xff]
        %v3657 = vld [vmem:[#allocation3 + $0xe2] sm:$0xff]
        %v3658 = vld [vmem:[#allocation3 + $0xf2] sm:$0xff]
        %v3659 = vld [vmem:[#allocation3 + $0xfa] sm:$0xff]
        %v3660 = vld [vmem:[#allocation3 + $0x10a] sm:$0xff]
        %v3661 = vld [vmem:[#allocation3 + $0x112] sm:$0xff]
        %v3662 = vld [vmem:[#allocation3 + $0x122] sm:$0xff]
        %v3663 = vld [vmem:[#allocation3 + $0x12a] sm:$0xff]
        %v3664 = vld [vmem:[#allocation3 + $0x13a] sm:$0xff]
        %v3665 = vld [vmem:[#allocation3 + $0x142] sm:$0xff]
        %v3666 = vld [vmem:[#allocation3 + $0x152] sm:$0xff]
        %v3667 = vld [vmem:[#allocation3 + $0x15a] sm:$0xff]
        %v3668 = vld [vmem:[#allocation3 + $0x16a] sm:$0xff]
        %v3669 = vld [vmem:[#allocation3 + $0x172] sm:$0xff]
        %v3670 = vmax.f32 %v3606, %v3638
        %v3671 = vmax.f32 %v3607, %v3639
        %v3672 = vmax.f32 %v3608, %v3640
        %v3673 = vmax.f32 %v3609, %v3641
        %v3674 = vmax.f32 %v3610, %v3642
        %v3675 = vmax.f32 %v3611, %v3643
        %v3676 = vmax.f32 %v3612, %v3644
        %v3677 = vmax.f32 %v3613, %v3645
        %v3678 = vmax.f32 %v3614, %v3646
        %v3679 = vmax.f32 %v3615, %v3647
        %v3680 = vmax.f32 %v3616, %v3648
        %v3681 = vmax.f32 %v3617, %v3649
        %v3682 = vmax.f32 %v3618, %v3650
        %v3683 = vmax.f32 %v3619, %v3651
        %v3684 = vmax.f32 %v3620, %v3652
        %v3685 = vmax.f32 %v3621, %v3653
        %v3686 = vmax.f32 %v3622, %v3654
        %v3687 = vmax.f32 %v3623, %v3655
        %v3688 = vmax.f32 %v3624, %v3656
        %v3689 = vmax.f32 %v3625, %v3657
        %v3690 = vmax.f32 %v3626, %v3658
        %v3691 = vmax.f32 %v3627, %v3659
        %v3692 = vmax.f32 %v3628, %v3660
        %v3693 = vmax.f32 %v3629, %v3661
        %v3694 = vmax.f32 %v3630, %v3662
        %v3695 = vmax.f32 %v3631, %v3663
        %v3696 = vmax.f32 %v3632, %v3664
        %v3697 = vmax.f32 %v3633, %v3665
        %v3698 = vmax.f32 %v3634, %v3666
        %v3699 = vmax.f32 %v3635, %v3667
        %v3700 = vmax.f32 %v3636, %v3668
        %v3701 = vmax.f32 %v3637, %v3669
        %v3702 = vld [vmem:[#allocation3 + $0x3] sm:$0xff]
        %v3703 = vld [vmem:[#allocation3 + $0xb] sm:$0xff]
        %v3704 = vld [vmem:[#allocation3 + $0x1b] sm:$0xff]
        %v3705 = vld [vmem:[#allocation3 + $0x23] sm:$0xff]
        %v3706 = vld [vmem:[#allocation3 + $0x33] sm:$0xff]
        %v3707 = vld [vmem:[#allocation3 + $0x3b] sm:$0xff]
        %v3708 = vld [vmem:[#allocation3 + $0x4b] sm:$0xff]
        %v3709 = vld [vmem:[#allocation3 + $0x53] sm:$0xff]
        %v3710 = vld [vmem:[#allocation3 + $0x63] sm:$0xff]
        %v3711 = vld [vmem:[#allocation3 + $0x6b] sm:$0xff]
        %v3712 = vld [vmem:[#allocation3 + $0x7b] sm:$0xff]
        %v3713 = vld [vmem:[#allocation3 + $0x83] sm:$0xff]
        %v3714 = vld [vmem:[#allocation3 + $0x93] sm:$0xff]
        %v3715 = vld [vmem:[#allocation3 + $0x9b] sm:$0xff]
        %v3716 = vld [vmem:[#allocation3 + $0xab] sm:$0xff]
        %v3717 = vld [vmem:[#allocation3 + $0xb3] sm:$0xff]
        %v3718 = vld [vmem:[#allocation3 + $0xc3] sm:$0xff]
        %v3719 = vld [vmem:[#allocation3 + $0xcb] sm:$0xff]
        %v3720 = vld [vmem:[#allocation3 + $0xdb] sm:$0xff]
        %v3721 = vld [vmem:[#allocation3 + $0xe3] sm:$0xff]
        %v3722 = vld [vmem:[#allocation3 + $0xf3] sm:$0xff]
        %v3723 = vld [vmem:[#allocation3 + $0xfb] sm:$0xff]
        %v3724 = vld [vmem:[#allocation3 + $0x10b] sm:$0xff]
        %v3725 = vld [vmem:[#allocation3 + $0x113] sm:$0xff]
        %v3726 = vld [vmem:[#allocation3 + $0x123] sm:$0xff]
        %v3727 = vld [vmem:[#allocation3 + $0x12b] sm:$0xff]
        %v3728 = vld [vmem:[#allocation3 + $0x13b] sm:$0xff]
        %v3729 = vld [vmem:[#allocation3 + $0x143] sm:$0xff]
        %v3730 = vld [vmem:[#allocation3 + $0x153] sm:$0xff]
        %v3731 = vld [vmem:[#allocation3 + $0x15b] sm:$0xff]
        %v3732 = vld [vmem:[#allocation3 + $0x16b] sm:$0xff]
        %v3733 = vld [vmem:[#allocation3 + $0x173] sm:$0xff]
        %v3734 = vmax.f32 %v3670, %v3702
        %v3735 = vmax.f32 %v3671, %v3703
        %v3736 = vmax.f32 %v3672, %v3704
        %v3737 = vmax.f32 %v3673, %v3705
        %v3738 = vmax.f32 %v3674, %v3706
        %v3739 = vmax.f32 %v3675, %v3707
        %v3740 = vmax.f32 %v3676, %v3708
        %v3741 = vmax.f32 %v3677, %v3709
        %v3742 = vmax.f32 %v3678, %v3710
        %v3743 = vmax.f32 %v3679, %v3711
        %v3744 = vmax.f32 %v3680, %v3712
        %v3745 = vmax.f32 %v3681, %v3713
        %v3746 = vmax.f32 %v3682, %v3714
        %v3747 = vmax.f32 %v3683, %v3715
        %v3748 = vmax.f32 %v3684, %v3716
        %v3749 = vmax.f32 %v3685, %v3717
        %v3750 = vmax.f32 %v3686, %v3718
        %v3751 = vmax.f32 %v3687, %v3719
        %v3752 = vmax.f32 %v3688, %v3720
        %v3753 = vmax.f32 %v3689, %v3721
        %v3754 = vmax.f32 %v3690, %v3722
        %v3755 = vmax.f32 %v3691, %v3723
        %v3756 = vmax.f32 %v3692, %v3724
        %v3757 = vmax.f32 %v3693, %v3725
        %v3758 = vmax.f32 %v3694, %v3726
        %v3759 = vmax.f32 %v3695, %v3727
        %v3760 = vmax.f32 %v3696, %v3728
        %v3761 = vmax.f32 %v3697, %v3729
        %v3762 = vmax.f32 %v3698, %v3730
        %v3763 = vmax.f32 %v3699, %v3731
        %v3764 = vmax.f32 %v3700, %v3732
        %v3765 = vmax.f32 %v3701, %v3733
        %v3766 = vld [vmem:[#allocation3 + $0x4] sm:$0xff]
        %v3767 = vld [vmem:[#allocation3 + $0xc] sm:$0xff]
        %v3768 = vld [vmem:[#allocation3 + $0x1c] sm:$0xff]
        %v3769 = vld [vmem:[#allocation3 + $0x24] sm:$0xff]
        %v3770 = vld [vmem:[#allocation3 + $0x34] sm:$0xff]
        %v3771 = vld [vmem:[#allocation3 + $0x3c] sm:$0xff]
        %v3772 = vld [vmem:[#allocation3 + $0x4c] sm:$0xff]
        %v3773 = vld [vmem:[#allocation3 + $0x54] sm:$0xff]
        %v3774 = vld [vmem:[#allocation3 + $0x64] sm:$0xff]
        %v3775 = vld [vmem:[#allocation3 + $0x6c] sm:$0xff]
        %v3776 = vld [vmem:[#allocation3 + $0x7c] sm:$0xff]
        %v3777 = vld [vmem:[#allocation3 + $0x84] sm:$0xff]
        %v3778 = vld [vmem:[#allocation3 + $0x94] sm:$0xff]
        %v3779 = vld [vmem:[#allocation3 + $0x9c] sm:$0xff]
        %v3780 = vld [vmem:[#allocation3 + $0xac] sm:$0xff]
        %v3781 = vld [vmem:[#allocation3 + $0xb4] sm:$0xff]
        %v3782 = vld [vmem:[#allocation3 + $0xc4] sm:$0xff]
        %v3783 = vld [vmem:[#allocation3 + $0xcc] sm:$0xff]
        %v3784 = vld [vmem:[#allocation3 + $0xdc] sm:$0xff]
        %v3785 = vld [vmem:[#allocation3 + $0xe4] sm:$0xff]
        %v3786 = vld [vmem:[#allocation3 + $0xf4] sm:$0xff]
        %v3787 = vld [vmem:[#allocation3 + $0xfc] sm:$0xff]
        %v3788 = vld [vmem:[#allocation3 + $0x10c] sm:$0xff]
        %v3789 = vld [vmem:[#allocation3 + $0x114] sm:$0xff]
        %v3790 = vld [vmem:[#allocation3 + $0x124] sm:$0xff]
        %v3791 = vld [vmem:[#allocation3 + $0x12c] sm:$0xff]
        %v3792 = vld [vmem:[#allocation3 + $0x13c] sm:$0xff]
        %v3793 = vld [vmem:[#allocation3 + $0x144] sm:$0xff]
        %v3794 = vld [vmem:[#allocation3 + $0x154] sm:$0xff]
        %v3795 = vld [vmem:[#allocation3 + $0x15c] sm:$0xff]
        %v3796 = vld [vmem:[#allocation3 + $0x16c] sm:$0xff]
        %v3797 = vld [vmem:[#allocation3 + $0x174] sm:$0xff]
        %v3798 = vmax.f32 %v3734, %v3766
        %v3799 = vmax.f32 %v3735, %v3767
        %v3800 = vmax.f32 %v3736, %v3768
        %v3801 = vmax.f32 %v3737, %v3769
        %v3802 = vmax.f32 %v3738, %v3770
        %v3803 = vmax.f32 %v3739, %v3771
        %v3804 = vmax.f32 %v3740, %v3772
        %v3805 = vmax.f32 %v3741, %v3773
        %v3806 = vmax.f32 %v3742, %v3774
        %v3807 = vmax.f32 %v3743, %v3775
        %v3808 = vmax.f32 %v3744, %v3776
        %v3809 = vmax.f32 %v3745, %v3777
        %v3810 = vmax.f32 %v3746, %v3778
        %v3811 = vmax.f32 %v3747, %v3779
        %v3812 = vmax.f32 %v3748, %v3780
        %v3813 = vmax.f32 %v3749, %v3781
        %v3814 = vmax.f32 %v3750, %v3782
        %v3815 = vmax.f32 %v3751, %v3783
        %v3816 = vmax.f32 %v3752, %v3784
        %v3817 = vmax.f32 %v3753, %v3785
        %v3818 = vmax.f32 %v3754, %v3786
        %v3819 = vmax.f32 %v3755, %v3787
        %v3820 = vmax.f32 %v3756, %v3788
        %v3821 = vmax.f32 %v3757, %v3789
        %v3822 = vmax.f32 %v3758, %v3790
        %v3823 = vmax.f32 %v3759, %v3791
        %v3824 = vmax.f32 %v3760, %v3792
        %v3825 = vmax.f32 %v3761, %v3793
        %v3826 = vmax.f32 %v3762, %v3794
        %v3827 = vmax.f32 %v3763, %v3795
        %v3828 = vmax.f32 %v3764, %v3796
        %v3829 = vmax.f32 %v3765, %v3797
        %s3830 = scalar_lea.vmem [#allocation10], 6
        %v3831 = vld [vmem:[%s3830] sm:$0x3]
        %v3833 = vsel %vm854, %v3798, 0
        %v3836 = vsel %vm854, %v3799, 0
        %v3839 = vsel %vm854, %v3800, 0
        %v3842 = vsel %vm854, %v3801, 0
        %v3845 = vsel %vm854, %v3802, 0
        %v3848 = vsel %vm854, %v3803, 0
        %v3851 = vsel %vm854, %v3804, 0
        %v3854 = vsel %vm854, %v3805, 0
        %v3857 = vsel %vm854, %v3806, 0
        %v3860 = vsel %vm854, %v3807, 0
        %v3863 = vsel %vm854, %v3808, 0
        %v3866 = vsel %vm854, %v3809, 0
        %v3869 = vsel %vm854, %v3810, 0
        %v3872 = vsel %vm854, %v3811, 0
        %v3875 = vsel %vm854, %v3812, 0
        %v3878 = vsel %vm854, %v3813, 0
        %v3881 = vsel %vm854, %v3814, 0
        %v3884 = vsel %vm854, %v3815, 0
        %v3887 = vsel %vm854, %v3816, 0
        %v3890 = vsel %vm854, %v3817, 0
        %v3893 = vsel %vm854, %v3818, 0
        %v3896 = vsel %vm854, %v3819, 0
        %v3899 = vsel %vm854, %v3820, 0
        %v3902 = vsel %vm854, %v3821, 0
        %v3905 = vsel %vm854, %v3822, 0
        %v3908 = vsel %vm854, %v3823, 0
        %v3911 = vsel %vm854, %v3824, 0
        %v3914 = vsel %vm854, %v3825, 0
        %v3917 = vsel %vm854, %v3826, 0
        %v3920 = vsel %vm854, %v3827, 0
        %v3923 = vsel %vm854, %v3828, 0
        %v3926 = vsel %vm854, %v3829, 0
        %v3929 = vsel %vm1639, %v3831, 0
        %3931 = vmatprep.subr.mxu0 0.0
        %3932 = vmatpush1.msra.mxu0 %v3929
        %3933 = vmatprep.subr.mxu0 0.0
        %3934 = vmatpush1.msra.mxu0 0.0
        %3935 = vmatprep.subr.mxu0 0.0
        %3936 = vmatpush1.msra.mxu0 0.0
        %3937 = vmatprep.subr.mxu0 0.0
        %3938 = vmatpush1.msra.mxu0 0.0
        %3939 = vmatprep.subr.mxu0 0.0
        %3940 = vmatpush1.msra.mxu0 0.0
        %3941 = vmatprep.subr.mxu0 0.0
        %3942 = vmatpush1.msra.mxu0 0.0
        %3943 = vmatprep.subr.mxu0 0.0
        %3944 = vmatpush1.msra.mxu0 0.0
        %3945 = vmatprep.subr.mxu0 0.0
        %3946 = vmatpush1.msra.mxu0 0.0
        %3947 = vmatprep.subr.mxu0 0.0
        %3948 = vmatpush1.msra.mxu0 0.0
        %3949 = vmatprep.subr.mxu0 0.0
        %3950 = vmatpush1.msra.mxu0 0.0
        %3951 = vmatprep.subr.mxu0 0.0
        %3952 = vmatpush1.msra.mxu0 0.0
        %3953 = vmatprep.subr.mxu0 0.0
        %3954 = vmatpush1.msra.mxu0 0.0
        %3955 = vmatprep.subr.mxu0 0.0
        %3956 = vmatpush1.msra.mxu0 0.0
        %3957 = vmatprep.subr.mxu0 0.0
        %3958 = vmatpush1.msra.mxu0 0.0
        %3959 = vmatprep.subr.mxu0 0.0
        %3960 = vmatpush1.msra.mxu0 0.0
        %3961 = vmatprep.subr.mxu0 0.0
        %3962 = vmatpush1.msra.mxu0 0.0
        %3963 = vmatprep.subr.mxu0 0.0
        %3964 = vmatpush1.msra.mxu0 0.0
        %3965 = vmatprep.subr.mxu0 0.0
        %3966 = vmatpush1.msra.mxu0 0.0
        %3967 = vmatprep.subr.mxu0 0.0
        %3968 = vmatpush1.msra.mxu0 0.0
        %3969 = vmatprep.subr.mxu0 0.0
        %3970 = vmatpush1.msra.mxu0 0.0
        %3971 = vmatprep.subr.mxu0 0.0
        %3972 = vmatpush1.msra.mxu0 0.0
        %3973 = vmatprep.subr.mxu0 0.0
        %3974 = vmatpush1.msra.mxu0 0.0
        %3975 = vmatprep.subr.mxu0 0.0
        %3976 = vmatpush1.msra.mxu0 0.0
        %3977 = vmatprep.subr.mxu0 0.0
        %3978 = vmatpush1.msra.mxu0 0.0
        %3979 = vmatprep.subr.mxu0 0.0
        %3980 = vmatpush1.msra.mxu0 0.0
        %3981 = vmatprep.subr.mxu0 0.0
        %3982 = vmatpush1.msra.mxu0 0.0
        %3983 = vmatprep.subr.mxu0 0.0
        %3984 = vmatpush1.msra.mxu0 0.0
        %3985 = vmatprep.subr.mxu0 0.0
        %3986 = vmatpush1.msra.mxu0 0.0
        %3987 = vmatprep.subr.mxu0 0.0
        %3988 = vmatpush1.msra.mxu0 0.0
        %3989 = vmatprep.subr.mxu0 0.0
        %3990 = vmatpush1.msra.mxu0 0.0
        %3991 = vmatprep.subr.mxu0 0.0
        %3992 = vmatpush1.msra.mxu0 0.0
        %3993 = vmatprep.subr.mxu0 0.0
        %3994 = vmatpush1.msra.mxu0 0.0
        %3995 = vmatprep.mubr.f32.mxu0 0.0
        %3996 = vmatmul.mubr.f32.gmra.mrb[0].mxu0 %v3833
        %v3997 = vpop.f32.mrb[0].mxu0
        %v3998 = vadd.f32 0.0, %v3997
        %v3999 = vpop.f32.mrb[0].mxu0
        %4000 = vmatprep.mubr.f32.mxu0 0.0
        %4001 = vmatmul.mubr.f32.gmra.mrb[0].mxu0 %v3836
        %v4002 = vpop.f32.mrb[0].mxu0
        %v4003 = vadd.f32 0.0, %v4002
        %v4004 = vpop.f32.mrb[0].mxu0
        %4005 = vmatprep.mubr.f32.mxu0 0.0
        %4006 = vmatmul.mubr.f32.gmra.mrb[0].mxu0 %v3839
        %v4007 = vpop.f32.mrb[0].mxu0
        %v4008 = vadd.f32 0.0, %v4007
        %v4009 = vpop.f32.mrb[0].mxu0
        %4010 = vmatprep.mubr.f32.mxu0 0.0
        %4011 = vmatmul.mubr.f32.gmra.mrb[0].mxu0 %v3842
        %v4012 = vpop.f32.mrb[0].mxu0
        %v4013 = vadd.f32 0.0, %v4012
        %v4014 = vpop.f32.mrb[0].mxu0
        %4015 = vmatprep.mubr.f32.mxu0 0.0
        %4016 = vmatmul.mubr.f32.gmra.mrb[0].mxu0 %v3845
        %v4017 = vpop.f32.mrb[0].mxu0
        %v4018 = vadd.f32 0.0, %v4017
        %v4019 = vpop.f32.mrb[0].mxu0
        %4020 = vmatprep.mubr.f32.mxu0 0.0
        %4021 = vmatmul.mubr.f32.gmra.mrb[0].mxu0 %v3848
        %v4022 = vpop.f32.mrb[0].mxu0
        %v4023 = vadd.f32 0.0, %v4022
        %v4024 = vpop.f32.mrb[0].mxu0
        %4025 = vmatprep.mubr.f32.mxu0 0.0
        %4026 = vmatmul.mubr.f32.gmra.mrb[0].mxu0 %v3851
        %v4027 = vpop.f32.mrb[0].mxu0
        %v4028 = vadd.f32 0.0, %v4027
        %v4029 = vpop.f32.mrb[0].mxu0
        %4030 = vmatprep.mubr.f32.mxu0 0.0
        %4031 = vmatmul.mubr.f32.gmra.mrb[0].mxu0 %v3854
        %v4032 = vpop.f32.mrb[0].mxu0
        %v4033 = vadd.f32 0.0, %v4032
        %v4034 = vpop.f32.mrb[0].mxu0
        %4035 = vmatprep.mubr.f32.mxu0 0.0
        %4036 = vmatmul.mubr.f32.gmra.mrb[0].mxu0 %v3857
        %v4037 = vpop.f32.mrb[0].mxu0
        %v4038 = vadd.f32 0.0, %v4037
        %v4039 = vpop.f32.mrb[0].mxu0
        %4040 = vmatprep.mubr.f32.mxu0 0.0
        %4041 = vmatmul.mubr.f32.gmra.mrb[0].mxu0 %v3860
        %v4042 = vpop.f32.mrb[0].mxu0
        %v4043 = vadd.f32 0.0, %v4042
        %v4044 = vpop.f32.mrb[0].mxu0
        %4045 = vmatprep.mubr.f32.mxu0 0.0
        %4046 = vmatmul.mubr.f32.gmra.mrb[0].mxu0 %v3863
        %v4047 = vpop.f32.mrb[0].mxu0
        %v4048 = vadd.f32 0.0, %v4047
        %v4049 = vpop.f32.mrb[0].mxu0
        %4050 = vmatprep.mubr.f32.mxu0 0.0
        %4051 = vmatmul.mubr.f32.gmra.mrb[0].mxu0 %v3866
        %v4052 = vpop.f32.mrb[0].mxu0
        %v4053 = vadd.f32 0.0, %v4052
        %v4054 = vpop.f32.mrb[0].mxu0
        %4055 = vmatprep.mubr.f32.mxu0 0.0
        %4056 = vmatmul.mubr.f32.gmra.mrb[0].mxu0 %v3869
        %v4057 = vpop.f32.mrb[0].mxu0
        %v4058 = vadd.f32 0.0, %v4057
        %v4059 = vpop.f32.mrb[0].mxu0
        %4060 = vmatprep.mubr.f32.mxu0 0.0
        %4061 = vmatmul.mubr.f32.gmra.mrb[0].mxu0 %v3872
        %v4062 = vpop.f32.mrb[0].mxu0
        %v4063 = vadd.f32 0.0, %v4062
        %v4064 = vpop.f32.mrb[0].mxu0
        %4065 = vmatprep.mubr.f32.mxu0 0.0
        %4066 = vmatmul.mubr.f32.gmra.mrb[0].mxu0 %v3875
        %v4067 = vpop.f32.mrb[0].mxu0
        %v4068 = vadd.f32 0.0, %v4067
        %v4069 = vpop.f32.mrb[0].mxu0
        %4070 = vmatprep.mubr.f32.mxu0 0.0
        %4071 = vmatmul.mubr.f32.gmra.mrb[0].mxu0 %v3878
        %v4072 = vpop.f32.mrb[0].mxu0
        %v4073 = vadd.f32 0.0, %v4072
        %v4074 = vpop.f32.mrb[0].mxu0
        %4075 = vmatprep.mubr.f32.mxu0 0.0
        %4076 = vmatmul.mubr.f32.gmra.mrb[0].mxu0 %v3881
        %v4077 = vpop.f32.mrb[0].mxu0
        %v4078 = vadd.f32 0.0, %v4077
        %v4079 = vpop.f32.mrb[0].mxu0
        %4080 = vmatprep.mubr.f32.mxu0 0.0
        %4081 = vmatmul.mubr.f32.gmra.mrb[0].mxu0 %v3884
        %v4082 = vpop.f32.mrb[0].mxu0
        %v4083 = vadd.f32 0.0, %v4082
        %v4084 = vpop.f32.mrb[0].mxu0
        %4085 = vmatprep.mubr.f32.mxu0 0.0
        %4086 = vmatmul.mubr.f32.gmra.mrb[0].mxu0 %v3887
        %v4087 = vpop.f32.mrb[0].mxu0
        %v4088 = vadd.f32 0.0, %v4087
        %v4089 = vpop.f32.mrb[0].mxu0
        %4090 = vmatprep.mubr.f32.mxu0 0.0
        %4091 = vmatmul.mubr.f32.gmra.mrb[0].mxu0 %v3890
        %v4092 = vpop.f32.mrb[0].mxu0
        %v4093 = vadd.f32 0.0, %v4092
        %v4094 = vpop.f32.mrb[0].mxu0
        %4095 = vmatprep.mubr.f32.mxu0 0.0
        %4096 = vmatmul.mubr.f32.gmra.mrb[0].mxu0 %v3893
        %v4097 = vpop.f32.mrb[0].mxu0
        %v4098 = vadd.f32 0.0, %v4097
        %v4099 = vpop.f32.mrb[0].mxu0
        %4100 = vmatprep.mubr.f32.mxu0 0.0
        %4101 = vmatmul.mubr.f32.gmra.mrb[0].mxu0 %v3896
        %v4102 = vpop.f32.mrb[0].mxu0
        %v4103 = vadd.f32 0.0, %v4102
        %v4104 = vpop.f32.mrb[0].mxu0
        %4105 = vmatprep.mubr.f32.mxu0 0.0
        %4106 = vmatmul.mubr.f32.gmra.mrb[0].mxu0 %v3899
        %v4107 = vpop.f32.mrb[0].mxu0
        %v4108 = vadd.f32 0.0, %v4107
        %v4109 = vpop.f32.mrb[0].mxu0
        %4110 = vmatprep.mubr.f32.mxu0 0.0
        %4111 = vmatmul.mubr.f32.gmra.mrb[0].mxu0 %v3902
        %v4112 = vpop.f32.mrb[0].mxu0
        %v4113 = vadd.f32 0.0, %v4112
        %v4114 = vpop.f32.mrb[0].mxu0
        %4115 = vmatprep.mubr.f32.mxu0 0.0
        %4116 = vmatmul.mubr.f32.gmra.mrb[0].mxu0 %v3905
        %v4117 = vpop.f32.mrb[0].mxu0
        %v4118 = vadd.f32 0.0, %v4117
        %v4119 = vpop.f32.mrb[0].mxu0
        %4120 = vmatprep.mubr.f32.mxu0 0.0
        %4121 = vmatmul.mubr.f32.gmra.mrb[0].mxu0 %v3908
        %v4122 = vpop.f32.mrb[0].mxu0
        %v4123 = vadd.f32 0.0, %v4122
        %v4124 = vpop.f32.mrb[0].mxu0
        %4125 = vmatprep.mubr.f32.mxu0 0.0
        %4126 = vmatmul.mubr.f32.gmra.mrb[0].mxu0 %v3911
        %v4127 = vpop.f32.mrb[0].mxu0
        %v4128 = vadd.f32 0.0, %v4127
        %v4129 = vpop.f32.mrb[0].mxu0
        %4130 = vmatprep.mubr.f32.mxu0 0.0
        %4131 = vmatmul.mubr.f32.gmra.mrb[0].mxu0 %v3914
        %v4132 = vpop.f32.mrb[0].mxu0
        %v4133 = vadd.f32 0.0, %v4132
        %v4134 = vpop.f32.mrb[0].mxu0
        %4135 = vmatprep.mubr.f32.mxu0 0.0
        %4136 = vmatmul.mubr.f32.gmra.mrb[0].mxu0 %v3917
        %v4137 = vpop.f32.mrb[0].mxu0
        %v4138 = vadd.f32 0.0, %v4137
        %v4139 = vpop.f32.mrb[0].mxu0
        %4140 = vmatprep.mubr.f32.mxu0 0.0
        %4141 = vmatmul.mubr.f32.gmra.mrb[0].mxu0 %v3920
        %v4142 = vpop.f32.mrb[0].mxu0
        %v4143 = vadd.f32 0.0, %v4142
        %v4144 = vpop.f32.mrb[0].mxu0
        %4145 = vmatprep.mubr.f32.mxu0 0.0
        %4146 = vmatmul.mubr.f32.gmra.mrb[0].mxu0 %v3923
        %v4147 = vpop.f32.mrb[0].mxu0
        %v4148 = vadd.f32 0.0, %v4147
        %v4149 = vpop.f32.mrb[0].mxu0
        %4150 = vmatprep.mubr.f32.mxu0 0.0
        %4151 = vmatmul.mubr.f32.gmra.mrb[0].mxu0 %v3926
        %v4152 = vpop.f32.mrb[0].mxu0
        %v4153 = vadd.f32 0.0, %v4152
        %v4154 = vpop.f32.mrb[0].mxu0
        %4155 = vdwg.mxu0
        %v4156 = vadd.f32 %v3158, %v3998
        %v4157 = vadd.f32 %v3159, %v4003
        %v4158 = vadd.f32 %v3160, %v4008
        %v4159 = vadd.f32 %v3161, %v4013
        %v4160 = vadd.f32 %v3162, %v4018
        %v4161 = vadd.f32 %v3163, %v4023
        %v4162 = vadd.f32 %v3164, %v4028
        %v4163 = vadd.f32 %v3165, %v4033
        %v4164 = vadd.f32 %v3166, %v4038
        %v4165 = vadd.f32 %v3167, %v4043
        %v4166 = vadd.f32 %v3168, %v4048
        %v4167 = vadd.f32 %v3169, %v4053
        %v4168 = vadd.f32 %v3170, %v4058
        %v4169 = vadd.f32 %v3171, %v4063
        %v4170 = vadd.f32 %v3172, %v4068
        %v4171 = vadd.f32 %v3173, %v4073
        %v4172 = vadd.f32 %v3174, %v4078
        %v4173 = vadd.f32 %v3175, %v4083
        %v4174 = vadd.f32 %v3176, %v4088
        %v4175 = vadd.f32 %v3177, %v4093
        %v4176 = vadd.f32 %v3178, %v4098
        %v4177 = vadd.f32 %v3179, %v4103
        %v4178 = vadd.f32 %v3180, %v4108
        %v4179 = vadd.f32 %v3181, %v4113
        %v4180 = vadd.f32 %v3182, %v4118
        %v4181 = vadd.f32 %v3183, %v4123
        %v4182 = vadd.f32 %v3184, %v4128
        %v4183 = vadd.f32 %v3185, %v4133
        %v4184 = vadd.f32 %v3186, %v4138
        %v4185 = vadd.f32 %v3187, %v4143
        %v4186 = vadd.f32 %v3188, %v4148
        %v4187 = vadd.f32 %v3189, %v4153
        %v4188 = vld [vmem:[#allocation12] sm:$0x1]
        %v4190 = vlaneseq
        %v4191 = vshrl.u32 %v4190, 7
        %v4192 = vsub.s32 0, %v4191
        %v4193 = vrot.slane %v4188, %v4192
        %v4195 = vadd.f32 %v4156, %v4193
        %v4196 = vadd.f32 %v4157, %v4193
        %v4197 = vadd.f32 %v4158, %v4193
        %v4198 = vadd.f32 %v4159, %v4193
        %v4199 = vadd.f32 %v4160, %v4193
        %v4200 = vadd.f32 %v4161, %v4193
        %v4201 = vadd.f32 %v4162, %v4193
        %v4202 = vadd.f32 %v4163, %v4193
        %v4203 = vadd.f32 %v4164, %v4193
        %v4204 = vadd.f32 %v4165, %v4193
        %v4205 = vadd.f32 %v4166, %v4193
        %v4206 = vadd.f32 %v4167, %v4193
        %v4207 = vadd.f32 %v4168, %v4193
        %v4208 = vadd.f32 %v4169, %v4193
        %v4209 = vadd.f32 %v4170, %v4193
        %v4210 = vadd.f32 %v4171, %v4193
        %v4211 = vadd.f32 %v4172, %v4193
        %v4212 = vadd.f32 %v4173, %v4193
        %v4213 = vadd.f32 %v4174, %v4193
        %v4214 = vadd.f32 %v4175, %v4193
        %v4215 = vadd.f32 %v4176, %v4193
        %v4216 = vadd.f32 %v4177, %v4193
        %v4217 = vadd.f32 %v4178, %v4193
        %v4218 = vadd.f32 %v4179, %v4193
        %v4219 = vadd.f32 %v4180, %v4193
        %v4220 = vadd.f32 %v4181, %v4193
        %v4221 = vadd.f32 %v4182, %v4193
        %v4222 = vadd.f32 %v4183, %v4193
        %v4223 = vadd.f32 %v4184, %v4193
        %v4224 = vadd.f32 %v4185, %v4193
        %v4225 = vadd.f32 %v4186, %v4193
        %v4226 = vadd.f32 %v4187, %v4193
        %v4227 = vsub.f32 0.0, %v4195
        %v4228 = vsub.f32 0.0, %v4196
        %v4229 = vsub.f32 0.0, %v4197
        %v4230 = vsub.f32 0.0, %v4198
        %v4231 = vsub.f32 0.0, %v4199
        %v4232 = vsub.f32 0.0, %v4200
        %v4233 = vsub.f32 0.0, %v4201
        %v4234 = vsub.f32 0.0, %v4202
        %v4235 = vsub.f32 0.0, %v4203
        %v4236 = vsub.f32 0.0, %v4204
        %v4237 = vsub.f32 0.0, %v4205
        %v4238 = vsub.f32 0.0, %v4206
        %v4239 = vsub.f32 0.0, %v4207
        %v4240 = vsub.f32 0.0, %v4208
        %v4241 = vsub.f32 0.0, %v4209
        %v4242 = vsub.f32 0.0, %v4210
        %v4243 = vsub.f32 0.0, %v4211
        %v4244 = vsub.f32 0.0, %v4212
        %v4245 = vsub.f32 0.0, %v4213
        %v4246 = vsub.f32 0.0, %v4214
        %v4247 = vsub.f32 0.0, %v4215
        %v4248 = vsub.f32 0.0, %v4216
        %v4249 = vsub.f32 0.0, %v4217
        %v4250 = vsub.f32 0.0, %v4218
        %v4251 = vsub.f32 0.0, %v4219
        %v4252 = vsub.f32 0.0, %v4220
        %v4253 = vsub.f32 0.0, %v4221
        %v4254 = vsub.f32 0.0, %v4222
        %v4255 = vsub.f32 0.0, %v4223
        %v4256 = vsub.f32 0.0, %v4224
        %v4257 = vsub.f32 0.0, %v4225
        %v4258 = vsub.f32 0.0, %v4226
        %v4259 = vmul.f32 %v4227, 1.442695
        %v4260 = vpow.pop %v4259
        %v4261 = vmul.f32 %v4228, 1.442695
        %v4262 = vpow.pop %v4261
        %v4263 = vmul.f32 %v4229, 1.442695
        %v4264 = vpow.pop %v4263
        %v4265 = vmul.f32 %v4230, 1.442695
        %v4266 = vpow.pop %v4265
        %v4267 = vmul.f32 %v4231, 1.442695
        %v4268 = vpow.pop %v4267
        %v4269 = vmul.f32 %v4232, 1.442695
        %v4270 = vpow.pop %v4269
        %v4271 = vmul.f32 %v4233, 1.442695
        %v4272 = vpow.pop %v4271
        %v4273 = vmul.f32 %v4234, 1.442695
        %v4274 = vpow.pop %v4273
        %v4275 = vmul.f32 %v4235, 1.442695
        %v4276 = vpow.pop %v4275
        %v4277 = vmul.f32 %v4236, 1.442695
        %v4278 = vpow.pop %v4277
        %v4279 = vmul.f32 %v4237, 1.442695
        %v4280 = vpow.pop %v4279
        %v4281 = vmul.f32 %v4238, 1.442695
        %v4282 = vpow.pop %v4281
        %v4283 = vmul.f32 %v4239, 1.442695
        %v4284 = vpow.pop %v4283
        %v4285 = vmul.f32 %v4240, 1.442695
        %v4286 = vpow.pop %v4285
        %v4287 = vmul.f32 %v4241, 1.442695
        %v4288 = vpow.pop %v4287
        %v4289 = vmul.f32 %v4242, 1.442695
        %v4290 = vpow.pop %v4289
        %v4291 = vmul.f32 %v4243, 1.442695
        %v4292 = vpow.pop %v4291
        %v4293 = vmul.f32 %v4244, 1.442695
        %v4294 = vpow.pop %v4293
        %v4295 = vmul.f32 %v4245, 1.442695
        %v4296 = vpow.pop %v4295
        %v4297 = vmul.f32 %v4246, 1.442695
        %v4298 = vpow.pop %v4297
        %v4299 = vmul.f32 %v4247, 1.442695
        %v4300 = vpow.pop %v4299
        %v4301 = vmul.f32 %v4248, 1.442695
        %v4302 = vpow.pop %v4301
        %v4303 = vmul.f32 %v4249, 1.442695
        %v4304 = vpow.pop %v4303
        %v4305 = vmul.f32 %v4250, 1.442695
        %v4306 = vpow.pop %v4305
        %v4307 = vmul.f32 %v4251, 1.442695
        %v4308 = vpow.pop %v4307
        %v4309 = vmul.f32 %v4252, 1.442695
        %v4310 = vpow.pop %v4309
        %v4311 = vmul.f32 %v4253, 1.442695
        %v4312 = vpow.pop %v4311
        %v4313 = vmul.f32 %v4254, 1.442695
        %v4314 = vpow.pop %v4313
        %v4315 = vmul.f32 %v4255, 1.442695
        %v4316 = vpow.pop %v4315
        %v4317 = vmul.f32 %v4256, 1.442695
        %v4318 = vpow.pop %v4317
        %v4319 = vmul.f32 %v4257, 1.442695
        %v4320 = vpow.pop %v4319
        %v4321 = vmul.f32 %v4258, 1.442695
        %v4322 = vpow.pop %v4321
        %v4323 = vadd.f32 %v4260, 1.0
        %v4324 = vadd.f32 %v4262, 1.0
        %v4325 = vadd.f32 %v4264, 1.0
        %v4326 = vadd.f32 %v4266, 1.0
        %v4327 = vadd.f32 %v4268, 1.0
        %v4328 = vadd.f32 %v4270, 1.0
        %v4329 = vadd.f32 %v4272, 1.0
        %v4330 = vadd.f32 %v4274, 1.0
        %v4331 = vadd.f32 %v4276, 1.0
        %v4332 = vadd.f32 %v4278, 1.0
        %v4333 = vadd.f32 %v4280, 1.0
        %v4334 = vadd.f32 %v4282, 1.0
        %v4335 = vadd.f32 %v4284, 1.0
        %v4336 = vadd.f32 %v4286, 1.0
        %v4337 = vadd.f32 %v4288, 1.0
        %v4338 = vadd.f32 %v4290, 1.0
        %v4339 = vadd.f32 %v4292, 1.0
        %v4340 = vadd.f32 %v4294, 1.0
        %v4341 = vadd.f32 %v4296, 1.0
        %v4342 = vadd.f32 %v4298, 1.0
        %v4343 = vadd.f32 %v4300, 1.0
        %v4344 = vadd.f32 %v4302, 1.0
        %v4345 = vadd.f32 %v4304, 1.0
        %v4346 = vadd.f32 %v4306, 1.0
        %v4347 = vadd.f32 %v4308, 1.0
        %v4348 = vadd.f32 %v4310, 1.0
        %v4349 = vadd.f32 %v4312, 1.0
        %v4350 = vadd.f32 %v4314, 1.0
        %v4351 = vadd.f32 %v4316, 1.0
        %v4352 = vadd.f32 %v4318, 1.0
        %v4353 = vadd.f32 %v4320, 1.0
        %v4354 = vadd.f32 %v4322, 1.0
        %v4355 = vrcp.pop %v4323
        %v4356 = vrcp.pop %v4324
        %v4357 = vrcp.pop %v4325
        %v4358 = vrcp.pop %v4326
        %v4359 = vrcp.pop %v4327
        %v4360 = vrcp.pop %v4328
        %v4361 = vrcp.pop %v4329
        %v4362 = vrcp.pop %v4330
        %v4363 = vrcp.pop %v4331
        %v4364 = vrcp.pop %v4332
        %v4365 = vrcp.pop %v4333
        %v4366 = vrcp.pop %v4334
        %v4367 = vrcp.pop %v4335
        %v4368 = vrcp.pop %v4336
        %v4369 = vrcp.pop %v4337
        %v4370 = vrcp.pop %v4338
        %v4371 = vrcp.pop %v4339
        %v4372 = vrcp.pop %v4340
        %v4373 = vrcp.pop %v4341
        %v4374 = vrcp.pop %v4342
        %v4375 = vrcp.pop %v4343
        %v4376 = vrcp.pop %v4344
        %v4377 = vrcp.pop %v4345
        %v4378 = vrcp.pop %v4346
        %v4379 = vrcp.pop %v4347
        %v4380 = vrcp.pop %v4348
        %v4381 = vrcp.pop %v4349
        %v4382 = vrcp.pop %v4350
        %v4383 = vrcp.pop %v4351
        %v4384 = vrcp.pop %v4352
        %v4385 = vrcp.pop %v4353
        %v4386 = vrcp.pop %v4354
        %v4387 = vmul.f32 %v4195, %v4355
        %v4388 = vmul.f32 %v4196, %v4356
        %v4389 = vmul.f32 %v4197, %v4357
        %v4390 = vmul.f32 %v4198, %v4358
        %v4391 = vmul.f32 %v4199, %v4359
        %v4392 = vmul.f32 %v4200, %v4360
        %v4393 = vmul.f32 %v4201, %v4361
        %v4394 = vmul.f32 %v4202, %v4362
        %v4395 = vmul.f32 %v4203, %v4363
        %v4396 = vmul.f32 %v4204, %v4364
        %v4397 = vmul.f32 %v4205, %v4365
        %v4398 = vmul.f32 %v4206, %v4366
        %v4399 = vmul.f32 %v4207, %v4367
        %v4400 = vmul.f32 %v4208, %v4368
        %v4401 = vmul.f32 %v4209, %v4369
        %v4402 = vmul.f32 %v4210, %v4370
        %v4403 = vmul.f32 %v4211, %v4371
        %v4404 = vmul.f32 %v4212, %v4372
        %v4405 = vmul.f32 %v4213, %v4373
        %v4406 = vmul.f32 %v4214, %v4374
        %v4407 = vmul.f32 %v4215, %v4375
        %v4408 = vmul.f32 %v4216, %v4376
        %v4409 = vmul.f32 %v4217, %v4377
        %v4410 = vmul.f32 %v4218, %v4378
        %v4411 = vmul.f32 %v4219, %v4379
        %v4412 = vmul.f32 %v4220, %v4380
        %v4413 = vmul.f32 %v4221, %v4381
        %v4414 = vmul.f32 %v4222, %v4382
        %v4415 = vmul.f32 %v4223, %v4383
        %v4416 = vmul.f32 %v4224, %v4384
        %v4417 = vmul.f32 %v4225, %v4385
        %v4418 = vmul.f32 %v4226, %v4386
        %vm4419 = vcmask 64512
        %4420 = vst.msk [vmem:[%s294] sm:$0xff] %vm4419, %v4387
        %4421 = vst.msk [vmem:[%s294 + $0x8] sm:$0xff] %vm4419, %v4388
        %4422 = vst.msk [vmem:[%s294 + $0x10] sm:$0xff] %vm4419, %v4389
        %4423 = vst.msk [vmem:[%s294 + $0x18] sm:$0xff] %vm4419, %v4390
        %4424 = vst.msk [vmem:[%s294 + $0x20] sm:$0xff] %vm4419, %v4391
        %4425 = vst.msk [vmem:[%s294 + $0x28] sm:$0xff] %vm4419, %v4392
        %4426 = vst.msk [vmem:[%s294 + $0x30] sm:$0xff] %vm4419, %v4393
        %4427 = vst.msk [vmem:[%s294 + $0x38] sm:$0xff] %vm4419, %v4394
        %4428 = vst.msk [vmem:[%s294 + $0x40] sm:$0xff] %vm4419, %v4395
        %4429 = vst.msk [vmem:[%s294 + $0x48] sm:$0xff] %vm4419, %v4396
        %4430 = vst.msk [vmem:[%s294 + $0x50] sm:$0xff] %vm4419, %v4397
        %4431 = vst.msk [vmem:[%s294 + $0x58] sm:$0xff] %vm4419, %v4398
        %4432 = vst.msk [vmem:[%s294 + $0x60] sm:$0xff] %vm4419, %v4399
        %4433 = vst.msk [vmem:[%s294 + $0x68] sm:$0xff] %vm4419, %v4400
        %4434 = vst.msk [vmem:[%s294 + $0x70] sm:$0xff] %vm4419, %v4401
        %4435 = vst.msk [vmem:[%s294 + $0x78] sm:$0xff] %vm4419, %v4402
        %4436 = vst.msk [vmem:[%s294 + $0x80] sm:$0xff] %vm4419, %v4403
        %4437 = vst.msk [vmem:[%s294 + $0x88] sm:$0xff] %vm4419, %v4404
        %4438 = vst.msk [vmem:[%s294 + $0x90] sm:$0xff] %vm4419, %v4405
        %4439 = vst.msk [vmem:[%s294 + $0x98] sm:$0xff] %vm4419, %v4406
        %4440 = vst.msk [vmem:[%s294 + $0xa0] sm:$0xff] %vm4419, %v4407
        %4441 = vst.msk [vmem:[%s294 + $0xa8] sm:$0xff] %vm4419, %v4408
        %4442 = vst.msk [vmem:[%s294 + $0xb0] sm:$0xff] %vm4419, %v4409
        %4443 = vst.msk [vmem:[%s294 + $0xb8] sm:$0xff] %vm4419, %v4410
        %4444 = vst.msk [vmem:[%s294 + $0xc0] sm:$0xff] %vm4419, %v4411
        %4445 = vst.msk [vmem:[%s294 + $0xc8] sm:$0xff] %vm4419, %v4412
        %4446 = vst.msk [vmem:[%s294 + $0xd0] sm:$0xff] %vm4419, %v4413
        %4447 = vst.msk [vmem:[%s294 + $0xd8] sm:$0xff] %vm4419, %v4414
        %4448 = vst.msk [vmem:[%s294 + $0xe0] sm:$0xff] %vm4419, %v4415
        %4449 = vst.msk [vmem:[%s294 + $0xe8] sm:$0xff] %vm4419, %v4416
        %4450 = vst.msk [vmem:[%s294 + $0xf0] sm:$0xff] %vm4419, %v4417
        %4451 = vst.msk [vmem:[%s294 + $0xf8] sm:$0xff] %vm4419, %v4418
        %s4452 = sand.u32 %s142, 1
        %s4453 = scalar_lea.sflag [#allocation6], %s4452
        %s4454 = sand.u32 %s142, 1
        %s4455 = smul.addr %s4454, 256
        %s4456 = scalar_lea.vmem [#allocation13], %s4455
        // Predicated region
        $region61: #{spp_bottleneck_forward.1} parent=39 // pred_check
          %p4457 = pneg %p152
        $region62: #{spp_bottleneck_forward.1} parent=39 // pred_check_branch
          %4459 = sbr.rel (%p4457) target = $region64
        $region63: #{spp_bottleneck_forward.1} parent=39 // pred_region
          %s4461 = ssub.s32 4096, 4096
          %4462 = vsyncadd %s4453, %s4461
          %s4463 = smul.addr %s24, 32
          %s4464 = smul.addr %s4463, 128
          %s4465 = scalar_lea.hbm %s5, %s4464
          %s4466 = sshll.u32 %s4456, 4
          %s4467 = int_to_ptr.vmem [resolvable:$true] %s4466
          %4472 = dma.vmem_to_hbm [thread:$0]  %s4467, 4096, %s4465, %s4453, 128, 128, 8
        $region64: #{spp_bottleneck_forward.1} parent=39 // pred_fallthru
          _
      $region40: #{spp_bottleneck_forward.1} parent=5 // pred_fallthru
        _
      %p4473 = scmp.le.s32.totalorder 2, %s19
      // Predicated region
      $region65: #{spp_bottleneck_forward.1} parent=5 // pred_check
        %p4474 = pneg %p4473
      $region66: #{spp_bottleneck_forward.1} parent=5 // pred_check_branch
        %4476 = sbr.rel (%p4474) target = $region68
      $region67: #{spp_bottleneck_forward.1} parent=5 // pred_region
        %s4477 = ssub.s32 %s19, 2
        // Predicated region
        $region69: #{spp_bottleneck_forward.1} parent=67 // pred_check
          %p4478 = pneg %p158
        $region70: #{spp_bottleneck_forward.1} parent=67 // pred_check_branch
          %4480 = sbr.rel (%p4478) target = $region72
        $region71: #{spp_bottleneck_forward.1} parent=67 // pred_region
          %s4481 = sand.u32 %s143, 1
          %s4482 = scalar_lea.sflag [#allocation6], %s4481
          %s4483 = sand.u32 %s143, 1
          %s4484 = smul.addr %s4483, 256
          %s4485 = scalar_lea.vmem [#allocation13], %s4484
          %4486 = dma.done %s4482, 4096
        $region72: #{spp_bottleneck_forward.1} parent=67 // pred_fallthru
          _
      $region68: #{spp_bottleneck_forward.1} parent=5 // pred_fallthru
        _
    $region6: #{spp_bottleneck_forward.1} parent=1 // loop_footer
      %s23 = sadd.s32 1, %s19
    $region7: #{spp_bottleneck_forward.1} parent=1 // loop_footer_branch
      %18 = sbr.rel target = $region3
    $region8: #{spp_bottleneck_forward.1} parent=1 // loop_exit
      _
    %4487 = vsyncpa [#allocation5], 1
    %s4488 = scalar_lea.sflag [#allocation5], 1
    %4489 = vsyncpa %s4488, 1
    %4490 = vsyncpa [#allocation8], 1
    %4491 = vsyncpa [#allocation11], 1
    %4492 = vsyncpa [#allocation6], 1
    %s4493 = scalar_lea.sflag [#allocation6], 1
    %4494 = vsyncpa %s4493, 1

</llo_original>
